<compile_context>
chip_gen: v6e
topology: v6e:2x2x1
jax: 0.10.0
libtpu: 0.0.40
codegen_flags: <defaults>
</compile_context>

<pallas_src>
import functools
import math

import jax
import jax.numpy as jnp
from jax.experimental import pallas as pl
from jax.experimental.pallas import tpu as pltpu

_INV_SQRT2 = 1.0 / math.sqrt(2.0)
_VMEM_LIMIT = 48 * 1024 * 1024   # fits resident MLP weights; <= v7x 64 MiB physical
_ROW_TILE = 256                  # target rows per grid step (v6e/v7x MXU width)


def _round_up(x, m):
    return ((x + m - 1) // m) * m


def _pick_tile(dim, target=_ROW_TILE, align=16):
    """Largest tile <= target that divides dim and is a multiple of align, else full dim."""
    if dim <= target:
        return dim
    start = (min(target, dim) // align) * align
    for cand in range(start, 0, -align):
        if dim % cand == 0:
            return cand
    return dim


# ----------------------------------------------------------------------------
# Fused linear with VMEM-resident weight:
#   out = act( LN?(x) @ W + b ) + residual?
# Grid is only over M; W / b / LN params have constant block indices -> DMAed once.
# ----------------------------------------------------------------------------
def _fused_linear_kernel(*refs, activation, has_ln, has_res, eps):
    it = iter(refs)
    x_ref = next(it)
    w_ref = next(it)
    b_ref = next(it)
    g_ref = be_ref = r_ref = None
    if has_ln:
        g_ref = next(it)
        be_ref = next(it)
    if has_res:
        r_ref = next(it)
    o_ref = next(it)

    if has_ln:
        # LayerNorm prologue in f32 (full K rows are always present in the block).
        xf = x_ref[...].astype(jnp.float32)
        mu = jnp.mean(xf, axis=-1, keepdims=True)
        xc = xf - mu
        var = jnp.mean(xc * xc, axis=-1, keepdims=True)
        xn = xc * jax.lax.rsqrt(var + eps)
        xn = xn * g_ref[...].astype(jnp.float32) + be_ref[...].astype(jnp.float32)
        xin = xn.astype(w_ref.dtype)
    else:
        xin = x_ref[...].astype(w_ref.dtype)

    # bf16 x bf16 -> f32 on the MXU, full K reduction in one shot (no scratch needed).
    y = jnp.dot(xin, w_ref[...], preferred_element_type=jnp.float32)
    y = y + b_ref[...].astype(jnp.float32)
    if activation == "gelu":
        # exact (erf-based) GELU, matching torch.nn.GELU() default
        y = 0.5 * y * (1.0 + jax.lax.erf(y * _INV_SQRT2))
    if has_res:
        y = y + r_ref[...].astype(jnp.float32)
    o_ref[...] = y.astype(o_ref.dtype)


def fused_linear(x, w, b, *, ln=None, residual=None, activation=None,
                 tm=_ROW_TILE, eps=1e-6, out_dtype=None):
    """x:(M,K) @ w:(K,N) + b, optional fused LayerNorm prologue / residual+GELU epilogue."""
    M, K = x.shape
    N = w.shape[1]
    out_dtype = out_dtype or x.dtype
    tm_e = _pick_tile(M, tm, 16)
    grid = (M // tm_e,)

    in_specs = [
        pl.BlockSpec((tm_e, K), lambda i: (i, 0)),   # activation row tile
        pl.BlockSpec((K, N), lambda i: (0, 0)),      # resident weight (constant index)
        pl.BlockSpec((1, N), lambda i: (0, 0)),      # bias
    ]
    args = [x, w, b.reshape(1, N)]
    if ln is not None:
        g, be = ln
        in_specs += [pl.BlockSpec((1, K), lambda i: (0, 0)),
                     pl.BlockSpec((1, K), lambda i: (0, 0))]
        args += [g.reshape(1, K), be.reshape(1, K)]
    if residual is not None:
        in_specs.append(pl.BlockSpec((tm_e, N), lambda i: (i, 0)))
        args.append(residual)

    kernel = functools.partial(_fused_linear_kernel, activation=activation,
                               has_ln=ln is not None, has_res=residual is not None,
                               eps=eps)
    return pl.pallas_call(
        kernel,
        out_shape=jax.ShapeDtypeStruct((M, N), out_dtype),
        grid=grid,
        in_specs=in_specs,
        out_specs=pl.BlockSpec((tm_e, N), lambda i: (i, 0)),
        compiler_params=pltpu.CompilerParams(
            dimension_semantics=("parallel",),
            vmem_limit_bytes=_VMEM_LIMIT),
    )(*args)


# ----------------------------------------------------------------------------
# Fused MLP block with both weights resident:
#   out = GELU(LN(x) @ W1 + b1) @ W2 + b2 + x
# Grid is only over M; the hidden intermediate never touches HBM.
# ----------------------------------------------------------------------------
def _fused_mlp_kernel(x_ref, w1_ref, b1_ref, w2_ref, b2_ref, g_ref, be_ref,
                      o_ref, *, eps):
    xf = x_ref[...].astype(jnp.float32)
    mu = jnp.mean(xf, axis=-1, keepdims=True)
    xc = xf - mu
    var = jnp.mean(xc * xc, axis=-1, keepdims=True)
    xn = xc * jax.lax.rsqrt(var + eps)
    xn = xn * g_ref[...].astype(jnp.float32) + be_ref[...].astype(jnp.float32)

    h = jnp.dot(xn.astype(w1_ref.dtype), w1_ref[...], preferred_element_type=jnp.float32)
    h = h + b1_ref[...].astype(jnp.float32)
    h = 0.5 * h * (1.0 + jax.lax.erf(h * _INV_SQRT2))            # exact GELU
    y = jnp.dot(h.astype(w2_ref.dtype), w2_ref[...], preferred_element_type=jnp.float32)
    y = y + b2_ref[...].astype(jnp.float32) + xf                 # +residual
    o_ref[...] = y.astype(o_ref.dtype)


def fused_mlp(x, w1, b1, w2, b2, ln_g, ln_b, *, tm=_ROW_TILE, eps=1e-6):
    M, D = x.shape
    H = w1.shape[1]
    tm_e = _pick_tile(M, tm, 16)
    grid = (M // tm_e,)
    return pl.pallas_call(
        functools.partial(_fused_mlp_kernel, eps=eps),
        out_shape=jax.ShapeDtypeStruct((M, D), x.dtype),
        grid=grid,
        in_specs=[
            pl.BlockSpec((tm_e, D), lambda i: (i, 0)),   # x (LN input + residual)
            pl.BlockSpec((D, H), lambda i: (0, 0)),      # w1 (resident)
            pl.BlockSpec((1, H), lambda i: (0, 0)),      # b1
            pl.BlockSpec((H, D), lambda i: (0, 0)),      # w2 (resident)
            pl.BlockSpec((1, D), lambda i: (0, 0)),      # b2
            pl.BlockSpec((1, D), lambda i: (0, 0)),      # ln gamma
            pl.BlockSpec((1, D), lambda i: (0, 0)),      # ln beta
        ],
        out_specs=pl.BlockSpec((tm_e, D), lambda i: (i, 0)),
        compiler_params=pltpu.CompilerParams(
            dimension_semantics=("parallel",),
            vmem_limit_bytes=_VMEM_LIMIT),
    )(x, w1, b1.reshape(1, H), w2, b2.reshape(1, D),
      ln_g.reshape(1, D), ln_b.reshape(1, D))


# ----------------------------------------------------------------------------
# Attention: q/k/v sliced straight out of the (B, S, 3D) QKV activation,
# many heads per grid step (lane-dense blocks), bf16 QK^T / PV on the MXU,
# additive -inf bias for padded keys, exact softmax normalization.
# ----------------------------------------------------------------------------
def _attention_kernel(q_ref, k_ref, v_ref, o_ref, *, dh, hpb, s_real, scale):
    s_pad = q_ref.shape[1]
    kidx = jax.lax.broadcasted_iota(jnp.int32, (1, s_pad), 1)
    bias = jnp.where(kidx < s_real, 0.0, -1e30).astype(jnp.float32)  # shared by all heads
    outs = []
    for hh in range(hpb):
        sl = slice(hh * dh, (hh + 1) * dh)
        q = q_ref[0, :, sl]                         # bf16 (S, dh)
        kk = k_ref[0, :, sl]                        # bf16 (S, dh)
        v = v_ref[0, :, sl]                         # bf16 (S, dh)
        s = jax.lax.dot_general(q, kk, (((1,), (1,)), ((), ())),
                                preferred_element_type=jnp.float32)  # bf16 MXU -> f32
        s = s * scale + bias                        # scale applied to f32 scores
        m = jnp.max(s, axis=-1, keepdims=True)
        p = jnp.exp(s - m)
        l = jnp.sum(p, axis=-1, keepdims=True)
        o = jnp.dot(p.astype(v.dtype), v, preferred_element_type=jnp.float32)
        outs.append(o / l)                          # exact reciprocal (torch parity)
    o_ref[0] = jnp.concatenate(outs, axis=-1).astype(o_ref.dtype)   # one lane-dense store


def attention(qkv, *, s_real, heads, dh):
    """qkv: (B, S_pad, 3*heads*dh) laid out [q | k | v], head-major within each section."""
    B, s_pad, threeD = qkv.shape
    D = heads * dh
    assert threeD == 3 * D
    hpb = min(heads, max(1, 512 // dh))     # up to 512-lane blocks per step
    while heads % hpb:
        hpb -= 1
    gh = heads // hpb
    bw = hpb * dh
    scale = 1.0 / math.sqrt(dh)

    def make_spec(section):
        return pl.BlockSpec((1, s_pad, bw), lambda b, g: (b, 0, section * gh + g))

    kernel = functools.partial(_attention_kernel, dh=dh, hpb=hpb,
                               s_real=s_real, scale=scale)
    return pl.pallas_call(
        kernel,
        out_shape=jax.ShapeDtypeStruct((B, s_pad, D), qkv.dtype),
        grid=(B, gh),
        in_specs=[make_spec(0), make_spec(1), make_spec(2)],
        out_specs=pl.BlockSpec((1, s_pad, bw), lambda b, g: (b, 0, g)),
        compiler_params=pltpu.CompilerParams(
            dimension_semantics=("parallel", "parallel"),
            vmem_limit_bytes=_VMEM_LIMIT),
    )(qkv, qkv, qkv)


# ----------------------------------------------------------------------------
# Parameter init (deterministic; stands in for the frozen pretrained weights)
# ----------------------------------------------------------------------------
def init_params(key, *, C, img, patch, D, heads, mlp, layers, classes):
    S = (img // patch) ** 2 + 1
    wdt = jnp.bfloat16
    keys = iter(jax.random.split(key, 8 + 8 * layers))

    def nrm(k, shape, s=0.02, dtype=wdt):
        return (s * jax.random.normal(k, shape)).astype(dtype)

    params = {
        "conv_w": nrm(next(keys), (C * patch * patch, D)),
        "conv_b": jnp.zeros((D,), jnp.float32),
        "cls": nrm(next(keys), (1, 1, D), dtype=jnp.float32),
        "pos": nrm(next(keys), (1, S, D), dtype=jnp.float32),
        "lnf_g": jnp.ones((D,), jnp.float32),
        "lnf_b": jnp.zeros((D,), jnp.float32),
        "w_head": nrm(next(keys), (D, classes)),
        "b_head": jnp.zeros((classes,), jnp.float32),
        "layers": [],
    }
    for _ in range(layers):
        params["layers"].append({
            "ln1_g": jnp.ones((D,), jnp.float32),
            "ln1_b": jnp.zeros((D,), jnp.float32),
            "w_qkv": nrm(next(keys), (D, 3 * D)),
            "b_qkv": jnp.zeros((3 * D,), jnp.float32),
            "w_o": nrm(next(keys), (D, D)),
            "b_o": jnp.zeros((D,), jnp.float32),
            "ln2_g": jnp.ones((D,), jnp.float32),
            "ln2_b": jnp.zeros((D,), jnp.float32),
            "w_fc1": nrm(next(keys), (D, mlp)),
            "b_fc1": jnp.zeros((mlp,), jnp.float32),
            "w_fc2": nrm(next(keys), (mlp, D)),
            "b_fc2": jnp.zeros((D,), jnp.float32),
        })
    return params


# ----------------------------------------------------------------------------
# Forward pass (mirrors torchvision VisionTransformer.forward, eval mode)
# ----------------------------------------------------------------------------
def vit_forward(params, x, *, patch, D, heads):
    B, C, H, W = x.shape
    nh, nw = H // patch, W // patch
    n_patch = nh * nw
    dh = D // heads
    dt = jnp.bfloat16

    # conv_proj (kernel=stride=patch) == patchify + linear projection (resident-weight matmul)
    patches = (x.reshape(B, C, nh, patch, nw, patch)
                 .transpose(0, 2, 4, 1, 3, 5)
                 .reshape(B * n_patch, C * patch * patch)).astype(dt)
    tok = fused_linear(patches, params["conv_w"], params["conv_b"], out_dtype=dt)
    tok = tok.reshape(B, n_patch, D)

    # prepend class token, add positional embedding, pad sequence to a multiple of 16
    S = n_patch + 1
    S_pad = _round_up(S, 16)
    cls = jnp.broadcast_to(params["cls"].astype(jnp.float32), (B, 1, D))
    seq = jnp.concatenate([cls, tok.astype(jnp.float32)], axis=1) + params["pos"]
    seq = jnp.pad(seq, ((0, 0), (0, S_pad - S), (0, 0)))
    h = seq.astype(dt).reshape(B * S_pad, D)

    for lyr in params["layers"]:
        # --- multi-head self-attention block (LN fused into QKV, residual into out-proj)
        qkv = fused_linear(h, lyr["w_qkv"], lyr["b_qkv"],
                           ln=(lyr["ln1_g"], lyr["ln1_b"]))          # (B*S_pad, 3D)
        attn = attention(qkv.reshape(B, S_pad, 3 * D),
                         s_real=S, heads=heads, dh=dh)               # (B, S_pad, D)
        h = fused_linear(attn.reshape(B * S_pad, D), lyr["w_o"], lyr["b_o"],
                         residual=h)

        # --- MLP block: LN + fc1 + GELU + fc2 + residual in one kernel
        h = fused_mlp(h, lyr["w_fc1"], lyr["b_fc1"], lyr["w_fc2"], lyr["b_fc2"],
                      lyr["ln2_g"], lyr["ln2_b"])

    # final LayerNorm is per-row, so applying it only to the cls rows is exact;
    # fuse it as the prologue of the classification head matmul.
    cls_tok = h.reshape(B, S_pad, D)[:, 0]                           # (B, D)
    logits = fused_linear(cls_tok, params["w_head"], params["b_head"],
                          ln=(params["lnf_g"], params["lnf_b"]),
                          out_dtype=jnp.float32)                     # (B, classes)
    return logits


if __name__ == "__main__":
    # Small ViT-B/16-shaped config: patch 16, image 64x64 -> 16 patches + cls = 17 tokens
    # (padded to 32 inside the forward); exercises resident-weight linears, the fused MLP,
    # and multi-head-per-step attention.
    cfg = dict(C=3, img=64, patch=16, D=256, heads=4, mlp=512, layers=2, classes=16)

    key = jax.random.PRNGKey(0)
    k_params, k_x = jax.random.split(key)
    params = init_params(k_params, **cfg)
    x = jax.random.normal(k_x, (2, cfg["C"], cfg["img"], cfg["img"]), dtype=jnp.float32)

    fwd = jax.jit(functools.partial(vit_forward, patch=cfg["patch"],
                                    D=cfg["D"], heads=cfg["heads"]))
    out = jax.block_until_ready(fwd(params, x))
    assert out.shape == (2, cfg["classes"]) and bool(jnp.all(jnp.isfinite(out)))
    print("KERNEL_OK")
</pallas_src>

<mosaic_0001>
module attributes {stable_mosaic.version = 11 : i64} {
  func.func @_fused_linear_kernel(%arg0: i32, %arg1: memref<32x768xbf16, #tpu.memory_space<vmem>>, %arg2: memref<768x256xbf16, #tpu.memory_space<vmem>>, %arg3: memref<1x256xf32, #tpu.memory_space<vmem>>, %arg4: memref<32x256xbf16, #tpu.memory_space<vmem>>) attributes {dimension_semantics = [#tpu.dimension_semantics<parallel>], iteration_bounds = array<i64: 1>, scalar_prefetch = 0 : i64, scratch_operands = 0 : i64, tpu.core_type = #tpu.core_type<tc>, window_params = [{transform_indices = @transform_0, window_bounds = array<i64: 32, 768>}, {pipeline_mode = #tpu.pipeline_mode<synchronous>, transform_indices = @transform_1, window_bounds = array<i64: 768, 256>}, {pipeline_mode = #tpu.pipeline_mode<synchronous>, transform_indices = @transform_2, window_bounds = array<i64: 1, 256>}, {transform_indices = @transform_3, window_bounds = array<i64: 32, 256>}]} {
    %c0 = arith.constant 0 : index
    %c0_0 = arith.constant 0 : index
    %0 = vector.load %arg1[%c0, %c0_0] : memref<32x768xbf16, #tpu.memory_space<vmem>>, vector<32x768xbf16>
    %c0_1 = arith.constant 0 : index
    %c0_2 = arith.constant 0 : index
    %1 = vector.load %arg2[%c0_1, %c0_2] : memref<768x256xbf16, #tpu.memory_space<vmem>>, vector<768x256xbf16>
    %cst = arith.constant dense<0.000000e+00> : vector<32x256xf32>
    %2 = tpu.matmul %0, %1, %cst {dimension_numbers = #tpu.dot_dimension_numbers<[1], [0], [0], [1], [0, 0, 1, 1], [], []>} : vector<32x768xbf16>, vector<768x256xbf16>, vector<32x256xf32> -> vector<32x256xf32>
    %c0_3 = arith.constant 0 : index
    %c0_4 = arith.constant 0 : index
    %3 = vector.load %arg3[%c0_3, %c0_4] : memref<1x256xf32, #tpu.memory_space<vmem>>, vector<1x256xf32>
    %4 = vector.broadcast %3 : vector<1x256xf32> to vector<32x256xf32>
    %5 = arith.addf %2, %4 : vector<32x256xf32>
    %6 = arith.truncf %5 : vector<32x256xf32> to vector<32x256xbf16>
    %c0_5 = arith.constant 0 : index
    %c0_6 = arith.constant 0 : index
    %7 = vector.load %arg4[%c0_5, %c0_6] : memref<32x256xbf16, #tpu.memory_space<vmem>>, vector<32x256xbf16>
    tpu.vector_store %arg4[%c0_5, %c0_6], %6 {strides = array<i32>} : memref<32x256xbf16, #tpu.memory_space<vmem>>, vector<32x256xbf16>,
    return
  }
  func.func @transform_0(%arg0: i32) -> (i32, i32) {
    %c0_i32 = arith.constant 0 : i32
    %c0_i32_0 = arith.constant 0 : i32
    return %arg0, %c0_i32 : i32, i32
  }
  func.func @transform_1(%arg0: i32) -> (i32, i32) {
    %c0_i32 = arith.constant 0 : i32
    %c0_i32_0 = arith.constant 0 : i32
    %c0_i32_1 = arith.constant 0 : i32
    return %c0_i32, %c0_i32_0 : i32, i32
  }
  func.func @transform_2(%arg0: i32) -> (i32, i32) {
    %c0_i32 = arith.constant 0 : i32
    %c0_i32_0 = arith.constant 0 : i32
    %c0_i32_1 = arith.constant 0 : i32
    return %c0_i32, %c0_i32_0 : i32, i32
  }
  func.func @transform_3(%arg0: i32) -> (i32, i32) {
    %c0_i32 = arith.constant 0 : i32
    %c0_i32_0 = arith.constant 0 : i32
    return %arg0, %c0_i32 : i32, i32
  }
}

module attributes {stable_mosaic.version = 11 : i64} {
  func.func @_fused_linear_kernel(%arg0: i32, %arg1: memref<64x256xbf16, #tpu.memory_space<vmem>>, %arg2: memref<256x768xbf16, #tpu.memory_space<vmem>>, %arg3: memref<1x768xf32, #tpu.memory_space<vmem>>, %arg4: memref<1x256xf32, #tpu.memory_space<vmem>>, %arg5: memref<1x256xf32, #tpu.memory_space<vmem>>, %arg6: memref<64x768xbf16, #tpu.memory_space<vmem>>) attributes {dimension_semantics = [#tpu.dimension_semantics<parallel>], iteration_bounds = array<i64: 1>, scalar_prefetch = 0 : i64, scratch_operands = 0 : i64, tpu.core_type = #tpu.core_type<tc>, window_params = [{transform_indices = @transform_0, window_bounds = array<i64: 64, 256>}, {pipeline_mode = #tpu.pipeline_mode<synchronous>, transform_indices = @transform_1, window_bounds = array<i64: 256, 768>}, {pipeline_mode = #tpu.pipeline_mode<synchronous>, transform_indices = @transform_2, window_bounds = array<i64: 1, 768>}, {pipeline_mode = #tpu.pipeline_mode<synchronous>, transform_indices = @transform_3, window_bounds = array<i64: 1, 256>}, {pipeline_mode = #tpu.pipeline_mode<synchronous>, transform_indices = @transform_4, window_bounds = array<i64: 1, 256>}, {transform_indices = @transform_5, window_bounds = array<i64: 64, 768>}]} {
    %c0 = arith.constant 0 : index
    %c0_0 = arith.constant 0 : index
    %0 = vector.load %arg1[%c0, %c0_0] : memref<64x256xbf16, #tpu.memory_space<vmem>>, vector<64x256xbf16>
    %1 = arith.extf %0 : vector<64x256xbf16> to vector<64x256xf32>
    %cst = arith.constant dense<0.000000e+00> : vector<64xf32>
    %2 = vector.multi_reduction <add>, %1, %cst [1] : vector<64x256xf32> to vector<64xf32>
    %3 = vector.shape_cast %2 : vector<64xf32> to vector<64x1xf32>
    %cst_1 = arith.constant 2.560000e+02 : f32
    %4 = vector.broadcast %cst_1 : f32 to vector<64x1xf32>
    %5 = arith.divf %3, %4 : vector<64x1xf32>
    %6 = vector.broadcast %5 : vector<64x1xf32> to vector<64x256xf32>
    %7 = arith.subf %1, %6 : vector<64x256xf32>
    %8 = arith.mulf %7, %7 : vector<64x256xf32>
    %cst_2 = arith.constant dense<0.000000e+00> : vector<64xf32>
    %9 = vector.multi_reduction <add>, %8, %cst_2 [1] : vector<64x256xf32> to vector<64xf32>
    %10 = vector.shape_cast %9 : vector<64xf32> to vector<64x1xf32>
    %cst_3 = arith.constant 2.560000e+02 : f32
    %11 = vector.broadcast %cst_3 : f32 to vector<64x1xf32>
    %12 = arith.divf %10, %11 : vector<64x1xf32>
    %cst_4 = arith.constant 9.99999997E-7 : f32
    %13 = vector.broadcast %cst_4 : f32 to vector<64x1xf32>
    %14 = arith.addf %12, %13 : vector<64x1xf32>
    %15 = math.rsqrt %14 : vector<64x1xf32>
    %16 = vector.broadcast %15 : vector<64x1xf32> to vector<64x256xf32>
    %17 = arith.mulf %7, %16 : vector<64x256xf32>
    %c0_5 = arith.constant 0 : index
    %c0_6 = arith.constant 0 : index
    %18 = vector.load %arg4[%c0_5, %c0_6] : memref<1x256xf32, #tpu.memory_space<vmem>>, vector<1x256xf32>
    %19 = vector.broadcast %18 : vector<1x256xf32> to vector<64x256xf32>
    %20 = arith.mulf %17, %19 : vector<64x256xf32>
    %c0_7 = arith.constant 0 : index
    %c0_8 = arith.constant 0 : index
    %21 = vector.load %arg5[%c0_7, %c0_8] : memref<1x256xf32, #tpu.memory_space<vmem>>, vector<1x256xf32>
    %22 = vector.broadcast %21 : vector<1x256xf32> to vector<64x256xf32>
    %23 = arith.addf %20, %22 : vector<64x256xf32>
    %24 = arith.truncf %23 : vector<64x256xf32> to vector<64x256xbf16>
    %c0_9 = arith.constant 0 : index
    %c0_10 = arith.constant 0 : index
    %25 = vector.load %arg2[%c0_9, %c0_10] : memref<256x768xbf16, #tpu.memory_space<vmem>>, vector<256x768xbf16>
    %cst_11 = arith.constant dense<0.000000e+00> : vector<64x768xf32>
    %26 = tpu.matmul %24, %25, %cst_11 {dimension_numbers = #tpu.dot_dimension_numbers<[1], [0], [0], [1], [0, 0, 1, 1], [], []>} : vector<64x256xbf16>, vector<256x768xbf16>, vector<64x768xf32> -> vector<64x768xf32>
    %c0_12 = arith.constant 0 : index
    %c0_13 = arith.constant 0 : index
    %27 = vector.load %arg3[%c0_12, %c0_13] : memref<1x768xf32, #tpu.memory_space<vmem>>, vector<1x768xf32>
    %28 = vector.broadcast %27 : vector<1x768xf32> to vector<64x768xf32>
    %29 = arith.addf %26, %28 : vector<64x768xf32>
    %30 = arith.truncf %29 : vector<64x768xf32> to vector<64x768xbf16>
    %c0_14 = arith.constant 0 : index
    %c0_15 = arith.constant 0 : index
    %31 = vector.load %arg6[%c0_14, %c0_15] : memref<64x768xbf16, #tpu.memory_space<vmem>>, vector<64x768xbf16>
    tpu.vector_store %arg6[%c0_14, %c0_15], %30 {strides = array<i32>} : memref<64x768xbf16, #tpu.memory_space<vmem>>, vector<64x768xbf16>,
    return
  }
  func.func @transform_0(%arg0: i32) -> (i32, i32) {
    %c0_i32 = arith.constant 0 : i32
    %c0_i32_0 = arith.constant 0 : i32
    return %arg0, %c0_i32 : i32, i32
  }
  func.func @transform_1(%arg0: i32) -> (i32, i32) {
    %c0_i32 = arith.constant 0 : i32
    %c0_i32_0 = arith.constant 0 : i32
    %c0_i32_1 = arith.constant 0 : i32
    return %c0_i32, %c0_i32_0 : i32, i32
  }
  func.func @transform_2(%arg0: i32) -> (i32, i32) {
    %c0_i32 = arith.constant 0 : i32
    %c0_i32_0 = arith.constant 0 : i32
    %c0_i32_1 = arith.constant 0 : i32
    return %c0_i32, %c0_i32_0 : i32, i32
  }
  func.func @transform_3(%arg0: i32) -> (i32, i32) {
    %c0_i32 = arith.constant 0 : i32
    %c0_i32_0 = arith.constant 0 : i32
    %c0_i32_1 = arith.constant 0 : i32
    return %c0_i32, %c0_i32_0 : i32, i32
  }
  func.func @transform_4(%arg0: i32) -> (i32, i32) {
    %c0_i32 = arith.constant 0 : i32
    %c0_i32_0 = arith.constant 0 : i32
    %c0_i32_1 = arith.constant 0 : i32
    return %c0_i32, %c0_i32_0 : i32, i32
  }
  func.func @transform_5(%arg0: i32) -> (i32, i32) {
    %c0_i32 = arith.constant 0 : i32
    %c0_i32_0 = arith.constant 0 : i32
    return %arg0, %c0_i32 : i32, i32
  }
}

module attributes {stable_mosaic.version = 11 : i64} {
  func.func @_fused_linear_kernel(%arg0: i32, %arg1: memref<64x256xbf16, #tpu.memory_space<vmem>>, %arg2: memref<256x256xbf16, #tpu.memory_space<vmem>>, %arg3: memref<1x256xf32, #tpu.memory_space<vmem>>, %arg4: memref<64x256xbf16, #tpu.memory_space<vmem>>, %arg5: memref<64x256xbf16, #tpu.memory_space<vmem>>) attributes {dimension_semantics = [#tpu.dimension_semantics<parallel>], iteration_bounds = array<i64: 1>, scalar_prefetch = 0 : i64, scratch_operands = 0 : i64, tpu.core_type = #tpu.core_type<tc>, window_params = [{transform_indices = @transform_0, window_bounds = array<i64: 64, 256>}, {pipeline_mode = #tpu.pipeline_mode<synchronous>, transform_indices = @transform_1, window_bounds = array<i64: 256, 256>}, {pipeline_mode = #tpu.pipeline_mode<synchronous>, transform_indices = @transform_2, window_bounds = array<i64: 1, 256>}, {transform_indices = @transform_3, window_bounds = array<i64: 64, 256>}, {transform_indices = @transform_4, window_bounds = array<i64: 64, 256>}]} {
    %c0 = arith.constant 0 : index
    %c0_0 = arith.constant 0 : index
    %0 = vector.load %arg1[%c0, %c0_0] : memref<64x256xbf16, #tpu.memory_space<vmem>>, vector<64x256xbf16>
    %c0_1 = arith.constant 0 : index
    %c0_2 = arith.constant 0 : index
    %1 = vector.load %arg2[%c0_1, %c0_2] : memref<256x256xbf16, #tpu.memory_space<vmem>>, vector<256x256xbf16>
    %cst = arith.constant dense<0.000000e+00> : vector<64x256xf32>
    %2 = tpu.matmul %0, %1, %cst {dimension_numbers = #tpu.dot_dimension_numbers<[1], [0], [0], [1], [0, 0, 1, 1], [], []>} : vector<64x256xbf16>, vector<256x256xbf16>, vector<64x256xf32> -> vector<64x256xf32>
    %c0_3 = arith.constant 0 : index
    %c0_4 = arith.constant 0 : index
    %3 = vector.load %arg3[%c0_3, %c0_4] : memref<1x256xf32, #tpu.memory_space<vmem>>, vector<1x256xf32>
    %4 = vector.broadcast %3 : vector<1x256xf32> to vector<64x256xf32>
    %5 = arith.addf %2, %4 : vector<64x256xf32>
    %c0_5 = arith.constant 0 : index
    %c0_6 = arith.constant 0 : index
    %6 = vector.load %arg4[%c0_5, %c0_6] : memref<64x256xbf16, #tpu.memory_space<vmem>>, vector<64x256xbf16>
    %7 = arith.extf %6 : vector<64x256xbf16> to vector<64x256xf32>
    %8 = arith.addf %5, %7 : vector<64x256xf32>
    %9 = arith.truncf %8 : vector<64x256xf32> to vector<64x256xbf16>
    %c0_7 = arith.constant 0 : index
    %c0_8 = arith.constant 0 : index
    %10 = vector.load %arg5[%c0_7, %c0_8] : memref<64x256xbf16, #tpu.memory_space<vmem>>, vector<64x256xbf16>
    tpu.vector_store %arg5[%c0_7, %c0_8], %9 {strides = array<i32>} : memref<64x256xbf16, #tpu.memory_space<vmem>>, vector<64x256xbf16>,
    return
  }
  func.func @transform_0(%arg0: i32) -> (i32, i32) {
    %c0_i32 = arith.constant 0 : i32
    %c0_i32_0 = arith.constant 0 : i32
    return %arg0, %c0_i32 : i32, i32
  }
  func.func @transform_1(%arg0: i32) -> (i32, i32) {
    %c0_i32 = arith.constant 0 : i32
    %c0_i32_0 = arith.constant 0 : i32
    %c0_i32_1 = arith.constant 0 : i32
    return %c0_i32, %c0_i32_0 : i32, i32
  }
  func.func @transform_2(%arg0: i32) -> (i32, i32) {
    %c0_i32 = arith.constant 0 : i32
    %c0_i32_0 = arith.constant 0 : i32
    %c0_i32_1 = arith.constant 0 : i32
    return %c0_i32, %c0_i32_0 : i32, i32
  }
  func.func @transform_3(%arg0: i32) -> (i32, i32) {
    %c0_i32 = arith.constant 0 : i32
    %c0_i32_0 = arith.constant 0 : i32
    return %arg0, %c0_i32 : i32, i32
  }
  func.func @transform_4(%arg0: i32) -> (i32, i32) {
    %c0_i32 = arith.constant 0 : i32
    %c0_i32_0 = arith.constant 0 : i32
    return %arg0, %c0_i32 : i32, i32
  }
}

module attributes {stable_mosaic.version = 11 : i64} {
  func.func @_attention_kernel(%arg0: i32, %arg1: i32, %arg2: memref<1x32x256xbf16, #tpu.memory_space<vmem>>, %arg3: memref<1x32x256xbf16, #tpu.memory_space<vmem>>, %arg4: memref<1x32x256xbf16, #tpu.memory_space<vmem>>, %arg5: memref<1x32x256xbf16, #tpu.memory_space<vmem>>) attributes {dimension_semantics = [#tpu.dimension_semantics<parallel>, #tpu.dimension_semantics<parallel>], iteration_bounds = array<i64: 2, 1>, scalar_prefetch = 0 : i64, scratch_operands = 0 : i64, tpu.core_type = #tpu.core_type<tc>, window_params = [{transform_indices = @transform_0, window_bounds = array<i64: 1, 32, 256>}, {transform_indices = @transform_1, window_bounds = array<i64: 1, 32, 256>}, {transform_indices = @transform_2, window_bounds = array<i64: 1, 32, 256>}, {transform_indices = @transform_3, window_bounds = array<i64: 1, 32, 256>}]} {
    %0 = tpu.iota {dimensions = array<i32: 1>} : vector<1x32xi32>
    %c17_i32 = arith.constant 17 : i32
    %1 = vector.broadcast %c17_i32 : i32 to vector<1x32xi32>
    %2 = arith.cmpi slt, %0, %1 : vector<1x32xi32>
    %cst = arith.constant 0.000000e+00 : f32
    %cst_0 = arith.constant -1.000000e+30 : f32
    %3 = vector.broadcast %cst : f32 to vector<1x32xf32>
    %4 = vector.broadcast %cst_0 : f32 to vector<1x32xf32>
    %5 = arith.select %2, %3, %4 : vector<1x32xi1>, vector<1x32xf32>
    %c0 = arith.constant 0 : index
    %c0_1 = arith.constant 0 : index
    %c0_2 = arith.constant 0 : index
    %6 = vector.load %arg2[%c0, %c0_1, %c0_2] : memref<1x32x256xbf16, #tpu.memory_space<vmem>>, vector<1x32x64xbf16>
    %7 = vector.shape_cast %6 : vector<1x32x64xbf16> to vector<32x64xbf16>
    %c0_3 = arith.constant 0 : index
    %c0_4 = arith.constant 0 : index
    %c0_5 = arith.constant 0 : index
    %8 = vector.load %arg3[%c0_3, %c0_4, %c0_5] : memref<1x32x256xbf16, #tpu.memory_space<vmem>>, vector<1x32x64xbf16>
    %9 = vector.shape_cast %8 : vector<1x32x64xbf16> to vector<32x64xbf16>
    %c0_6 = arith.constant 0 : index
    %c0_7 = arith.constant 0 : index
    %c0_8 = arith.constant 0 : index
    %10 = vector.load %arg4[%c0_6, %c0_7, %c0_8] : memref<1x32x256xbf16, #tpu.memory_space<vmem>>, vector<1x32x64xbf16>
    %11 = vector.shape_cast %10 : vector<1x32x64xbf16> to vector<32x64xbf16>
    %cst_9 = arith.constant dense<0.000000e+00> : vector<32x32xf32>
    %12 = tpu.matmul %7, %9, %cst_9 {dimension_numbers = #tpu.dot_dimension_numbers<[1], [1], [0], [0], [0, 0, 1, 0], [], []>} : vector<32x64xbf16>, vector<32x64xbf16>, vector<32x32xf32> -> vector<32x32xf32>
    %cst_10 = arith.constant 1.250000e-01 : f32
    %13 = vector.broadcast %cst_10 : f32 to vector<32x32xf32>
    %14 = arith.mulf %12, %13 : vector<32x32xf32>
    %15 = vector.broadcast %5 : vector<1x32xf32> to vector<32x32xf32>
    %16 = arith.addf %14, %15 : vector<32x32xf32>
    %cst_11 = arith.constant dense<0xFF800000> : vector<32xf32>
    %17 = vector.multi_reduction <maximumf>, %16, %cst_11 [1] : vector<32x32xf32> to vector<32xf32>
    %18 = vector.shape_cast %17 : vector<32xf32> to vector<32x1xf32>
    %19 = vector.broadcast %18 : vector<32x1xf32> to vector<32x32xf32>
    %20 = arith.subf %16, %19 : vector<32x32xf32>
    %21 = math.exp %20 : vector<32x32xf32>
    %cst_12 = arith.constant dense<0.000000e+00> : vector<32xf32>
    %22 = vector.multi_reduction <add>, %21, %cst_12 [1] : vector<32x32xf32> to vector<32xf32>
    %23 = vector.shape_cast %22 : vector<32xf32> to vector<32x1xf32>
    %24 = arith.truncf %21 : vector<32x32xf32> to vector<32x32xbf16>
    %cst_13 = arith.constant dense<0.000000e+00> : vector<32x64xf32>
    %25 = tpu.matmul %24, %11, %cst_13 {dimension_numbers = #tpu.dot_dimension_numbers<[1], [0], [0], [1], [0, 0, 1, 1], [], []>} : vector<32x32xbf16>, vector<32x64xbf16>, vector<32x64xf32> -> vector<32x64xf32>
    %26 = vector.broadcast %23 : vector<32x1xf32> to vector<32x64xf32>
    %27 = arith.divf %25, %26 : vector<32x64xf32>
    %c0_14 = arith.constant 0 : index
    %c0_15 = arith.constant 0 : index
    %c64 = arith.constant 64 : index
    %28 = vector.load %arg2[%c0_14, %c0_15, %c64] : memref<1x32x256xbf16, #tpu.memory_space<vmem>>, vector<1x32x64xbf16>
    %29 = vector.shape_cast %28 : vector<1x32x64xbf16> to vector<32x64xbf16>
    %c0_16 = arith.constant 0 : index
    %c0_17 = arith.constant 0 : index
    %c64_18 = arith.constant 64 : index
    %30 = vector.load %arg3[%c0_16, %c0_17, %c64_18] : memref<1x32x256xbf16, #tpu.memory_space<vmem>>, vector<1x32x64xbf16>
    %31 = vector.shape_cast %30 : vector<1x32x64xbf16> to vector<32x64xbf16>
    %c0_19 = arith.constant 0 : index
    %c0_20 = arith.constant 0 : index
    %c64_21 = arith.constant 64 : index
    %32 = vector.load %arg4[%c0_19, %c0_20, %c64_21] : memref<1x32x256xbf16, #tpu.memory_space<vmem>>, vector<1x32x64xbf16>
    %33 = vector.shape_cast %32 : vector<1x32x64xbf16> to vector<32x64xbf16>
    %cst_22 = arith.constant dense<0.000000e+00> : vector<32x32xf32>
    %34 = tpu.matmul %29, %31, %cst_22 {dimension_numbers = #tpu.dot_dimension_numbers<[1], [1], [0], [0], [0, 0, 1, 0], [], []>} : vector<32x64xbf16>, vector<32x64xbf16>, vector<32x32xf32> -> vector<32x32xf32>
    %cst_23 = arith.constant 1.250000e-01 : f32
    %35 = vector.broadcast %cst_23 : f32 to vector<32x32xf32>
    %36 = arith.mulf %34, %35 : vector<32x32xf32>
    %37 = vector.broadcast %5 : vector<1x32xf32> to vector<32x32xf32>
    %38 = arith.addf %36, %37 : vector<32x32xf32>
    %cst_24 = arith.constant dense<0xFF800000> : vector<32xf32>
    %39 = vector.multi_reduction <maximumf>, %38, %cst_24 [1] : vector<32x32xf32> to vector<32xf32>
    %40 = vector.shape_cast %39 : vector<32xf32> to vector<32x1xf32>
    %41 = vector.broadcast %40 : vector<32x1xf32> to vector<32x32xf32>
    %42 = arith.subf %38, %41 : vector<32x32xf32>
    %43 = math.exp %42 : vector<32x32xf32>
    %cst_25 = arith.constant dense<0.000000e+00> : vector<32xf32>
    %44 = vector.multi_reduction <add>, %43, %cst_25 [1] : vector<32x32xf32> to vector<32xf32>
    %45 = vector.shape_cast %44 : vector<32xf32> to vector<32x1xf32>
    %46 = arith.truncf %43 : vector<32x32xf32> to vector<32x32xbf16>
    %cst_26 = arith.constant dense<0.000000e+00> : vector<32x64xf32>
    %47 = tpu.matmul %46, %33, %cst_26 {dimension_numbers = #tpu.dot_dimension_numbers<[1], [0], [0], [1], [0, 0, 1, 1], [], []>} : vector<32x32xbf16>, vector<32x64xbf16>, vector<32x64xf32> -> vector<32x64xf32>
    %48 = vector.broadcast %45 : vector<32x1xf32> to vector<32x64xf32>
    %49 = arith.divf %47, %48 : vector<32x64xf32>
    %c0_27 = arith.constant 0 : index
    %c0_28 = arith.constant 0 : index
    %c128 = arith.constant 128 : index
    %50 = vector.load %arg2[%c0_27, %c0_28, %c128] : memref<1x32x256xbf16, #tpu.memory_space<vmem>>, vector<1x32x64xbf16>
    %51 = vector.shape_cast %50 : vector<1x32x64xbf16> to vector<32x64xbf16>
    %c0_29 = arith.constant 0 : index
    %c0_30 = arith.constant 0 : index
    %c128_31 = arith.constant 128 : index
    %52 = vector.load %arg3[%c0_29, %c0_30, %c128_31] : memref<1x32x256xbf16, #tpu.memory_space<vmem>>, vector<1x32x64xbf16>
    %53 = vector.shape_cast %52 : vector<1x32x64xbf16> to vector<32x64xbf16>
    %c0_32 = arith.constant 0 : index
    %c0_33 = arith.constant 0 : index
    %c128_34 = arith.constant 128 : index
    %54 = vector.load %arg4[%c0_32, %c0_33, %c128_34] : memref<1x32x256xbf16, #tpu.memory_space<vmem>>, vector<1x32x64xbf16>
    %55 = vector.shape_cast %54 : vector<1x32x64xbf16> to vector<32x64xbf16>
    %cst_35 = arith.constant dense<0.000000e+00> : vector<32x32xf32>
    %56 = tpu.matmul %51, %53, %cst_35 {dimension_numbers = #tpu.dot_dimension_numbers<[1], [1], [0], [0], [0, 0, 1, 0], [], []>} : vector<32x64xbf16>, vector<32x64xbf16>, vector<32x32xf32> -> vector<32x32xf32>
    %cst_36 = arith.constant 1.250000e-01 : f32
    %57 = vector.broadcast %cst_36 : f32 to vector<32x32xf32>
    %58 = arith.mulf %56, %57 : vector<32x32xf32>
    %59 = vector.broadcast %5 : vector<1x32xf32> to vector<32x32xf32>
    %60 = arith.addf %58, %59 : vector<32x32xf32>
    %cst_37 = arith.constant dense<0xFF800000> : vector<32xf32>
    %61 = vector.multi_reduction <maximumf>, %60, %cst_37 [1] : vector<32x32xf32> to vector<32xf32>
    %62 = vector.shape_cast %61 : vector<32xf32> to vector<32x1xf32>
    %63 = vector.broadcast %62 : vector<32x1xf32> to vector<32x32xf32>
    %64 = arith.subf %60, %63 : vector<32x32xf32>
    %65 = math.exp %64 : vector<32x32xf32>
    %cst_38 = arith.constant dense<0.000000e+00> : vector<32xf32>
    %66 = vector.multi_reduction <add>, %65, %cst_38 [1] : vector<32x32xf32> to vector<32xf32>
    %67 = vector.shape_cast %66 : vector<32xf32> to vector<32x1xf32>
    %68 = arith.truncf %65 : vector<32x32xf32> to vector<32x32xbf16>
    %cst_39 = arith.constant dense<0.000000e+00> : vector<32x64xf32>
    %69 = tpu.matmul %68, %55, %cst_39 {dimension_numbers = #tpu.dot_dimension_numbers<[1], [0], [0], [1], [0, 0, 1, 1], [], []>} : vector<32x32xbf16>, vector<32x64xbf16>, vector<32x64xf32> -> vector<32x64xf32>
    %70 = vector.broadcast %67 : vector<32x1xf32> to vector<32x64xf32>
    %71 = arith.divf %69, %70 : vector<32x64xf32>
    %c0_40 = arith.constant 0 : index
    %c0_41 = arith.constant 0 : index
    %c192 = arith.constant 192 : index
    %72 = vector.load %arg2[%c0_40, %c0_41, %c192] : memref<1x32x256xbf16, #tpu.memory_space<vmem>>, vector<1x32x64xbf16>
    %73 = vector.shape_cast %72 : vector<1x32x64xbf16> to vector<32x64xbf16>
    %c0_42 = arith.constant 0 : index
    %c0_43 = arith.constant 0 : index
    %c192_44 = arith.constant 192 : index
    %74 = vector.load %arg3[%c0_42, %c0_43, %c192_44] : memref<1x32x256xbf16, #tpu.memory_space<vmem>>, vector<1x32x64xbf16>
    %75 = vector.shape_cast %74 : vector<1x32x64xbf16> to vector<32x64xbf16>
    %c0_45 = arith.constant 0 : index
    %c0_46 = arith.constant 0 : index
    %c192_47 = arith.constant 192 : index
    %76 = vector.load %arg4[%c0_45, %c0_46, %c192_47] : memref<1x32x256xbf16, #tpu.memory_space<vmem>>, vector<1x32x64xbf16>
    %77 = vector.shape_cast %76 : vector<1x32x64xbf16> to vector<32x64xbf16>
    %cst_48 = arith.constant dense<0.000000e+00> : vector<32x32xf32>
    %78 = tpu.matmul %73, %75, %cst_48 {dimension_numbers = #tpu.dot_dimension_numbers<[1], [1], [0], [0], [0, 0, 1, 0], [], []>} : vector<32x64xbf16>, vector<32x64xbf16>, vector<32x32xf32> -> vector<32x32xf32>
    %cst_49 = arith.constant 1.250000e-01 : f32
    %79 = vector.broadcast %cst_49 : f32 to vector<32x32xf32>
    %80 = arith.mulf %78, %79 : vector<32x32xf32>
    %81 = vector.broadcast %5 : vector<1x32xf32> to vector<32x32xf32>
    %82 = arith.addf %80, %81 : vector<32x32xf32>
    %cst_50 = arith.constant dense<0xFF800000> : vector<32xf32>
    %83 = vector.multi_reduction <maximumf>, %82, %cst_50 [1] : vector<32x32xf32> to vector<32xf32>
    %84 = vector.shape_cast %83 : vector<32xf32> to vector<32x1xf32>
    %85 = vector.broadcast %84 : vector<32x1xf32> to vector<32x32xf32>
    %86 = arith.subf %82, %85 : vector<32x32xf32>
    %87 = math.exp %86 : vector<32x32xf32>
    %cst_51 = arith.constant dense<0.000000e+00> : vector<32xf32>
    %88 = vector.multi_reduction <add>, %87, %cst_51 [1] : vector<32x32xf32> to vector<32xf32>
    %89 = vector.shape_cast %88 : vector<32xf32> to vector<32x1xf32>
    %90 = arith.truncf %87 : vector<32x32xf32> to vector<32x32xbf16>
    %cst_52 = arith.constant dense<0.000000e+00> : vector<32x64xf32>
    %91 = tpu.matmul %90, %77, %cst_52 {dimension_numbers = #tpu.dot_dimension_numbers<[1], [0], [0], [1], [0, 0, 1, 1], [], []>} : vector<32x32xbf16>, vector<32x64xbf16>, vector<32x64xf32> -> vector<32x64xf32>
    %92 = vector.broadcast %89 : vector<32x1xf32> to vector<32x64xf32>
    %93 = arith.divf %91, %92 : vector<32x64xf32>
    %94 = tpu.concatenate %27, %49, %71, %93 in 1 : vector<32x64xf32>, vector<32x64xf32>, vector<32x64xf32>, vector<32x64xf32> -> vector<32x256xf32>
    %95 = arith.truncf %94 : vector<32x256xf32> to vector<32x256xbf16>
    %c0_53 = arith.constant 0 : index
    %c0_54 = arith.constant 0 : index
    %c0_55 = arith.constant 0 : index
    %96 = vector.load %arg5[%c0_53, %c0_54, %c0_55] : memref<1x32x256xbf16, #tpu.memory_space<vmem>>, vector<1x32x256xbf16>
    %97 = vector.shape_cast %96 : vector<1x32x256xbf16> to vector<32x256xbf16>
    %98 = vector.shape_cast %95 : vector<32x256xbf16> to vector<1x32x256xbf16>
    tpu.vector_store %arg5[%c0_53, %c0_54, %c0_55], %98 {strides = array<i32>} : memref<1x32x256xbf16, #tpu.memory_space<vmem>>, vector<1x32x256xbf16>,
    return
  }
  func.func @transform_0(%arg0: i32, %arg1: i32) -> (i32, i32, i32) {
    %c0_i32 = arith.constant 0 : i32
    %0 = arith.addi %c0_i32, %arg1 : i32
    %c0_i32_0 = arith.constant 0 : i32
    %c0_i32_1 = arith.constant 0 : i32
    return %arg0, %c0_i32_0, %0 : i32, i32, i32
  }
  func.func @transform_1(%arg0: i32, %arg1: i32) -> (i32, i32, i32) {
    %c1_i32 = arith.constant 1 : i32
    %0 = arith.addi %c1_i32, %arg1 : i32
    %c0_i32 = arith.constant 0 : i32
    %c0_i32_0 = arith.constant 0 : i32
    return %arg0, %c0_i32, %0 : i32, i32, i32
  }
  func.func @transform_2(%arg0: i32, %arg1: i32) -> (i32, i32, i32) {
    %c2_i32 = arith.constant 2 : i32
    %0 = arith.addi %c2_i32, %arg1 : i32
    %c0_i32 = arith.constant 0 : i32
    %c0_i32_0 = arith.constant 0 : i32
    return %arg0, %c0_i32, %0 : i32, i32, i32
  }
  func.func @transform_3(%arg0: i32, %arg1: i32) -> (i32, i32, i32) {
    %c0_i32 = arith.constant 0 : i32
    %c0_i32_0 = arith.constant 0 : i32
    return %arg0, %c0_i32, %arg1 : i32, i32, i32
  }
}

module attributes {stable_mosaic.version = 11 : i64} {
  func.func @_fused_mlp_kernel(%arg0: i32, %arg1: memref<64x256xbf16, #tpu.memory_space<vmem>>, %arg2: memref<256x512xbf16, #tpu.memory_space<vmem>>, %arg3: memref<1x512xf32, #tpu.memory_space<vmem>>, %arg4: memref<512x256xbf16, #tpu.memory_space<vmem>>, %arg5: memref<1x256xf32, #tpu.memory_space<vmem>>, %arg6: memref<1x256xf32, #tpu.memory_space<vmem>>, %arg7: memref<1x256xf32, #tpu.memory_space<vmem>>, %arg8: memref<64x256xbf16, #tpu.memory_space<vmem>>) attributes {dimension_semantics = [#tpu.dimension_semantics<parallel>], iteration_bounds = array<i64: 1>, scalar_prefetch = 0 : i64, scratch_operands = 0 : i64, tpu.core_type = #tpu.core_type<tc>, window_params = [{transform_indices = @transform_0, window_bounds = array<i64: 64, 256>}, {pipeline_mode = #tpu.pipeline_mode<synchronous>, transform_indices = @transform_1, window_bounds = array<i64: 256, 512>}, {pipeline_mode = #tpu.pipeline_mode<synchronous>, transform_indices = @transform_2, window_bounds = array<i64: 1, 512>}, {pipeline_mode = #tpu.pipeline_mode<synchronous>, transform_indices = @transform_3, window_bounds = array<i64: 512, 256>}, {pipeline_mode = #tpu.pipeline_mode<synchronous>, transform_indices = @transform_4, window_bounds = array<i64: 1, 256>}, {pipeline_mode = #tpu.pipeline_mode<synchronous>, transform_indices = @transform_5, window_bounds = array<i64: 1, 256>}, {pipeline_mode = #tpu.pipeline_mode<synchronous>, transform_indices = @transform_6, window_bounds = array<i64: 1, 256>}, {transform_indices = @transform_7, window_bounds = array<i64: 64, 256>}]} {
    %c0 = arith.constant 0 : index
    %c0_0 = arith.constant 0 : index
    %0 = vector.load %arg1[%c0, %c0_0] : memref<64x256xbf16, #tpu.memory_space<vmem>>, vector<64x256xbf16>
    %1 = arith.extf %0 : vector<64x256xbf16> to vector<64x256xf32>
    %cst = arith.constant dense<0.000000e+00> : vector<64xf32>
    %2 = vector.multi_reduction <add>, %1, %cst [1] : vector<64x256xf32> to vector<64xf32>
    %3 = vector.shape_cast %2 : vector<64xf32> to vector<64x1xf32>
    %cst_1 = arith.constant 2.560000e+02 : f32
    %4 = vector.broadcast %cst_1 : f32 to vector<64x1xf32>
    %5 = arith.divf %3, %4 : vector<64x1xf32>
    %6 = vector.broadcast %5 : vector<64x1xf32> to vector<64x256xf32>
    %7 = arith.subf %1, %6 : vector<64x256xf32>
    %8 = arith.mulf %7, %7 : vector<64x256xf32>
    %cst_2 = arith.constant dense<0.000000e+00> : vector<64xf32>
    %9 = vector.multi_reduction <add>, %8, %cst_2 [1] : vector<64x256xf32> to vector<64xf32>
    %10 = vector.shape_cast %9 : vector<64xf32> to vector<64x1xf32>
    %cst_3 = arith.constant 2.560000e+02 : f32
    %11 = vector.broadcast %cst_3 : f32 to vector<64x1xf32>
    %12 = arith.divf %10, %11 : vector<64x1xf32>
    %cst_4 = arith.constant 9.99999997E-7 : f32
    %13 = vector.broadcast %cst_4 : f32 to vector<64x1xf32>
    %14 = arith.addf %12, %13 : vector<64x1xf32>
    %15 = math.rsqrt %14 : vector<64x1xf32>
    %16 = vector.broadcast %15 : vector<64x1xf32> to vector<64x256xf32>
    %17 = arith.mulf %7, %16 : vector<64x256xf32>
    %c0_5 = arith.constant 0 : index
    %c0_6 = arith.constant 0 : index
    %18 = vector.load %arg6[%c0_5, %c0_6] : memref<1x256xf32, #tpu.memory_space<vmem>>, vector<1x256xf32>
    %19 = vector.broadcast %18 : vector<1x256xf32> to vector<64x256xf32>
    %20 = arith.mulf %17, %19 : vector<64x256xf32>
    %c0_7 = arith.constant 0 : index
    %c0_8 = arith.constant 0 : index
    %21 = vector.load %arg7[%c0_7, %c0_8] : memref<1x256xf32, #tpu.memory_space<vmem>>, vector<1x256xf32>
    %22 = vector.broadcast %21 : vector<1x256xf32> to vector<64x256xf32>
    %23 = arith.addf %20, %22 : vector<64x256xf32>
    %24 = arith.truncf %23 : vector<64x256xf32> to vector<64x256xbf16>
    %c0_9 = arith.constant 0 : index
    %c0_10 = arith.constant 0 : index
    %25 = vector.load %arg2[%c0_9, %c0_10] : memref<256x512xbf16, #tpu.memory_space<vmem>>, vector<256x512xbf16>
    %cst_11 = arith.constant dense<0.000000e+00> : vector<64x512xf32>
    %26 = tpu.matmul %24, %25, %cst_11 {dimension_numbers = #tpu.dot_dimension_numbers<[1], [0], [0], [1], [0, 0, 1, 1], [], []>} : vector<64x256xbf16>, vector<256x512xbf16>, vector<64x512xf32> -> vector<64x512xf32>
    %c0_12 = arith.constant 0 : index
    %c0_13 = arith.constant 0 : index
    %27 = vector.load %arg3[%c0_12, %c0_13] : memref<1x512xf32, #tpu.memory_space<vmem>>, vector<1x512xf32>
    %28 = vector.broadcast %27 : vector<1x512xf32> to vector<64x512xf32>
    %29 = arith.addf %26, %28 : vector<64x512xf32>
    %cst_14 = arith.constant 5.000000e-01 : f32
    %30 = vector.broadcast %cst_14 : f32 to vector<64x512xf32>
    %31 = arith.mulf %30, %29 : vector<64x512xf32>
    %cst_15 = arith.constant 0.707106769 : f32
    %32 = vector.broadcast %cst_15 : f32 to vector<64x512xf32>
    %33 = arith.mulf %29, %32 : vector<64x512xf32>
    %34 = math.erf %33 : vector<64x512xf32>
    %cst_16 = arith.constant 1.000000e+00 : f32
    %35 = vector.broadcast %cst_16 : f32 to vector<64x512xf32>
    %36 = arith.addf %35, %34 : vector<64x512xf32>
    %37 = arith.mulf %31, %36 : vector<64x512xf32>
    %38 = arith.truncf %37 : vector<64x512xf32> to vector<64x512xbf16>
    %c0_17 = arith.constant 0 : index
    %c0_18 = arith.constant 0 : index
    %39 = vector.load %arg4[%c0_17, %c0_18] : memref<512x256xbf16, #tpu.memory_space<vmem>>, vector<512x256xbf16>
    %cst_19 = arith.constant dense<0.000000e+00> : vector<64x256xf32>
    %40 = tpu.matmul %38, %39, %cst_19 {dimension_numbers = #tpu.dot_dimension_numbers<[1], [0], [0], [1], [0, 0, 1, 1], [], []>} : vector<64x512xbf16>, vector<512x256xbf16>, vector<64x256xf32> -> vector<64x256xf32>
    %c0_20 = arith.constant 0 : index
    %c0_21 = arith.constant 0 : index
    %41 = vector.load %arg5[%c0_20, %c0_21] : memref<1x256xf32, #tpu.memory_space<vmem>>, vector<1x256xf32>
    %42 = vector.broadcast %41 : vector<1x256xf32> to vector<64x256xf32>
    %43 = arith.addf %40, %42 : vector<64x256xf32>
    %44 = arith.addf %43, %1 : vector<64x256xf32>
    %45 = arith.truncf %44 : vector<64x256xf32> to vector<64x256xbf16>
    %c0_22 = arith.constant 0 : index
    %c0_23 = arith.constant 0 : index
    %46 = vector.load %arg8[%c0_22, %c0_23] : memref<64x256xbf16, #tpu.memory_space<vmem>>, vector<64x256xbf16>
    tpu.vector_store %arg8[%c0_22, %c0_23], %45 {strides = array<i32>} : memref<64x256xbf16, #tpu.memory_space<vmem>>, vector<64x256xbf16>,
    return
  }
  func.func @transform_0(%arg0: i32) -> (i32, i32) {
    %c0_i32 = arith.constant 0 : i32
    %c0_i32_0 = arith.constant 0 : i32
    return %arg0, %c0_i32 : i32, i32
  }
  func.func @transform_1(%arg0: i32) -> (i32, i32) {
    %c0_i32 = arith.constant 0 : i32
    %c0_i32_0 = arith.constant 0 : i32
    %c0_i32_1 = arith.constant 0 : i32
    return %c0_i32, %c0_i32_0 : i32, i32
  }
  func.func @transform_2(%arg0: i32) -> (i32, i32) {
    %c0_i32 = arith.constant 0 : i32
    %c0_i32_0 = arith.constant 0 : i32
    %c0_i32_1 = arith.constant 0 : i32
    return %c0_i32, %c0_i32_0 : i32, i32
  }
  func.func @transform_3(%arg0: i32) -> (i32, i32) {
    %c0_i32 = arith.constant 0 : i32
    %c0_i32_0 = arith.constant 0 : i32
    %c0_i32_1 = arith.constant 0 : i32
    return %c0_i32, %c0_i32_0 : i32, i32
  }
  func.func @transform_4(%arg0: i32) -> (i32, i32) {
    %c0_i32 = arith.constant 0 : i32
    %c0_i32_0 = arith.constant 0 : i32
    %c0_i32_1 = arith.constant 0 : i32
    return %c0_i32, %c0_i32_0 : i32, i32
  }
  func.func @transform_5(%arg0: i32) -> (i32, i32) {
    %c0_i32 = arith.constant 0 : i32
    %c0_i32_0 = arith.constant 0 : i32
    %c0_i32_1 = arith.constant 0 : i32
    return %c0_i32, %c0_i32_0 : i32, i32
  }
  func.func @transform_6(%arg0: i32) -> (i32, i32) {
    %c0_i32 = arith.constant 0 : i32
    %c0_i32_0 = arith.constant 0 : i32
    %c0_i32_1 = arith.constant 0 : i32
    return %c0_i32, %c0_i32_0 : i32, i32
  }
  func.func @transform_7(%arg0: i32) -> (i32, i32) {
    %c0_i32 = arith.constant 0 : i32
    %c0_i32_0 = arith.constant 0 : i32
    return %arg0, %c0_i32 : i32, i32
  }
}

module attributes {stable_mosaic.version = 11 : i64} {
  func.func @_fused_linear_kernel(%arg0: i32, %arg1: memref<2x256xbf16, #tpu.memory_space<vmem>>, %arg2: memref<256x16xbf16, #tpu.memory_space<vmem>>, %arg3: memref<1x16xf32, #tpu.memory_space<vmem>>, %arg4: memref<1x256xf32, #tpu.memory_space<vmem>>, %arg5: memref<1x256xf32, #tpu.memory_space<vmem>>, %arg6: memref<2x16xf32, #tpu.memory_space<vmem>>) attributes {dimension_semantics = [#tpu.dimension_semantics<parallel>], iteration_bounds = array<i64: 1>, scalar_prefetch = 0 : i64, scratch_operands = 0 : i64, tpu.core_type = #tpu.core_type<tc>, window_params = [{transform_indices = @transform_0, window_bounds = array<i64: 2, 256>}, {pipeline_mode = #tpu.pipeline_mode<synchronous>, transform_indices = @transform_1, window_bounds = array<i64: 256, 16>}, {pipeline_mode = #tpu.pipeline_mode<synchronous>, transform_indices = @transform_2, window_bounds = array<i64: 1, 16>}, {pipeline_mode = #tpu.pipeline_mode<synchronous>, transform_indices = @transform_3, window_bounds = array<i64: 1, 256>}, {pipeline_mode = #tpu.pipeline_mode<synchronous>, transform_indices = @transform_4, window_bounds = array<i64: 1, 256>}, {transform_indices = @transform_5, window_bounds = array<i64: 2, 16>}]} {
    %c0 = arith.constant 0 : index
    %c0_0 = arith.constant 0 : index
    %0 = vector.load %arg1[%c0, %c0_0] : memref<2x256xbf16, #tpu.memory_space<vmem>>, vector<2x256xbf16>
    %1 = arith.extf %0 : vector<2x256xbf16> to vector<2x256xf32>
    %cst = arith.constant dense<0.000000e+00> : vector<2xf32>
    %2 = vector.multi_reduction <add>, %1, %cst [1] : vector<2x256xf32> to vector<2xf32>
    %3 = vector.shape_cast %2 : vector<2xf32> to vector<2x1xf32>
    %cst_1 = arith.constant 2.560000e+02 : f32
    %4 = vector.broadcast %cst_1 : f32 to vector<2x1xf32>
    %5 = arith.divf %3, %4 : vector<2x1xf32>
    %6 = vector.broadcast %5 : vector<2x1xf32> to vector<2x256xf32>
    %7 = arith.subf %1, %6 : vector<2x256xf32>
    %8 = arith.mulf %7, %7 : vector<2x256xf32>
    %cst_2 = arith.constant dense<0.000000e+00> : vector<2xf32>
    %9 = vector.multi_reduction <add>, %8, %cst_2 [1] : vector<2x256xf32> to vector<2xf32>
    %10 = vector.shape_cast %9 : vector<2xf32> to vector<2x1xf32>
    %cst_3 = arith.constant 2.560000e+02 : f32
    %11 = vector.broadcast %cst_3 : f32 to vector<2x1xf32>
    %12 = arith.divf %10, %11 : vector<2x1xf32>
    %cst_4 = arith.constant 9.99999997E-7 : f32
    %13 = vector.broadcast %cst_4 : f32 to vector<2x1xf32>
    %14 = arith.addf %12, %13 : vector<2x1xf32>
    %15 = math.rsqrt %14 : vector<2x1xf32>
    %16 = vector.broadcast %15 : vector<2x1xf32> to vector<2x256xf32>
    %17 = arith.mulf %7, %16 : vector<2x256xf32>
    %c0_5 = arith.constant 0 : index
    %c0_6 = arith.constant 0 : index
    %18 = vector.load %arg4[%c0_5, %c0_6] : memref<1x256xf32, #tpu.memory_space<vmem>>, vector<1x256xf32>
    %19 = vector.broadcast %18 : vector<1x256xf32> to vector<2x256xf32>
    %20 = arith.mulf %17, %19 : vector<2x256xf32>
    %c0_7 = arith.constant 0 : index
    %c0_8 = arith.constant 0 : index
    %21 = vector.load %arg5[%c0_7, %c0_8] : memref<1x256xf32, #tpu.memory_space<vmem>>, vector<1x256xf32>
    %22 = vector.broadcast %21 : vector<1x256xf32> to vector<2x256xf32>
    %23 = arith.addf %20, %22 : vector<2x256xf32>
    %24 = arith.truncf %23 : vector<2x256xf32> to vector<2x256xbf16>
    %c0_9 = arith.constant 0 : index
    %c0_10 = arith.constant 0 : index
    %25 = vector.load %arg2[%c0_9, %c0_10] : memref<256x16xbf16, #tpu.memory_space<vmem>>, vector<256x16xbf16>
    %cst_11 = arith.constant dense<0.000000e+00> : vector<2x16xf32>
    %26 = tpu.matmul %24, %25, %cst_11 {dimension_numbers = #tpu.dot_dimension_numbers<[1], [0], [0], [1], [0, 0, 1, 1], [], []>} : vector<2x256xbf16>, vector<256x16xbf16>, vector<2x16xf32> -> vector<2x16xf32>
    %c0_12 = arith.constant 0 : index
    %c0_13 = arith.constant 0 : index
    %27 = vector.load %arg3[%c0_12, %c0_13] : memref<1x16xf32, #tpu.memory_space<vmem>>, vector<1x16xf32>
    %28 = vector.broadcast %27 : vector<1x16xf32> to vector<2x16xf32>
    %29 = arith.addf %26, %28 : vector<2x16xf32>
    %c0_14 = arith.constant 0 : index
    %c0_15 = arith.constant 0 : index
    %30 = vector.load %arg6[%c0_14, %c0_15] : memref<2x16xf32, #tpu.memory_space<vmem>>, vector<2x16xf32>
    tpu.vector_store %arg6[%c0_14, %c0_15], %29 {strides = array<i32>} : memref<2x16xf32, #tpu.memory_space<vmem>>, vector<2x16xf32>,
    return
  }
  func.func @transform_0(%arg0: i32) -> (i32, i32) {
    %c0_i32 = arith.constant 0 : i32
    %c0_i32_0 = arith.constant 0 : i32
    return %arg0, %c0_i32 : i32, i32
  }
  func.func @transform_1(%arg0: i32) -> (i32, i32) {
    %c0_i32 = arith.constant 0 : i32
    %c0_i32_0 = arith.constant 0 : i32
    %c0_i32_1 = arith.constant 0 : i32
    return %c0_i32, %c0_i32_0 : i32, i32
  }
  func.func @transform_2(%arg0: i32) -> (i32, i32) {
    %c0_i32 = arith.constant 0 : i32
    %c0_i32_0 = arith.constant 0 : i32
    %c0_i32_1 = arith.constant 0 : i32
    return %c0_i32, %c0_i32_0 : i32, i32
  }
  func.func @transform_3(%arg0: i32) -> (i32, i32) {
    %c0_i32 = arith.constant 0 : i32
    %c0_i32_0 = arith.constant 0 : i32
    %c0_i32_1 = arith.constant 0 : i32
    return %c0_i32, %c0_i32_0 : i32, i32
  }
  func.func @transform_4(%arg0: i32) -> (i32, i32) {
    %c0_i32 = arith.constant 0 : i32
    %c0_i32_0 = arith.constant 0 : i32
    %c0_i32_1 = arith.constant 0 : i32
    return %c0_i32, %c0_i32_0 : i32, i32
  }
  func.func @transform_5(%arg0: i32) -> (i32, i32) {
    %c0_i32 = arith.constant 0 : i32
    %c0_i32_0 = arith.constant 0 : i32
    return %arg0, %c0_i32 : i32, i32
  }
}

</mosaic_0001>

<llo_original>
// kernel: vit_forward.10
$region0: #{vit_forward.10}
  #allocation0 [shape = 'u32[]', space=smem, size = 0x4, offset = 0x4, fixed_abs, tag = 'smem constant byte address 0x4 - core index']
  #allocation1 [shape = 'u32[144,128]{1,0:T(1,128)}', space=vmem, size = 0x12000, scoped, tag = 'internal scratch']
  %s0 = inlined_call_operand.vmem [shape: bf16[32,768], index: 0, kind: input, shape index: {}]
  %s1 = inlined_call_operand.vmem [shape: bf16[768,256], index: 1, kind: input, shape index: {}]
  %s2 = inlined_call_operand.vmem [shape: f32[1,256], index: 2, kind: input, shape index: {}]
  %s3 = inlined_call_operand.vmem [shape: bf16[32,256], index: 3, kind: output, shape index: {}]
  %s4 = sld [smem:[#allocation0]]
  $region22: #{vit_forward.10} parent=0
    _
  %s6 = ssub.s32 1, %s4
  %s7 = scalar_select 0, %s6, %s4
  // Predicated region
  $region2: #{vit_forward.10} parent=0 // pred_check
    _
  $region3: #{vit_forward.10} parent=0 // pred_check_branch
    %9 = sbr.rel (0) target = $region5
  $region4: #{vit_forward.10} parent=0 // pred_region
    _
  $region5: #{vit_forward.10} parent=0 // pred_fallthru
    _
  // Predicated region
  $region6: #{vit_forward.10} parent=0 // pred_check
    _
  $region7: #{vit_forward.10} parent=0 // pred_check_branch
    %11 = sbr.rel (0) target = $region9
  $region8: #{vit_forward.10} parent=0 // pred_region
    _
  $region9: #{vit_forward.10} parent=0 // pred_fallthru
    _
  // Predicated region
  $region10: #{vit_forward.10} parent=0 // pred_check
    _
  $region11: #{vit_forward.10} parent=0 // pred_check_branch
    %13 = sbr.rel (0) target = $region13
  $region12: #{vit_forward.10} parent=0 // pred_region
    _
  $region13: #{vit_forward.10} parent=0 // pred_fallthru
    _
  %v14 = vld [vmem:[%s0] sm:$0xff]
  %v15 = vld [vmem:[%s0 + $0x8] sm:$0xff]
  %v16 = vld [vmem:[%s0 + $0x10] sm:$0xff]
  %v17 = vld [vmem:[%s0 + $0x18] sm:$0xff]
  %v18 = vld [vmem:[%s0 + $0x20] sm:$0xff]
  %v19 = vld [vmem:[%s0 + $0x28] sm:$0xff]
  %v20 = vld [vmem:[%s0 + $0x30] sm:$0xff]
  %v21 = vld [vmem:[%s0 + $0x38] sm:$0xff]
  %v22 = vld [vmem:[%s0 + $0x40] sm:$0xff]
  %v23 = vld [vmem:[%s0 + $0x48] sm:$0xff]
  %v24 = vld [vmem:[%s0 + $0x50] sm:$0xff]
  %v25 = vld [vmem:[%s0 + $0x58] sm:$0xff]
  %v26 = vld [vmem:[%s1] sm:$0xff]
  %v27 = vld [vmem:[%s1 + $0x8] sm:$0xff]
  %v28 = vld [vmem:[%s1 + $0x10] sm:$0xff]
  %v29 = vld [vmem:[%s1 + $0x18] sm:$0xff]
  %v30 = vld [vmem:[%s1 + $0x20] sm:$0xff]
  %v31 = vld [vmem:[%s1 + $0x28] sm:$0xff]
  %v32 = vld [vmem:[%s1 + $0x30] sm:$0xff]
  %v33 = vld [vmem:[%s1 + $0x38] sm:$0xff]
  %v34 = vld [vmem:[%s1 + $0x40] sm:$0xff]
  %v35 = vld [vmem:[%s1 + $0x48] sm:$0xff]
  %v36 = vld [vmem:[%s1 + $0x50] sm:$0xff]
  %v37 = vld [vmem:[%s1 + $0x58] sm:$0xff]
  %v38 = vld [vmem:[%s1 + $0x60] sm:$0xff]
  %v39 = vld [vmem:[%s1 + $0x68] sm:$0xff]
  %v40 = vld [vmem:[%s1 + $0x70] sm:$0xff]
  %v41 = vld [vmem:[%s1 + $0x78] sm:$0xff]
  %v42 = vld [vmem:[%s1 + $0x80] sm:$0xff]
  %v43 = vld [vmem:[%s1 + $0x88] sm:$0xff]
  %v44 = vld [vmem:[%s1 + $0x90] sm:$0xff]
  %v45 = vld [vmem:[%s1 + $0x98] sm:$0xff]
  %v46 = vld [vmem:[%s1 + $0xa0] sm:$0xff]
  %v47 = vld [vmem:[%s1 + $0xa8] sm:$0xff]
  %v48 = vld [vmem:[%s1 + $0xb0] sm:$0xff]
  %v49 = vld [vmem:[%s1 + $0xb8] sm:$0xff]
  %v50 = vld [vmem:[%s1 + $0xc0] sm:$0xff]
  %v51 = vld [vmem:[%s1 + $0xc8] sm:$0xff]
  %v52 = vld [vmem:[%s1 + $0xd0] sm:$0xff]
  %v53 = vld [vmem:[%s1 + $0xd8] sm:$0xff]
  %v54 = vld [vmem:[%s1 + $0xe0] sm:$0xff]
  %v55 = vld [vmem:[%s1 + $0xe8] sm:$0xff]
  %v56 = vld [vmem:[%s1 + $0xf0] sm:$0xff]
  %v57 = vld [vmem:[%s1 + $0xf8] sm:$0xff]
  %v58 = vld [vmem:[%s1 + $0x100] sm:$0xff]
  %v59 = vld [vmem:[%s1 + $0x108] sm:$0xff]
  %v60 = vld [vmem:[%s1 + $0x110] sm:$0xff]
  %v61 = vld [vmem:[%s1 + $0x118] sm:$0xff]
  %v62 = vld [vmem:[%s1 + $0x120] sm:$0xff]
  %v63 = vld [vmem:[%s1 + $0x128] sm:$0xff]
  %v64 = vld [vmem:[%s1 + $0x130] sm:$0xff]
  %v65 = vld [vmem:[%s1 + $0x138] sm:$0xff]
  %v66 = vld [vmem:[%s1 + $0x140] sm:$0xff]
  %v67 = vld [vmem:[%s1 + $0x148] sm:$0xff]
  %v68 = vld [vmem:[%s1 + $0x150] sm:$0xff]
  %v69 = vld [vmem:[%s1 + $0x158] sm:$0xff]
  %v70 = vld [vmem:[%s1 + $0x160] sm:$0xff]
  %v71 = vld [vmem:[%s1 + $0x168] sm:$0xff]
  %v72 = vld [vmem:[%s1 + $0x170] sm:$0xff]
  %v73 = vld [vmem:[%s1 + $0x178] sm:$0xff]
  %v74 = vld [vmem:[%s1 + $0x180] sm:$0xff]
  %v75 = vld [vmem:[%s1 + $0x188] sm:$0xff]
  %v76 = vld [vmem:[%s1 + $0x190] sm:$0xff]
  %v77 = vld [vmem:[%s1 + $0x198] sm:$0xff]
  %v78 = vld [vmem:[%s1 + $0x1a0] sm:$0xff]
  %v79 = vld [vmem:[%s1 + $0x1a8] sm:$0xff]
  %v80 = vld [vmem:[%s1 + $0x1b0] sm:$0xff]
  %v81 = vld [vmem:[%s1 + $0x1b8] sm:$0xff]
  %v82 = vld [vmem:[%s1 + $0x1c0] sm:$0xff]
  %v83 = vld [vmem:[%s1 + $0x1c8] sm:$0xff]
  %v84 = vld [vmem:[%s1 + $0x1d0] sm:$0xff]
  %v85 = vld [vmem:[%s1 + $0x1d8] sm:$0xff]
  %v86 = vld [vmem:[%s1 + $0x1e0] sm:$0xff]
  %v87 = vld [vmem:[%s1 + $0x1e8] sm:$0xff]
  %v88 = vld [vmem:[%s1 + $0x1f0] sm:$0xff]
  %v89 = vld [vmem:[%s1 + $0x1f8] sm:$0xff]
  %v90 = vld [vmem:[%s1 + $0x200] sm:$0xff]
  %v91 = vld [vmem:[%s1 + $0x208] sm:$0xff]
  %v92 = vld [vmem:[%s1 + $0x210] sm:$0xff]
  %v93 = vld [vmem:[%s1 + $0x218] sm:$0xff]
  %v94 = vld [vmem:[%s1 + $0x220] sm:$0xff]
  %v95 = vld [vmem:[%s1 + $0x228] sm:$0xff]
  %v96 = vld [vmem:[%s1 + $0x230] sm:$0xff]
  %v97 = vld [vmem:[%s1 + $0x238] sm:$0xff]
  %v98 = vld [vmem:[%s1 + $0x240] sm:$0xff]
  %v99 = vld [vmem:[%s1 + $0x248] sm:$0xff]
  %v100 = vld [vmem:[%s1 + $0x250] sm:$0xff]
  %v101 = vld [vmem:[%s1 + $0x258] sm:$0xff]
  %v102 = vld [vmem:[%s1 + $0x260] sm:$0xff]
  %v103 = vld [vmem:[%s1 + $0x268] sm:$0xff]
  %v104 = vld [vmem:[%s1 + $0x270] sm:$0xff]
  %v105 = vld [vmem:[%s1 + $0x278] sm:$0xff]
  %v106 = vld [vmem:[%s1 + $0x280] sm:$0xff]
  %v107 = vld [vmem:[%s1 + $0x288] sm:$0xff]
  %v108 = vld [vmem:[%s1 + $0x290] sm:$0xff]
  %v109 = vld [vmem:[%s1 + $0x298] sm:$0xff]
  %v110 = vld [vmem:[%s1 + $0x2a0] sm:$0xff]
  %v111 = vld [vmem:[%s1 + $0x2a8] sm:$0xff]
  %v112 = vld [vmem:[%s1 + $0x2b0] sm:$0xff]
  %v113 = vld [vmem:[%s1 + $0x2b8] sm:$0xff]
  %v114 = vld [vmem:[%s1 + $0x2c0] sm:$0xff]
  %v115 = vld [vmem:[%s1 + $0x2c8] sm:$0xff]
  %v116 = vld [vmem:[%s1 + $0x2d0] sm:$0xff]
  %v117 = vld [vmem:[%s1 + $0x2d8] sm:$0xff]
  %v118 = vld [vmem:[%s1 + $0x2e0] sm:$0xff]
  %v119 = vld [vmem:[%s1 + $0x2e8] sm:$0xff]
  %v120 = vld [vmem:[%s1 + $0x2f0] sm:$0xff]
  %v121 = vld [vmem:[%s1 + $0x2f8] sm:$0xff]
  %v122 = vld [vmem:[%s2] sm:$0x3]
  %v124 = vlaneseq
  %v125 = vshrl.u32 %v124, 7
  %v126 = vsub.s32 0, %v125
  %v127 = vrot.slane %v122, %v126
  %v128 = vlaneseq
  %v129 = vshrl.u32 %v128, 7
  %v130 = vsub.s32 1, %v129
  %v131 = vrot.slane %v122, %v130
  %v146 = vunpack.c.l.b16 %v14
  %v147 = vunpack.c.h.b16 %v14
  %v148 = vunpack.c.l.b16 %v15
  %v149 = vunpack.c.h.b16 %v15
  %v150 = vunpack.c.l.b16 %v16
  %v151 = vunpack.c.h.b16 %v16
  %v152 = vunpack.c.l.b16 %v17
  %v153 = vunpack.c.h.b16 %v17
  %v154 = vunpack.c.l.b16 %v18
  %v155 = vunpack.c.h.b16 %v18
  %v156 = vunpack.c.l.b16 %v19
  %v157 = vunpack.c.h.b16 %v19
  %v158 = vunpack.c.l.b16 %v20
  %v159 = vunpack.c.h.b16 %v20
  %v160 = vunpack.c.l.b16 %v21
  %v161 = vunpack.c.h.b16 %v21
  %v162 = vunpack.c.l.b16 %v22
  %v163 = vunpack.c.h.b16 %v22
  %v164 = vunpack.c.l.b16 %v23
  %v165 = vunpack.c.h.b16 %v23
  %v166 = vunpack.c.l.b16 %v24
  %v167 = vunpack.c.h.b16 %v24
  %v168 = vunpack.c.l.b16 %v25
  %v169 = vunpack.c.h.b16 %v25
  %v170 = vpack.c.b16 %v152, %v146
  %v171 = vpack.c.b16 %v153, %v147
  %v172 = vpack.c.b16 %v154, %v148
  %v173 = vpack.c.b16 %v155, %v149
  %v174 = vpack.c.b16 %v156, %v150
  %v175 = vpack.c.b16 %v157, %v151
  %v176 = vpack.c.b16 %v164, %v158
  %v177 = vpack.c.b16 %v165, %v159
  %v178 = vpack.c.b16 %v166, %v160
  %v179 = vpack.c.b16 %v167, %v161
  %v180 = vpack.c.b16 %v168, %v162
  %v181 = vpack.c.b16 %v169, %v163
  %v290 = vunpack.c.l.b16 %v26
  %v291 = vunpack.c.h.b16 %v26
  %v292 = vunpack.c.l.b16 %v27
  %v293 = vunpack.c.h.b16 %v27
  %v294 = vunpack.c.l.b16 %v28
  %v295 = vunpack.c.h.b16 %v28
  %v296 = vunpack.c.l.b16 %v29
  %v297 = vunpack.c.h.b16 %v29
  %v298 = vunpack.c.l.b16 %v30
  %v299 = vunpack.c.h.b16 %v30
  %v300 = vunpack.c.l.b16 %v31
  %v301 = vunpack.c.h.b16 %v31
  %v302 = vunpack.c.l.b16 %v32
  %v303 = vunpack.c.h.b16 %v32
  %v304 = vunpack.c.l.b16 %v33
  %v305 = vunpack.c.h.b16 %v33
  %v306 = vunpack.c.l.b16 %v34
  %v307 = vunpack.c.h.b16 %v34
  %v308 = vunpack.c.l.b16 %v35
  %v309 = vunpack.c.h.b16 %v35
  %v310 = vunpack.c.l.b16 %v36
  %v311 = vunpack.c.h.b16 %v36
  %v312 = vunpack.c.l.b16 %v37
  %v313 = vunpack.c.h.b16 %v37
  %v314 = vunpack.c.l.b16 %v38
  %v315 = vunpack.c.h.b16 %v38
  %v316 = vunpack.c.l.b16 %v39
  %v317 = vunpack.c.h.b16 %v39
  %v318 = vunpack.c.l.b16 %v40
  %v319 = vunpack.c.h.b16 %v40
  %v320 = vunpack.c.l.b16 %v41
  %v321 = vunpack.c.h.b16 %v41
  %v322 = vunpack.c.l.b16 %v42
  %v323 = vunpack.c.h.b16 %v42
  %v324 = vunpack.c.l.b16 %v43
  %v325 = vunpack.c.h.b16 %v43
  %v326 = vunpack.c.l.b16 %v44
  %v327 = vunpack.c.h.b16 %v44
  %v328 = vunpack.c.l.b16 %v45
  %v329 = vunpack.c.h.b16 %v45
  %v330 = vunpack.c.l.b16 %v46
  %v331 = vunpack.c.h.b16 %v46
  %v332 = vunpack.c.l.b16 %v47
  %v333 = vunpack.c.h.b16 %v47
  %v334 = vunpack.c.l.b16 %v48
  %v335 = vunpack.c.h.b16 %v48
  %v336 = vunpack.c.l.b16 %v49
  %v337 = vunpack.c.h.b16 %v49
  %v338 = vunpack.c.l.b16 %v50
  %v339 = vunpack.c.h.b16 %v50
  %v340 = vunpack.c.l.b16 %v51
  %v341 = vunpack.c.h.b16 %v51
  %v342 = vunpack.c.l.b16 %v52
  %v343 = vunpack.c.h.b16 %v52
  %v344 = vunpack.c.l.b16 %v53
  %v345 = vunpack.c.h.b16 %v53
  %v346 = vunpack.c.l.b16 %v54
  %v347 = vunpack.c.h.b16 %v54
  %v348 = vunpack.c.l.b16 %v55
  %v349 = vunpack.c.h.b16 %v55
  %v350 = vunpack.c.l.b16 %v56
  %v351 = vunpack.c.h.b16 %v56
  %v352 = vunpack.c.l.b16 %v57
  %v353 = vunpack.c.h.b16 %v57
  %v354 = vunpack.c.l.b16 %v58
  %v355 = vunpack.c.h.b16 %v58
  %v356 = vunpack.c.l.b16 %v59
  %v357 = vunpack.c.h.b16 %v59
  %v358 = vunpack.c.l.b16 %v60
  %v359 = vunpack.c.h.b16 %v60
  %v360 = vunpack.c.l.b16 %v61
  %v361 = vunpack.c.h.b16 %v61
  %v362 = vunpack.c.l.b16 %v62
  %v363 = vunpack.c.h.b16 %v62
  %v364 = vunpack.c.l.b16 %v63
  %v365 = vunpack.c.h.b16 %v63
  %v366 = vunpack.c.l.b16 %v64
  %v367 = vunpack.c.h.b16 %v64
  %v368 = vunpack.c.l.b16 %v65
  %v369 = vunpack.c.h.b16 %v65
  %v370 = vunpack.c.l.b16 %v66
  %v371 = vunpack.c.h.b16 %v66
  %v372 = vunpack.c.l.b16 %v67
  %v373 = vunpack.c.h.b16 %v67
  %v374 = vunpack.c.l.b16 %v68
  %v375 = vunpack.c.h.b16 %v68
  %v376 = vunpack.c.l.b16 %v69
  %v377 = vunpack.c.h.b16 %v69
  %v378 = vunpack.c.l.b16 %v70
  %v379 = vunpack.c.h.b16 %v70
  %v380 = vunpack.c.l.b16 %v71
  %v381 = vunpack.c.h.b16 %v71
  %v382 = vunpack.c.l.b16 %v72
  %v383 = vunpack.c.h.b16 %v72
  %v384 = vunpack.c.l.b16 %v73
  %v385 = vunpack.c.h.b16 %v73
  %v386 = vunpack.c.l.b16 %v74
  %v387 = vunpack.c.h.b16 %v74
  %v388 = vunpack.c.l.b16 %v75
  %v389 = vunpack.c.h.b16 %v75
  %v390 = vunpack.c.l.b16 %v76
  %v391 = vunpack.c.h.b16 %v76
  %v392 = vunpack.c.l.b16 %v77
  %v393 = vunpack.c.h.b16 %v77
  %v394 = vunpack.c.l.b16 %v78
  %v395 = vunpack.c.h.b16 %v78
  %v396 = vunpack.c.l.b16 %v79
  %v397 = vunpack.c.h.b16 %v79
  %v398 = vunpack.c.l.b16 %v80
  %v399 = vunpack.c.h.b16 %v80
  %v400 = vunpack.c.l.b16 %v81
  %v401 = vunpack.c.h.b16 %v81
  %v402 = vunpack.c.l.b16 %v82
  %v403 = vunpack.c.h.b16 %v82
  %v404 = vunpack.c.l.b16 %v83
  %v405 = vunpack.c.h.b16 %v83
  %v406 = vunpack.c.l.b16 %v84
  %v407 = vunpack.c.h.b16 %v84
  %v408 = vunpack.c.l.b16 %v85
  %v409 = vunpack.c.h.b16 %v85
  %v410 = vunpack.c.l.b16 %v86
  %v411 = vunpack.c.h.b16 %v86
  %v412 = vunpack.c.l.b16 %v87
  %v413 = vunpack.c.h.b16 %v87
  %v414 = vunpack.c.l.b16 %v88
  %v415 = vunpack.c.h.b16 %v88
  %v416 = vunpack.c.l.b16 %v89
  %v417 = vunpack.c.h.b16 %v89
  %v418 = vunpack.c.l.b16 %v90
  %v419 = vunpack.c.h.b16 %v90
  %v420 = vunpack.c.l.b16 %v91
  %v421 = vunpack.c.h.b16 %v91
  %v422 = vunpack.c.l.b16 %v92
  %v423 = vunpack.c.h.b16 %v92
  %v424 = vunpack.c.l.b16 %v93
  %v425 = vunpack.c.h.b16 %v93
  %v426 = vunpack.c.l.b16 %v94
  %v427 = vunpack.c.h.b16 %v94
  %v428 = vunpack.c.l.b16 %v95
  %v429 = vunpack.c.h.b16 %v95
  %v430 = vunpack.c.l.b16 %v96
  %v431 = vunpack.c.h.b16 %v96
  %v432 = vunpack.c.l.b16 %v97
  %v433 = vunpack.c.h.b16 %v97
  %v434 = vunpack.c.l.b16 %v98
  %v435 = vunpack.c.h.b16 %v98
  %v436 = vunpack.c.l.b16 %v99
  %v437 = vunpack.c.h.b16 %v99
  %v438 = vunpack.c.l.b16 %v100
  %v439 = vunpack.c.h.b16 %v100
  %v440 = vunpack.c.l.b16 %v101
  %v441 = vunpack.c.h.b16 %v101
  %v442 = vunpack.c.l.b16 %v102
  %v443 = vunpack.c.h.b16 %v102
  %v444 = vunpack.c.l.b16 %v103
  %v445 = vunpack.c.h.b16 %v103
  %v446 = vunpack.c.l.b16 %v104
  %v447 = vunpack.c.h.b16 %v104
  %v448 = vunpack.c.l.b16 %v105
  %v449 = vunpack.c.h.b16 %v105
  %v450 = vunpack.c.l.b16 %v106
  %v451 = vunpack.c.h.b16 %v106
  %v452 = vunpack.c.l.b16 %v107
  %v453 = vunpack.c.h.b16 %v107
  %v454 = vunpack.c.l.b16 %v108
  %v455 = vunpack.c.h.b16 %v108
  %v456 = vunpack.c.l.b16 %v109
  %v457 = vunpack.c.h.b16 %v109
  %v458 = vunpack.c.l.b16 %v110
  %v459 = vunpack.c.h.b16 %v110
  %v460 = vunpack.c.l.b16 %v111
  %v461 = vunpack.c.h.b16 %v111
  %v462 = vunpack.c.l.b16 %v112
  %v463 = vunpack.c.h.b16 %v112
  %v464 = vunpack.c.l.b16 %v113
  %v465 = vunpack.c.h.b16 %v113
  %v466 = vunpack.c.l.b16 %v114
  %v467 = vunpack.c.h.b16 %v114
  %v468 = vunpack.c.l.b16 %v115
  %v469 = vunpack.c.h.b16 %v115
  %v470 = vunpack.c.l.b16 %v116
  %v471 = vunpack.c.h.b16 %v116
  %v472 = vunpack.c.l.b16 %v117
  %v473 = vunpack.c.h.b16 %v117
  %v474 = vunpack.c.l.b16 %v118
  %v475 = vunpack.c.h.b16 %v118
  %v476 = vunpack.c.l.b16 %v119
  %v477 = vunpack.c.h.b16 %v119
  %v478 = vunpack.c.l.b16 %v120
  %v479 = vunpack.c.h.b16 %v120
  %v480 = vunpack.c.l.b16 %v121
  %v481 = vunpack.c.h.b16 %v121
  %v482 = vpack.c.b16 %v292, %v290
  %v483 = vpack.c.b16 %v293, %v291
  %v484 = vpack.c.b16 %v296, %v294
  %v485 = vpack.c.b16 %v297, %v295
  %v486 = vpack.c.b16 %v300, %v298
  %v487 = vpack.c.b16 %v301, %v299
  %v488 = vpack.c.b16 %v304, %v302
  %v489 = vpack.c.b16 %v305, %v303
  %v490 = vpack.c.b16 %v308, %v306
  %v491 = vpack.c.b16 %v309, %v307
  %v492 = vpack.c.b16 %v312, %v310
  %v493 = vpack.c.b16 %v313, %v311
  %v494 = vpack.c.b16 %v316, %v314
  %v495 = vpack.c.b16 %v317, %v315
  %v496 = vpack.c.b16 %v320, %v318
  %v497 = vpack.c.b16 %v321, %v319
  %v498 = vpack.c.b16 %v324, %v322
  %v499 = vpack.c.b16 %v325, %v323
  %v500 = vpack.c.b16 %v328, %v326
  %v501 = vpack.c.b16 %v329, %v327
  %v502 = vpack.c.b16 %v332, %v330
  %v503 = vpack.c.b16 %v333, %v331
  %v504 = vpack.c.b16 %v336, %v334
  %v505 = vpack.c.b16 %v337, %v335
  %v506 = vpack.c.b16 %v340, %v338
  %v507 = vpack.c.b16 %v341, %v339
  %v508 = vpack.c.b16 %v344, %v342
  %v509 = vpack.c.b16 %v345, %v343
  %v510 = vpack.c.b16 %v348, %v346
  %v511 = vpack.c.b16 %v349, %v347
  %v512 = vpack.c.b16 %v352, %v350
  %v513 = vpack.c.b16 %v353, %v351
  %v514 = vpack.c.b16 %v356, %v354
  %v515 = vpack.c.b16 %v357, %v355
  %v516 = vpack.c.b16 %v360, %v358
  %v517 = vpack.c.b16 %v361, %v359
  %v518 = vpack.c.b16 %v364, %v362
  %v519 = vpack.c.b16 %v365, %v363
  %v520 = vpack.c.b16 %v368, %v366
  %v521 = vpack.c.b16 %v369, %v367
  %v522 = vpack.c.b16 %v372, %v370
  %v523 = vpack.c.b16 %v373, %v371
  %v524 = vpack.c.b16 %v376, %v374
  %v525 = vpack.c.b16 %v377, %v375
  %v526 = vpack.c.b16 %v380, %v378
  %v527 = vpack.c.b16 %v381, %v379
  %v528 = vpack.c.b16 %v384, %v382
  %v529 = vpack.c.b16 %v385, %v383
  %v530 = vpack.c.b16 %v388, %v386
  %v531 = vpack.c.b16 %v389, %v387
  %v532 = vpack.c.b16 %v392, %v390
  %v533 = vpack.c.b16 %v393, %v391
  %v534 = vpack.c.b16 %v396, %v394
  %v535 = vpack.c.b16 %v397, %v395
  %v536 = vpack.c.b16 %v400, %v398
  %v537 = vpack.c.b16 %v401, %v399
  %v538 = vpack.c.b16 %v404, %v402
  %v539 = vpack.c.b16 %v405, %v403
  %v540 = vpack.c.b16 %v408, %v406
  %v541 = vpack.c.b16 %v409, %v407
  %v542 = vpack.c.b16 %v412, %v410
  %v543 = vpack.c.b16 %v413, %v411
  %v544 = vpack.c.b16 %v416, %v414
  %v545 = vpack.c.b16 %v417, %v415
  %v546 = vpack.c.b16 %v420, %v418
  %v547 = vpack.c.b16 %v421, %v419
  %v548 = vpack.c.b16 %v424, %v422
  %v549 = vpack.c.b16 %v425, %v423
  %v550 = vpack.c.b16 %v428, %v426
  %v551 = vpack.c.b16 %v429, %v427
  %v552 = vpack.c.b16 %v432, %v430
  %v553 = vpack.c.b16 %v433, %v431
  %v554 = vpack.c.b16 %v436, %v434
  %v555 = vpack.c.b16 %v437, %v435
  %v556 = vpack.c.b16 %v440, %v438
  %v557 = vpack.c.b16 %v441, %v439
  %v558 = vpack.c.b16 %v444, %v442
  %v559 = vpack.c.b16 %v445, %v443
  %v560 = vpack.c.b16 %v448, %v446
  %v561 = vpack.c.b16 %v449, %v447
  %v562 = vpack.c.b16 %v452, %v450
  %v563 = vpack.c.b16 %v453, %v451
  %v564 = vpack.c.b16 %v456, %v454
  %v565 = vpack.c.b16 %v457, %v455
  %v566 = vpack.c.b16 %v460, %v458
  %v567 = vpack.c.b16 %v461, %v459
  %v568 = vpack.c.b16 %v464, %v462
  %v569 = vpack.c.b16 %v465, %v463
  %v570 = vpack.c.b16 %v468, %v466
  %v571 = vpack.c.b16 %v469, %v467
  %v572 = vpack.c.b16 %v472, %v470
  %v573 = vpack.c.b16 %v473, %v471
  %v574 = vpack.c.b16 %v476, %v474
  %v575 = vpack.c.b16 %v477, %v475
  %v576 = vpack.c.b16 %v480, %v478
  %v577 = vpack.c.b16 %v481, %v479
  %674 = vmatprep.subr.bf16.mxu0 %v497
  %675 = vmatpush1.bf16.msra.mxu0 %v496
  %676 = vmatprep.subr.bf16.mxu0 %v495
  %677 = vmatpush1.bf16.msra.mxu0 %v494
  %678 = vmatprep.subr.bf16.mxu0 %v493
  %679 = vmatpush1.bf16.msra.mxu0 %v492
  %680 = vmatprep.subr.bf16.mxu0 %v491
  %681 = vmatpush1.bf16.msra.mxu0 %v490
  %682 = vmatprep.subr.bf16.mxu0 %v489
  %683 = vmatpush1.bf16.msra.mxu0 %v488
  %684 = vmatprep.subr.bf16.mxu0 %v487
  %685 = vmatpush1.bf16.msra.mxu0 %v486
  %686 = vmatprep.subr.bf16.mxu0 %v485
  %687 = vmatpush1.bf16.msra.mxu0 %v484
  %688 = vmatprep.subr.bf16.mxu0 %v483
  %689 = vmatpush1.bf16.msra.mxu0 %v482
  %690 = vmatprep.subr.bf16.mxu0 %v513
  %691 = vmatpush2.bf16.msra.mxu0 %v512
  %692 = vmatprep.subr.bf16.mxu0 %v511
  %693 = vmatpush2.bf16.msra.mxu0 %v510
  %694 = vmatprep.subr.bf16.mxu0 %v509
  %695 = vmatpush2.bf16.msra.mxu0 %v508
  %696 = vmatprep.subr.bf16.mxu0 %v507
  %697 = vmatpush2.bf16.msra.mxu0 %v506
  %698 = vmatprep.subr.bf16.mxu0 %v505
  %699 = vmatpush2.bf16.msra.mxu0 %v504
  %700 = vmatprep.subr.bf16.mxu0 %v503
  %701 = vmatpush2.bf16.msra.mxu0 %v502
  %702 = vmatprep.subr.bf16.mxu0 %v501
  %703 = vmatpush2.bf16.msra.mxu0 %v500
  %704 = vmatprep.subr.bf16.mxu0 %v499
  %705 = vmatpush2.bf16.msra.mxu0 %v498
  %706 = vmatprep.mubr.bf16.mxu0 %v171
  %707 = vmatmul.mubr.bf16.gmra.mxu0 %v170
  %v708 = vpop.f32.mrf.mxu0
  %v709 = vadd.f32 %v127, %v708
  %v710 = vpop.f32.mrf.mxu0
  %v711 = vadd.f32 %v131, %v710
  %v712 = vpop.f32.mrf.mxu0
  %v713 = vadd.f32 %v127, %v712
  %v714 = vpop.f32.mrf.mxu0
  %v715 = vadd.f32 %v131, %v714
  %716 = vmatprep.mubr.bf16.mxu0 %v177
  %717 = vmatmul.mubr.bf16.gmra.mxu0 %v176
  %v718 = vpop.f32.mrf.mxu0
  %v719 = vadd.f32 %v127, %v718
  %v720 = vpop.f32.mrf.mxu0
  %v721 = vadd.f32 %v131, %v720
  %v722 = vpop.f32.mrf.mxu0
  %v723 = vadd.f32 %v127, %v722
  %v724 = vpop.f32.mrf.mxu0
  %v725 = vadd.f32 %v131, %v724
  %726 = vdwg.mxu0
  %727 = vmatprep.subr.bf16.mxu0 %v529
  %728 = vmatpush1.bf16.msra.mxu0 %v528
  %729 = vmatprep.subr.bf16.mxu0 %v527
  %730 = vmatpush1.bf16.msra.mxu0 %v526
  %731 = vmatprep.subr.bf16.mxu0 %v525
  %732 = vmatpush1.bf16.msra.mxu0 %v524
  %733 = vmatprep.subr.bf16.mxu0 %v523
  %734 = vmatpush1.bf16.msra.mxu0 %v522
  %735 = vmatprep.subr.bf16.mxu0 %v521
  %736 = vmatpush1.bf16.msra.mxu0 %v520
  %737 = vmatprep.subr.bf16.mxu0 %v519
  %738 = vmatpush1.bf16.msra.mxu0 %v518
  %739 = vmatprep.subr.bf16.mxu0 %v517
  %740 = vmatpush1.bf16.msra.mxu0 %v516
  %741 = vmatprep.subr.bf16.mxu0 %v515
  %742 = vmatpush1.bf16.msra.mxu0 %v514
  %743 = vmatprep.subr.bf16.mxu0 %v545
  %744 = vmatpush2.bf16.msra.mxu0 %v544
  %745 = vmatprep.subr.bf16.mxu0 %v543
  %746 = vmatpush2.bf16.msra.mxu0 %v542
  %747 = vmatprep.subr.bf16.mxu0 %v541
  %748 = vmatpush2.bf16.msra.mxu0 %v540
  %749 = vmatprep.subr.bf16.mxu0 %v539
  %750 = vmatpush2.bf16.msra.mxu0 %v538
  %751 = vmatprep.subr.bf16.mxu0 %v537
  %752 = vmatpush2.bf16.msra.mxu0 %v536
  %753 = vmatprep.subr.bf16.mxu0 %v535
  %754 = vmatpush2.bf16.msra.mxu0 %v534
  %755 = vmatprep.subr.bf16.mxu0 %v533
  %756 = vmatpush2.bf16.msra.mxu0 %v532
  %757 = vmatprep.subr.bf16.mxu0 %v531
  %758 = vmatpush2.bf16.msra.mxu0 %v530
  %759 = vmatprep.mubr.bf16.mxu0 %v173
  %760 = vmatmul.mubr.bf16.gmra.mxu0 %v172
  %v761 = vpop.f32.mrf.mxu0
  %v762 = vadd.f32 %v709, %v761
  %v763 = vpop.f32.mrf.mxu0
  %v764 = vadd.f32 %v711, %v763
  %v765 = vpop.f32.mrf.mxu0
  %v766 = vadd.f32 %v713, %v765
  %v767 = vpop.f32.mrf.mxu0
  %v768 = vadd.f32 %v715, %v767
  %769 = vmatprep.mubr.bf16.mxu0 %v179
  %770 = vmatmul.mubr.bf16.gmra.mxu0 %v178
  %v771 = vpop.f32.mrf.mxu0
  %v772 = vadd.f32 %v719, %v771
  %v773 = vpop.f32.mrf.mxu0
  %v774 = vadd.f32 %v721, %v773
  %v775 = vpop.f32.mrf.mxu0
  %v776 = vadd.f32 %v723, %v775
  %v777 = vpop.f32.mrf.mxu0
  %v778 = vadd.f32 %v725, %v777
  %779 = vdwg.mxu0
  %780 = vmatprep.subr.bf16.mxu0 %v561
  %781 = vmatpush1.bf16.msra.mxu0 %v560
  %782 = vmatprep.subr.bf16.mxu0 %v559
  %783 = vmatpush1.bf16.msra.mxu0 %v558
  %784 = vmatprep.subr.bf16.mxu0 %v557
  %785 = vmatpush1.bf16.msra.mxu0 %v556
  %786 = vmatprep.subr.bf16.mxu0 %v555
  %787 = vmatpush1.bf16.msra.mxu0 %v554
  %788 = vmatprep.subr.bf16.mxu0 %v553
  %789 = vmatpush1.bf16.msra.mxu0 %v552
  %790 = vmatprep.subr.bf16.mxu0 %v551
  %791 = vmatpush1.bf16.msra.mxu0 %v550
  %792 = vmatprep.subr.bf16.mxu0 %v549
  %793 = vmatpush1.bf16.msra.mxu0 %v548
  %794 = vmatprep.subr.bf16.mxu0 %v547
  %795 = vmatpush1.bf16.msra.mxu0 %v546
  %796 = vmatprep.subr.bf16.mxu0 %v577
  %797 = vmatpush2.bf16.msra.mxu0 %v576
  %798 = vmatprep.subr.bf16.mxu0 %v575
  %799 = vmatpush2.bf16.msra.mxu0 %v574
  %800 = vmatprep.subr.bf16.mxu0 %v573
  %801 = vmatpush2.bf16.msra.mxu0 %v572
  %802 = vmatprep.subr.bf16.mxu0 %v571
  %803 = vmatpush2.bf16.msra.mxu0 %v570
  %804 = vmatprep.subr.bf16.mxu0 %v569
  %805 = vmatpush2.bf16.msra.mxu0 %v568
  %806 = vmatprep.subr.bf16.mxu0 %v567
  %807 = vmatpush2.bf16.msra.mxu0 %v566
  %808 = vmatprep.subr.bf16.mxu0 %v565
  %809 = vmatpush2.bf16.msra.mxu0 %v564
  %810 = vmatprep.subr.bf16.mxu0 %v563
  %811 = vmatpush2.bf16.msra.mxu0 %v562
  %812 = vmatprep.mubr.bf16.mxu0 %v175
  %813 = vmatmul.mubr.bf16.gmra.mxu0 %v174
  %v814 = vpop.f32.mrf.mxu0
  %v815 = vadd.f32 %v762, %v814
  %v816 = vpop.f32.mrf.mxu0
  %v817 = vadd.f32 %v764, %v816
  %v818 = vpop.f32.mrf.mxu0
  %v819 = vadd.f32 %v766, %v818
  %v820 = vpop.f32.mrf.mxu0
  %v821 = vadd.f32 %v768, %v820
  %822 = vmatprep.mubr.bf16.mxu0 %v181
  %823 = vmatmul.mubr.bf16.gmra.mxu0 %v180
  %v824 = vpop.f32.mrf.mxu0
  %v825 = vadd.f32 %v772, %v824
  %v826 = vpop.f32.mrf.mxu0
  %v827 = vadd.f32 %v774, %v826
  %v828 = vpop.f32.mrf.mxu0
  %v829 = vadd.f32 %v776, %v828
  %v830 = vpop.f32.mrf.mxu0
  %v831 = vadd.f32 %v778, %v830
  %832 = vdwg.mxu0
  %v833 = vpack.c.bf16 %v819, %v815
  %v834 = vpack.c.bf16 %v821, %v817
  %v835 = vpack.c.bf16 %v829, %v825
  %v836 = vpack.c.bf16 %v831, %v827
  %v841 = vunpack.c.l.b16 %v833
  %v842 = vunpack.c.l.b16 %v834
  %v843 = vunpack.c.h.b16 %v833
  %v844 = vunpack.c.h.b16 %v834
  %v845 = vunpack.c.l.b16 %v835
  %v846 = vunpack.c.l.b16 %v836
  %v847 = vunpack.c.h.b16 %v835
  %v848 = vunpack.c.h.b16 %v836
  %v849 = vpack.c.b16 %v842, %v841
  %v850 = vpack.c.b16 %v844, %v843
  %v851 = vpack.c.b16 %v846, %v845
  %v852 = vpack.c.b16 %v848, %v847
  %857 = vst [vmem:[%s3] sm:$0xff] %v849
  %858 = vst [vmem:[%s3 + $0x8] sm:$0xff] %v850
  %859 = vst [vmem:[%s3 + $0x10] sm:$0xff] %v851
  %860 = vst [vmem:[%s3 + $0x18] sm:$0xff] %v852
  // Predicated region
  $region14: #{vit_forward.10} parent=0 // pred_check
    _
  $region15: #{vit_forward.10} parent=0 // pred_check_branch
    %862 = sbr.rel (0) target = $region17
  $region16: #{vit_forward.10} parent=0 // pred_region
    _
  $region17: #{vit_forward.10} parent=0 // pred_fallthru
    _
  // Predicated region
  $region18: #{vit_forward.10} parent=0 // pred_check
    _
  $region19: #{vit_forward.10} parent=0 // pred_check_branch
    %864 = sbr.rel (0) target = $region21
  $region20: #{vit_forward.10} parent=0 // pred_region
    _
  $region21: #{vit_forward.10} parent=0 // pred_fallthru
    _

// kernel: vit_forward.13
$region0: #{vit_forward.13}
  #allocation0 [shape = 'u32[]', space=smem, size = 0x4, offset = 0x4, fixed_abs, tag = 'smem constant byte address 0x4 - core index']
  #allocation1 [shape = 'u32[144,128]{1,0:T(1,128)}', space=vmem, size = 0x12000, scoped, tag = 'internal scratch']
  %s0 = inlined_call_operand.vmem [shape: bf16[64,256], index: 0, kind: input, shape index: {}]
  %s1 = inlined_call_operand.vmem [shape: bf16[256,256], index: 1, kind: input, shape index: {}]
  %s2 = inlined_call_operand.vmem [shape: f32[1,256], index: 2, kind: input, shape index: {}]
  %s3 = inlined_call_operand.vmem [shape: bf16[64,256], index: 3, kind: input, shape index: {}]
  %s4 = inlined_call_operand.vmem [shape: bf16[64,256], index: 4, kind: output, shape index: {}]
  %s5 = sld [smem:[#allocation0]]
  $region26: #{vit_forward.13} parent=0
    _
  %s7 = ssub.s32 1, %s5
  %s8 = scalar_select 0, %s7, %s5
  // Predicated region
  $region2: #{vit_forward.13} parent=0 // pred_check
    _
  $region3: #{vit_forward.13} parent=0 // pred_check_branch
    %10 = sbr.rel (0) target = $region5
  $region4: #{vit_forward.13} parent=0 // pred_region
    _
  $region5: #{vit_forward.13} parent=0 // pred_fallthru
    _
  // Predicated region
  $region6: #{vit_forward.13} parent=0 // pred_check
    _
  $region7: #{vit_forward.13} parent=0 // pred_check_branch
    %12 = sbr.rel (0) target = $region9
  $region8: #{vit_forward.13} parent=0 // pred_region
    _
  $region9: #{vit_forward.13} parent=0 // pred_fallthru
    _
  // Predicated region
  $region10: #{vit_forward.13} parent=0 // pred_check
    _
  $region11: #{vit_forward.13} parent=0 // pred_check_branch
    %14 = sbr.rel (0) target = $region13
  $region12: #{vit_forward.13} parent=0 // pred_region
    _
  $region13: #{vit_forward.13} parent=0 // pred_fallthru
    _
  // Predicated region
  $region14: #{vit_forward.13} parent=0 // pred_check
    _
  $region15: #{vit_forward.13} parent=0 // pred_check_branch
    %16 = sbr.rel (0) target = $region17
  $region16: #{vit_forward.13} parent=0 // pred_region
    _
  $region17: #{vit_forward.13} parent=0 // pred_fallthru
    _
  %v17 = vld [vmem:[%s0] sm:$0xff]
  %v18 = vld [vmem:[%s0 + $0x8] sm:$0xff]
  %v19 = vld [vmem:[%s0 + $0x10] sm:$0xff]
  %v20 = vld [vmem:[%s0 + $0x18] sm:$0xff]
  %v21 = vld [vmem:[%s0 + $0x20] sm:$0xff]
  %v22 = vld [vmem:[%s0 + $0x28] sm:$0xff]
  %v23 = vld [vmem:[%s0 + $0x30] sm:$0xff]
  %v24 = vld [vmem:[%s0 + $0x38] sm:$0xff]
  %v25 = vld [vmem:[%s1] sm:$0xff]
  %v26 = vld [vmem:[%s1 + $0x8] sm:$0xff]
  %v27 = vld [vmem:[%s1 + $0x10] sm:$0xff]
  %v28 = vld [vmem:[%s1 + $0x18] sm:$0xff]
  %v29 = vld [vmem:[%s1 + $0x20] sm:$0xff]
  %v30 = vld [vmem:[%s1 + $0x28] sm:$0xff]
  %v31 = vld [vmem:[%s1 + $0x30] sm:$0xff]
  %v32 = vld [vmem:[%s1 + $0x38] sm:$0xff]
  %v33 = vld [vmem:[%s1 + $0x40] sm:$0xff]
  %v34 = vld [vmem:[%s1 + $0x48] sm:$0xff]
  %v35 = vld [vmem:[%s1 + $0x50] sm:$0xff]
  %v36 = vld [vmem:[%s1 + $0x58] sm:$0xff]
  %v37 = vld [vmem:[%s1 + $0x60] sm:$0xff]
  %v38 = vld [vmem:[%s1 + $0x68] sm:$0xff]
  %v39 = vld [vmem:[%s1 + $0x70] sm:$0xff]
  %v40 = vld [vmem:[%s1 + $0x78] sm:$0xff]
  %v41 = vld [vmem:[%s1 + $0x80] sm:$0xff]
  %v42 = vld [vmem:[%s1 + $0x88] sm:$0xff]
  %v43 = vld [vmem:[%s1 + $0x90] sm:$0xff]
  %v44 = vld [vmem:[%s1 + $0x98] sm:$0xff]
  %v45 = vld [vmem:[%s1 + $0xa0] sm:$0xff]
  %v46 = vld [vmem:[%s1 + $0xa8] sm:$0xff]
  %v47 = vld [vmem:[%s1 + $0xb0] sm:$0xff]
  %v48 = vld [vmem:[%s1 + $0xb8] sm:$0xff]
  %v49 = vld [vmem:[%s1 + $0xc0] sm:$0xff]
  %v50 = vld [vmem:[%s1 + $0xc8] sm:$0xff]
  %v51 = vld [vmem:[%s1 + $0xd0] sm:$0xff]
  %v52 = vld [vmem:[%s1 + $0xd8] sm:$0xff]
  %v53 = vld [vmem:[%s1 + $0xe0] sm:$0xff]
  %v54 = vld [vmem:[%s1 + $0xe8] sm:$0xff]
  %v55 = vld [vmem:[%s1 + $0xf0] sm:$0xff]
  %v56 = vld [vmem:[%s1 + $0xf8] sm:$0xff]
  %v57 = vld [vmem:[%s2] sm:$0x3]
  %v59 = vlaneseq
  %v60 = vshrl.u32 %v59, 7
  %v61 = vsub.s32 0, %v60
  %v62 = vrot.slane %v57, %v61
  %v63 = vlaneseq
  %v64 = vshrl.u32 %v63, 7
  %v65 = vsub.s32 1, %v64
  %v66 = vrot.slane %v57, %v65
  %v77 = vunpack.c.l.b16 %v17
  %v78 = vunpack.c.h.b16 %v17
  %v79 = vunpack.c.l.b16 %v18
  %v80 = vunpack.c.h.b16 %v18
  %v81 = vunpack.c.l.b16 %v19
  %v82 = vunpack.c.h.b16 %v19
  %v83 = vunpack.c.l.b16 %v20
  %v84 = vunpack.c.h.b16 %v20
  %v85 = vunpack.c.l.b16 %v21
  %v86 = vunpack.c.h.b16 %v21
  %v87 = vunpack.c.l.b16 %v22
  %v88 = vunpack.c.h.b16 %v22
  %v89 = vunpack.c.l.b16 %v23
  %v90 = vunpack.c.h.b16 %v23
  %v91 = vunpack.c.l.b16 %v24
  %v92 = vunpack.c.h.b16 %v24
  %v93 = vpack.c.b16 %v79, %v77
  %v94 = vpack.c.b16 %v80, %v78
  %v95 = vpack.c.b16 %v83, %v81
  %v96 = vpack.c.b16 %v84, %v82
  %v97 = vpack.c.b16 %v87, %v85
  %v98 = vpack.c.b16 %v88, %v86
  %v99 = vpack.c.b16 %v91, %v89
  %v100 = vpack.c.b16 %v92, %v90
  %v141 = vunpack.c.l.b16 %v25
  %v142 = vunpack.c.h.b16 %v25
  %v143 = vunpack.c.l.b16 %v26
  %v144 = vunpack.c.h.b16 %v26
  %v145 = vunpack.c.l.b16 %v27
  %v146 = vunpack.c.h.b16 %v27
  %v147 = vunpack.c.l.b16 %v28
  %v148 = vunpack.c.h.b16 %v28
  %v149 = vunpack.c.l.b16 %v29
  %v150 = vunpack.c.h.b16 %v29
  %v151 = vunpack.c.l.b16 %v30
  %v152 = vunpack.c.h.b16 %v30
  %v153 = vunpack.c.l.b16 %v31
  %v154 = vunpack.c.h.b16 %v31
  %v155 = vunpack.c.l.b16 %v32
  %v156 = vunpack.c.h.b16 %v32
  %v157 = vunpack.c.l.b16 %v33
  %v158 = vunpack.c.h.b16 %v33
  %v159 = vunpack.c.l.b16 %v34
  %v160 = vunpack.c.h.b16 %v34
  %v161 = vunpack.c.l.b16 %v35
  %v162 = vunpack.c.h.b16 %v35
  %v163 = vunpack.c.l.b16 %v36
  %v164 = vunpack.c.h.b16 %v36
  %v165 = vunpack.c.l.b16 %v37
  %v166 = vunpack.c.h.b16 %v37
  %v167 = vunpack.c.l.b16 %v38
  %v168 = vunpack.c.h.b16 %v38
  %v169 = vunpack.c.l.b16 %v39
  %v170 = vunpack.c.h.b16 %v39
  %v171 = vunpack.c.l.b16 %v40
  %v172 = vunpack.c.h.b16 %v40
  %v173 = vunpack.c.l.b16 %v41
  %v174 = vunpack.c.h.b16 %v41
  %v175 = vunpack.c.l.b16 %v42
  %v176 = vunpack.c.h.b16 %v42
  %v177 = vunpack.c.l.b16 %v43
  %v178 = vunpack.c.h.b16 %v43
  %v179 = vunpack.c.l.b16 %v44
  %v180 = vunpack.c.h.b16 %v44
  %v181 = vunpack.c.l.b16 %v45
  %v182 = vunpack.c.h.b16 %v45
  %v183 = vunpack.c.l.b16 %v46
  %v184 = vunpack.c.h.b16 %v46
  %v185 = vunpack.c.l.b16 %v47
  %v186 = vunpack.c.h.b16 %v47
  %v187 = vunpack.c.l.b16 %v48
  %v188 = vunpack.c.h.b16 %v48
  %v189 = vunpack.c.l.b16 %v49
  %v190 = vunpack.c.h.b16 %v49
  %v191 = vunpack.c.l.b16 %v50
  %v192 = vunpack.c.h.b16 %v50
  %v193 = vunpack.c.l.b16 %v51
  %v194 = vunpack.c.h.b16 %v51
  %v195 = vunpack.c.l.b16 %v52
  %v196 = vunpack.c.h.b16 %v52
  %v197 = vunpack.c.l.b16 %v53
  %v198 = vunpack.c.h.b16 %v53
  %v199 = vunpack.c.l.b16 %v54
  %v200 = vunpack.c.h.b16 %v54
  %v201 = vunpack.c.l.b16 %v55
  %v202 = vunpack.c.h.b16 %v55
  %v203 = vunpack.c.l.b16 %v56
  %v204 = vunpack.c.h.b16 %v56
  %v205 = vpack.c.b16 %v143, %v141
  %v206 = vpack.c.b16 %v144, %v142
  %v207 = vpack.c.b16 %v147, %v145
  %v208 = vpack.c.b16 %v148, %v146
  %v209 = vpack.c.b16 %v151, %v149
  %v210 = vpack.c.b16 %v152, %v150
  %v211 = vpack.c.b16 %v155, %v153
  %v212 = vpack.c.b16 %v156, %v154
  %v213 = vpack.c.b16 %v159, %v157
  %v214 = vpack.c.b16 %v160, %v158
  %v215 = vpack.c.b16 %v163, %v161
  %v216 = vpack.c.b16 %v164, %v162
  %v217 = vpack.c.b16 %v167, %v165
  %v218 = vpack.c.b16 %v168, %v166
  %v219 = vpack.c.b16 %v171, %v169
  %v220 = vpack.c.b16 %v172, %v170
  %v221 = vpack.c.b16 %v175, %v173
  %v222 = vpack.c.b16 %v176, %v174
  %v223 = vpack.c.b16 %v179, %v177
  %v224 = vpack.c.b16 %v180, %v178
  %v225 = vpack.c.b16 %v183, %v181
  %v226 = vpack.c.b16 %v184, %v182
  %v227 = vpack.c.b16 %v187, %v185
  %v228 = vpack.c.b16 %v188, %v186
  %v229 = vpack.c.b16 %v191, %v189
  %v230 = vpack.c.b16 %v192, %v190
  %v231 = vpack.c.b16 %v195, %v193
  %v232 = vpack.c.b16 %v196, %v194
  %v233 = vpack.c.b16 %v199, %v197
  %v234 = vpack.c.b16 %v200, %v198
  %v235 = vpack.c.b16 %v203, %v201
  %v236 = vpack.c.b16 %v204, %v202
  %269 = vmatprep.subr.bf16.mxu0 %v220
  %270 = vmatpush1.bf16.msra.mxu0 %v219
  %271 = vmatprep.subr.bf16.mxu0 %v218
  %272 = vmatpush1.bf16.msra.mxu0 %v217
  %273 = vmatprep.subr.bf16.mxu0 %v216
  %274 = vmatpush1.bf16.msra.mxu0 %v215
  %275 = vmatprep.subr.bf16.mxu0 %v214
  %276 = vmatpush1.bf16.msra.mxu0 %v213
  %277 = vmatprep.subr.bf16.mxu0 %v212
  %278 = vmatpush1.bf16.msra.mxu0 %v211
  %279 = vmatprep.subr.bf16.mxu0 %v210
  %280 = vmatpush1.bf16.msra.mxu0 %v209
  %281 = vmatprep.subr.bf16.mxu0 %v208
  %282 = vmatpush1.bf16.msra.mxu0 %v207
  %283 = vmatprep.subr.bf16.mxu0 %v206
  %284 = vmatpush1.bf16.msra.mxu0 %v205
  %285 = vmatprep.subr.bf16.mxu0 %v236
  %286 = vmatpush2.bf16.msra.mxu0 %v235
  %287 = vmatprep.subr.bf16.mxu0 %v234
  %288 = vmatpush2.bf16.msra.mxu0 %v233
  %289 = vmatprep.subr.bf16.mxu0 %v232
  %290 = vmatpush2.bf16.msra.mxu0 %v231
  %291 = vmatprep.subr.bf16.mxu0 %v230
  %292 = vmatpush2.bf16.msra.mxu0 %v229
  %293 = vmatprep.subr.bf16.mxu0 %v228
  %294 = vmatpush2.bf16.msra.mxu0 %v227
  %295 = vmatprep.subr.bf16.mxu0 %v226
  %296 = vmatpush2.bf16.msra.mxu0 %v225
  %297 = vmatprep.subr.bf16.mxu0 %v224
  %298 = vmatpush2.bf16.msra.mxu0 %v223
  %299 = vmatprep.subr.bf16.mxu0 %v222
  %300 = vmatpush2.bf16.msra.mxu0 %v221
  %301 = vmatprep.mubr.bf16.mxu0 %v94
  %302 = vmatmul.mubr.bf16.gmra.mxu0 %v93
  %v303 = vpop.f32.mrf.mxu0
  %v304 = vadd.f32 %v62, %v303
  %v305 = vpop.f32.mrf.mxu0
  %v306 = vadd.f32 %v66, %v305
  %v307 = vpop.f32.mrf.mxu0
  %v308 = vadd.f32 %v62, %v307
  %v309 = vpop.f32.mrf.mxu0
  %v310 = vadd.f32 %v66, %v309
  %311 = vmatprep.mubr.bf16.mxu0 %v96
  %312 = vmatmul.mubr.bf16.gmra.mxu0 %v95
  %v313 = vpop.f32.mrf.mxu0
  %v314 = vadd.f32 %v62, %v313
  %v315 = vpop.f32.mrf.mxu0
  %v316 = vadd.f32 %v66, %v315
  %v317 = vpop.f32.mrf.mxu0
  %v318 = vadd.f32 %v62, %v317
  %v319 = vpop.f32.mrf.mxu0
  %v320 = vadd.f32 %v66, %v319
  %321 = vmatprep.mubr.bf16.mxu0 %v98
  %322 = vmatmul.mubr.bf16.gmra.mxu0 %v97
  %v323 = vpop.f32.mrf.mxu0
  %v324 = vadd.f32 %v62, %v323
  %v325 = vpop.f32.mrf.mxu0
  %v326 = vadd.f32 %v66, %v325
  %v327 = vpop.f32.mrf.mxu0
  %v328 = vadd.f32 %v62, %v327
  %v329 = vpop.f32.mrf.mxu0
  %v330 = vadd.f32 %v66, %v329
  %331 = vmatprep.mubr.bf16.mxu0 %v100
  %332 = vmatmul.mubr.bf16.gmra.mxu0 %v99
  %v333 = vpop.f32.mrf.mxu0
  %v334 = vadd.f32 %v62, %v333
  %v335 = vpop.f32.mrf.mxu0
  %v336 = vadd.f32 %v66, %v335
  %v337 = vpop.f32.mrf.mxu0
  %v338 = vadd.f32 %v62, %v337
  %v339 = vpop.f32.mrf.mxu0
  %v340 = vadd.f32 %v66, %v339
  %341 = vdwg.mxu0
  %v342 = vld [vmem:[%s3] sm:$0xff]
  %v343 = vld [vmem:[%s3 + $0x8] sm:$0xff]
  %v344 = vld [vmem:[%s3 + $0x10] sm:$0xff]
  %v345 = vld [vmem:[%s3 + $0x18] sm:$0xff]
  %v346 = vld [vmem:[%s3 + $0x20] sm:$0xff]
  %v347 = vld [vmem:[%s3 + $0x28] sm:$0xff]
  %v348 = vld [vmem:[%s3 + $0x30] sm:$0xff]
  %v349 = vld [vmem:[%s3 + $0x38] sm:$0xff]
  %v350 = vunpack.c.l.bf16 %v342
  %v351 = vunpack.c.h.bf16 %v342
  %v352 = vunpack.c.l.bf16 %v343
  %v353 = vunpack.c.h.bf16 %v343
  %v354 = vunpack.c.l.bf16 %v344
  %v355 = vunpack.c.h.bf16 %v344
  %v356 = vunpack.c.l.bf16 %v345
  %v357 = vunpack.c.h.bf16 %v345
  %v358 = vunpack.c.l.bf16 %v346
  %v359 = vunpack.c.h.bf16 %v346
  %v360 = vunpack.c.l.bf16 %v347
  %v361 = vunpack.c.h.bf16 %v347
  %v362 = vunpack.c.l.bf16 %v348
  %v363 = vunpack.c.h.bf16 %v348
  %v364 = vunpack.c.l.bf16 %v349
  %v365 = vunpack.c.h.bf16 %v349
  %v366 = vadd.f32 %v304, %v350
  %v367 = vadd.f32 %v306, %v351
  %v368 = vadd.f32 %v308, %v352
  %v369 = vadd.f32 %v310, %v353
  %v370 = vadd.f32 %v314, %v354
  %v371 = vadd.f32 %v316, %v355
  %v372 = vadd.f32 %v318, %v356
  %v373 = vadd.f32 %v320, %v357
  %v374 = vadd.f32 %v324, %v358
  %v375 = vadd.f32 %v326, %v359
  %v376 = vadd.f32 %v328, %v360
  %v377 = vadd.f32 %v330, %v361
  %v378 = vadd.f32 %v334, %v362
  %v379 = vadd.f32 %v336, %v363
  %v380 = vadd.f32 %v338, %v364
  %v381 = vadd.f32 %v340, %v365
  %v382 = vpack.c.bf16 %v368, %v366
  %v383 = vpack.c.bf16 %v369, %v367
  %v384 = vpack.c.bf16 %v372, %v370
  %v385 = vpack.c.bf16 %v373, %v371
  %v386 = vpack.c.bf16 %v376, %v374
  %v387 = vpack.c.bf16 %v377, %v375
  %v388 = vpack.c.bf16 %v380, %v378
  %v389 = vpack.c.bf16 %v381, %v379
  %v398 = vunpack.c.l.b16 %v382
  %v399 = vunpack.c.l.b16 %v383
  %v400 = vunpack.c.h.b16 %v382
  %v401 = vunpack.c.h.b16 %v383
  %v402 = vunpack.c.l.b16 %v384
  %v403 = vunpack.c.l.b16 %v385
  %v404 = vunpack.c.h.b16 %v384
  %v405 = vunpack.c.h.b16 %v385
  %v406 = vunpack.c.l.b16 %v386
  %v407 = vunpack.c.l.b16 %v387
  %v408 = vunpack.c.h.b16 %v386
  %v409 = vunpack.c.h.b16 %v387
  %v410 = vunpack.c.l.b16 %v388
  %v411 = vunpack.c.l.b16 %v389
  %v412 = vunpack.c.h.b16 %v388
  %v413 = vunpack.c.h.b16 %v389
  %v414 = vpack.c.b16 %v399, %v398
  %v415 = vpack.c.b16 %v401, %v400
  %v416 = vpack.c.b16 %v403, %v402
  %v417 = vpack.c.b16 %v405, %v404
  %v418 = vpack.c.b16 %v407, %v406
  %v419 = vpack.c.b16 %v409, %v408
  %v420 = vpack.c.b16 %v411, %v410
  %v421 = vpack.c.b16 %v413, %v412
  %430 = vst [vmem:[%s4] sm:$0xff] %v414
  %431 = vst [vmem:[%s4 + $0x8] sm:$0xff] %v415
  %432 = vst [vmem:[%s4 + $0x10] sm:$0xff] %v416
  %433 = vst [vmem:[%s4 + $0x18] sm:$0xff] %v417
  %434 = vst [vmem:[%s4 + $0x20] sm:$0xff] %v418
  %435 = vst [vmem:[%s4 + $0x28] sm:$0xff] %v419
  %436 = vst [vmem:[%s4 + $0x30] sm:$0xff] %v420
  %437 = vst [vmem:[%s4 + $0x38] sm:$0xff] %v421
  // Predicated region
  $region18: #{vit_forward.13} parent=0 // pred_check
    _
  $region19: #{vit_forward.13} parent=0 // pred_check_branch
    %439 = sbr.rel (0) target = $region21
  $region20: #{vit_forward.13} parent=0 // pred_region
    _
  $region21: #{vit_forward.13} parent=0 // pred_fallthru
    _
  // Predicated region
  $region22: #{vit_forward.13} parent=0 // pred_check
    _
  $region23: #{vit_forward.13} parent=0 // pred_check_branch
    %441 = sbr.rel (0) target = $region25
  $region24: #{vit_forward.13} parent=0 // pred_region
    _
  $region25: #{vit_forward.13} parent=0 // pred_fallthru
    _

// kernel: vit_forward.11
$region0: #{vit_forward.11}
  #allocation0 [shape = 'u32[]', space=smem, size = 0x4, offset = 0x4, fixed_abs, tag = 'smem constant byte address 0x4 - core index']
  #allocation1 [shape = 'u32[144,128]{1,0:T(1,128)}', space=vmem, size = 0x12000, scoped, tag = 'internal scratch']
  %s0 = inlined_call_operand.vmem [shape: bf16[64,256], index: 0, kind: input, shape index: {}]
  %s1 = inlined_call_operand.vmem [shape: bf16[256,768], index: 1, kind: input, shape index: {}]
  %s2 = inlined_call_operand.vmem [shape: f32[1,768], index: 2, kind: input, shape index: {}]
  %s3 = inlined_call_operand.vmem [shape: f32[1,256], index: 3, kind: input, shape index: {}]
  %s4 = inlined_call_operand.vmem [shape: f32[1,256], index: 4, kind: input, shape index: {}]
  %s5 = inlined_call_operand.vmem [shape: bf16[64,768], index: 5, kind: output, shape index: {}]
  %s6 = sld [smem:[#allocation0]]
  $region30: #{vit_forward.11} parent=0
    _
  %s8 = ssub.s32 1, %s6
  %s9 = scalar_select 0, %s8, %s6
  // Predicated region
  $region2: #{vit_forward.11} parent=0 // pred_check
    _
  $region3: #{vit_forward.11} parent=0 // pred_check_branch
    %11 = sbr.rel (0) target = $region5
  $region4: #{vit_forward.11} parent=0 // pred_region
    _
  $region5: #{vit_forward.11} parent=0 // pred_fallthru
    _
  // Predicated region
  $region6: #{vit_forward.11} parent=0 // pred_check
    _
  $region7: #{vit_forward.11} parent=0 // pred_check_branch
    %13 = sbr.rel (0) target = $region9
  $region8: #{vit_forward.11} parent=0 // pred_region
    _
  $region9: #{vit_forward.11} parent=0 // pred_fallthru
    _
  // Predicated region
  $region10: #{vit_forward.11} parent=0 // pred_check
    _
  $region11: #{vit_forward.11} parent=0 // pred_check_branch
    %15 = sbr.rel (0) target = $region13
  $region12: #{vit_forward.11} parent=0 // pred_region
    _
  $region13: #{vit_forward.11} parent=0 // pred_fallthru
    _
  // Predicated region
  $region14: #{vit_forward.11} parent=0 // pred_check
    _
  $region15: #{vit_forward.11} parent=0 // pred_check_branch
    %17 = sbr.rel (0) target = $region17
  $region16: #{vit_forward.11} parent=0 // pred_region
    _
  $region17: #{vit_forward.11} parent=0 // pred_fallthru
    _
  // Predicated region
  $region18: #{vit_forward.11} parent=0 // pred_check
    _
  $region19: #{vit_forward.11} parent=0 // pred_check_branch
    %19 = sbr.rel (0) target = $region21
  $region20: #{vit_forward.11} parent=0 // pred_region
    _
  $region21: #{vit_forward.11} parent=0 // pred_fallthru
    _
  %v20 = vld [vmem:[%s0] sm:$0xff]
  %v21 = vld [vmem:[%s0 + $0x8] sm:$0xff]
  %v22 = vld [vmem:[%s0 + $0x10] sm:$0xff]
  %v23 = vld [vmem:[%s0 + $0x18] sm:$0xff]
  %v24 = vld [vmem:[%s0 + $0x20] sm:$0xff]
  %v25 = vld [vmem:[%s0 + $0x28] sm:$0xff]
  %v26 = vld [vmem:[%s0 + $0x30] sm:$0xff]
  %v27 = vld [vmem:[%s0 + $0x38] sm:$0xff]
  %v28 = vunpack.c.l.bf16 %v20
  %v29 = vunpack.c.h.bf16 %v20
  %v30 = vunpack.c.l.bf16 %v21
  %v31 = vunpack.c.h.bf16 %v21
  %v32 = vunpack.c.l.bf16 %v22
  %v33 = vunpack.c.h.bf16 %v22
  %v34 = vunpack.c.l.bf16 %v23
  %v35 = vunpack.c.h.bf16 %v23
  %v36 = vunpack.c.l.bf16 %v24
  %v37 = vunpack.c.h.bf16 %v24
  %v38 = vunpack.c.l.bf16 %v25
  %v39 = vunpack.c.h.bf16 %v25
  %v40 = vunpack.c.l.bf16 %v26
  %v41 = vunpack.c.h.bf16 %v26
  %v42 = vunpack.c.l.bf16 %v27
  %v43 = vunpack.c.h.bf16 %v27
  %v44 = vadd.f32 %v28, %v29
  %45 = vadd.xlane.f32.xlu0 %v44
  %v46 = vpop.xlane.xlu0 %45
  %v47 = vadd.f32 %v30, %v31
  %48 = vadd.xlane.f32.xlu0 %v47
  %v49 = vpop.xlane.xlu0 %48
  %v50 = vadd.f32 %v32, %v33
  %51 = vadd.xlane.f32.xlu0 %v50
  %v52 = vpop.xlane.xlu0 %51
  %v53 = vadd.f32 %v34, %v35
  %54 = vadd.xlane.f32.xlu0 %v53
  %v55 = vpop.xlane.xlu0 %54
  %v56 = vadd.f32 %v36, %v37
  %57 = vadd.xlane.f32.xlu0 %v56
  %v58 = vpop.xlane.xlu0 %57
  %v59 = vadd.f32 %v38, %v39
  %60 = vadd.xlane.f32.xlu0 %v59
  %v61 = vpop.xlane.xlu0 %60
  %v62 = vadd.f32 %v40, %v41
  %63 = vadd.xlane.f32.xlu0 %v62
  %v64 = vpop.xlane.xlu0 %63
  %v65 = vadd.f32 %v42, %v43
  %66 = vadd.xlane.f32.xlu0 %v65
  %v67 = vpop.xlane.xlu0 %66
  %v68 = vrcp.pop 256.0
  %v69 = vmul.f32 %v46, %v68
  %v70 = vmul.f32 %v49, %v68
  %v71 = vmul.f32 %v52, %v68
  %v72 = vmul.f32 %v55, %v68
  %v73 = vmul.f32 %v58, %v68
  %v74 = vmul.f32 %v61, %v68
  %v75 = vmul.f32 %v64, %v68
  %v76 = vmul.f32 %v67, %v68
  %v77 = vsub.f32 %v28, %v69
  %v78 = vsub.f32 %v29, %v69
  %v79 = vsub.f32 %v30, %v70
  %v80 = vsub.f32 %v31, %v70
  %v81 = vsub.f32 %v32, %v71
  %v82 = vsub.f32 %v33, %v71
  %v83 = vsub.f32 %v34, %v72
  %v84 = vsub.f32 %v35, %v72
  %v85 = vsub.f32 %v36, %v73
  %v86 = vsub.f32 %v37, %v73
  %v87 = vsub.f32 %v38, %v74
  %v88 = vsub.f32 %v39, %v74
  %v89 = vsub.f32 %v40, %v75
  %v90 = vsub.f32 %v41, %v75
  %v91 = vsub.f32 %v42, %v76
  %v92 = vsub.f32 %v43, %v76
  %v93 = vmul.f32 %v77, %v77
  %v94 = vmul.f32 %v78, %v78
  %v95 = vmul.f32 %v79, %v79
  %v96 = vmul.f32 %v80, %v80
  %v97 = vmul.f32 %v81, %v81
  %v98 = vmul.f32 %v82, %v82
  %v99 = vmul.f32 %v83, %v83
  %v100 = vmul.f32 %v84, %v84
  %v101 = vmul.f32 %v85, %v85
  %v102 = vmul.f32 %v86, %v86
  %v103 = vmul.f32 %v87, %v87
  %v104 = vmul.f32 %v88, %v88
  %v105 = vmul.f32 %v89, %v89
  %v106 = vmul.f32 %v90, %v90
  %v107 = vmul.f32 %v91, %v91
  %v108 = vmul.f32 %v92, %v92
  %v109 = vadd.f32 %v93, %v94
  %110 = vadd.xlane.f32.xlu0 %v109
  %v111 = vpop.xlane.xlu0 %110
  %v112 = vadd.f32 %v95, %v96
  %113 = vadd.xlane.f32.xlu0 %v112
  %v114 = vpop.xlane.xlu0 %113
  %v115 = vadd.f32 %v97, %v98
  %116 = vadd.xlane.f32.xlu0 %v115
  %v117 = vpop.xlane.xlu0 %116
  %v118 = vadd.f32 %v99, %v100
  %119 = vadd.xlane.f32.xlu0 %v118
  %v120 = vpop.xlane.xlu0 %119
  %v121 = vadd.f32 %v101, %v102
  %122 = vadd.xlane.f32.xlu0 %v121
  %v123 = vpop.xlane.xlu0 %122
  %v124 = vadd.f32 %v103, %v104
  %125 = vadd.xlane.f32.xlu0 %v124
  %v126 = vpop.xlane.xlu0 %125
  %v127 = vadd.f32 %v105, %v106
  %128 = vadd.xlane.f32.xlu0 %v127
  %v129 = vpop.xlane.xlu0 %128
  %v130 = vadd.f32 %v107, %v108
  %131 = vadd.xlane.f32.xlu0 %v130
  %v132 = vpop.xlane.xlu0 %131
  %v133 = vmul.f32 %v111, %v68
  %v134 = vmul.f32 %v114, %v68
  %v135 = vmul.f32 %v117, %v68
  %v136 = vmul.f32 %v120, %v68
  %v137 = vmul.f32 %v123, %v68
  %v138 = vmul.f32 %v126, %v68
  %v139 = vmul.f32 %v129, %v68
  %v140 = vmul.f32 %v132, %v68
  %v141 = vadd.f32 %v133, 1e-06
  %v142 = vadd.f32 %v134, 1e-06
  %v143 = vadd.f32 %v135, 1e-06
  %v144 = vadd.f32 %v136, 1e-06
  %v145 = vadd.f32 %v137, 1e-06
  %v146 = vadd.f32 %v138, 1e-06
  %v147 = vadd.f32 %v139, 1e-06
  %v148 = vadd.f32 %v140, 1e-06
  %v149 = vrsqrt.pop %v141
  %v150 = vrsqrt.pop %v142
  %v151 = vrsqrt.pop %v143
  %v152 = vrsqrt.pop %v144
  %v153 = vrsqrt.pop %v145
  %v154 = vrsqrt.pop %v146
  %v155 = vrsqrt.pop %v147
  %v156 = vrsqrt.pop %v148
  %v157 = vmul.f32 %v77, %v149
  %v158 = vmul.f32 %v78, %v149
  %v159 = vmul.f32 %v79, %v150
  %v160 = vmul.f32 %v80, %v150
  %v161 = vmul.f32 %v81, %v151
  %v162 = vmul.f32 %v82, %v151
  %v163 = vmul.f32 %v83, %v152
  %v164 = vmul.f32 %v84, %v152
  %v165 = vmul.f32 %v85, %v153
  %v166 = vmul.f32 %v86, %v153
  %v167 = vmul.f32 %v87, %v154
  %v168 = vmul.f32 %v88, %v154
  %v169 = vmul.f32 %v89, %v155
  %v170 = vmul.f32 %v90, %v155
  %v171 = vmul.f32 %v91, %v156
  %v172 = vmul.f32 %v92, %v156
  %v173 = vld [vmem:[%s3] sm:$0x3]
  %v175 = vlaneseq
  %v176 = vshrl.u32 %v175, 7
  %v177 = vsub.s32 0, %v176
  %v178 = vrot.slane %v173, %v177
  %v179 = vlaneseq
  %v180 = vshrl.u32 %v179, 7
  %v181 = vsub.s32 1, %v180
  %v182 = vrot.slane %v173, %v181
  %v185 = vmul.f32 %v157, %v178
  %v186 = vmul.f32 %v158, %v182
  %v187 = vmul.f32 %v159, %v178
  %v188 = vmul.f32 %v160, %v182
  %v189 = vmul.f32 %v161, %v178
  %v190 = vmul.f32 %v162, %v182
  %v191 = vmul.f32 %v163, %v178
  %v192 = vmul.f32 %v164, %v182
  %v193 = vmul.f32 %v165, %v178
  %v194 = vmul.f32 %v166, %v182
  %v195 = vmul.f32 %v167, %v178
  %v196 = vmul.f32 %v168, %v182
  %v197 = vmul.f32 %v169, %v178
  %v198 = vmul.f32 %v170, %v182
  %v199 = vmul.f32 %v171, %v178
  %v200 = vmul.f32 %v172, %v182
  %v201 = vld [vmem:[%s4] sm:$0x3]
  %v203 = vlaneseq
  %v204 = vshrl.u32 %v203, 7
  %v205 = vsub.s32 0, %v204
  %v206 = vrot.slane %v201, %v205
  %v207 = vlaneseq
  %v208 = vshrl.u32 %v207, 7
  %v209 = vsub.s32 1, %v208
  %v210 = vrot.slane %v201, %v209
  %v213 = vadd.f32 %v185, %v206
  %v214 = vadd.f32 %v186, %v210
  %v215 = vadd.f32 %v187, %v206
  %v216 = vadd.f32 %v188, %v210
  %v217 = vadd.f32 %v189, %v206
  %v218 = vadd.f32 %v190, %v210
  %v219 = vadd.f32 %v191, %v206
  %v220 = vadd.f32 %v192, %v210
  %v221 = vadd.f32 %v193, %v206
  %v222 = vadd.f32 %v194, %v210
  %v223 = vadd.f32 %v195, %v206
  %v224 = vadd.f32 %v196, %v210
  %v225 = vadd.f32 %v197, %v206
  %v226 = vadd.f32 %v198, %v210
  %v227 = vadd.f32 %v199, %v206
  %v228 = vadd.f32 %v200, %v210
  %v229 = vpack.c.bf16 %v215, %v213
  %v230 = vpack.c.bf16 %v216, %v214
  %v231 = vpack.c.bf16 %v219, %v217
  %v232 = vpack.c.bf16 %v220, %v218
  %v233 = vpack.c.bf16 %v223, %v221
  %v234 = vpack.c.bf16 %v224, %v222
  %v235 = vpack.c.bf16 %v227, %v225
  %v236 = vpack.c.bf16 %v228, %v226
  %v237 = vld [vmem:[%s1] sm:$0xff]
  %v238 = vld [vmem:[%s1 + $0x8] sm:$0xff]
  %v239 = vld [vmem:[%s1 + $0x10] sm:$0xff]
  %v240 = vld [vmem:[%s1 + $0x18] sm:$0xff]
  %v241 = vld [vmem:[%s1 + $0x20] sm:$0xff]
  %v242 = vld [vmem:[%s1 + $0x28] sm:$0xff]
  %v243 = vld [vmem:[%s1 + $0x30] sm:$0xff]
  %v244 = vld [vmem:[%s1 + $0x38] sm:$0xff]
  %v245 = vld [vmem:[%s1 + $0x40] sm:$0xff]
  %v246 = vld [vmem:[%s1 + $0x48] sm:$0xff]
  %v247 = vld [vmem:[%s1 + $0x50] sm:$0xff]
  %v248 = vld [vmem:[%s1 + $0x58] sm:$0xff]
  %v249 = vld [vmem:[%s1 + $0x60] sm:$0xff]
  %v250 = vld [vmem:[%s1 + $0x68] sm:$0xff]
  %v251 = vld [vmem:[%s1 + $0x70] sm:$0xff]
  %v252 = vld [vmem:[%s1 + $0x78] sm:$0xff]
  %v253 = vld [vmem:[%s1 + $0x80] sm:$0xff]
  %v254 = vld [vmem:[%s1 + $0x88] sm:$0xff]
  %v255 = vld [vmem:[%s1 + $0x90] sm:$0xff]
  %v256 = vld [vmem:[%s1 + $0x98] sm:$0xff]
  %v257 = vld [vmem:[%s1 + $0xa0] sm:$0xff]
  %v258 = vld [vmem:[%s1 + $0xa8] sm:$0xff]
  %v259 = vld [vmem:[%s1 + $0xb0] sm:$0xff]
  %v260 = vld [vmem:[%s1 + $0xb8] sm:$0xff]
  %v261 = vld [vmem:[%s1 + $0xc0] sm:$0xff]
  %v262 = vld [vmem:[%s1 + $0xc8] sm:$0xff]
  %v263 = vld [vmem:[%s1 + $0xd0] sm:$0xff]
  %v264 = vld [vmem:[%s1 + $0xd8] sm:$0xff]
  %v265 = vld [vmem:[%s1 + $0xe0] sm:$0xff]
  %v266 = vld [vmem:[%s1 + $0xe8] sm:$0xff]
  %v267 = vld [vmem:[%s1 + $0xf0] sm:$0xff]
  %v268 = vld [vmem:[%s1 + $0xf8] sm:$0xff]
  %v269 = vld [vmem:[%s1 + $0x100] sm:$0xff]
  %v270 = vld [vmem:[%s1 + $0x108] sm:$0xff]
  %v271 = vld [vmem:[%s1 + $0x110] sm:$0xff]
  %v272 = vld [vmem:[%s1 + $0x118] sm:$0xff]
  %v273 = vld [vmem:[%s1 + $0x120] sm:$0xff]
  %v274 = vld [vmem:[%s1 + $0x128] sm:$0xff]
  %v275 = vld [vmem:[%s1 + $0x130] sm:$0xff]
  %v276 = vld [vmem:[%s1 + $0x138] sm:$0xff]
  %v277 = vld [vmem:[%s1 + $0x140] sm:$0xff]
  %v278 = vld [vmem:[%s1 + $0x148] sm:$0xff]
  %v279 = vld [vmem:[%s1 + $0x150] sm:$0xff]
  %v280 = vld [vmem:[%s1 + $0x158] sm:$0xff]
  %v281 = vld [vmem:[%s1 + $0x160] sm:$0xff]
  %v282 = vld [vmem:[%s1 + $0x168] sm:$0xff]
  %v283 = vld [vmem:[%s1 + $0x170] sm:$0xff]
  %v284 = vld [vmem:[%s1 + $0x178] sm:$0xff]
  %v285 = vld [vmem:[%s1 + $0x180] sm:$0xff]
  %v286 = vld [vmem:[%s1 + $0x188] sm:$0xff]
  %v287 = vld [vmem:[%s1 + $0x190] sm:$0xff]
  %v288 = vld [vmem:[%s1 + $0x198] sm:$0xff]
  %v289 = vld [vmem:[%s1 + $0x1a0] sm:$0xff]
  %v290 = vld [vmem:[%s1 + $0x1a8] sm:$0xff]
  %v291 = vld [vmem:[%s1 + $0x1b0] sm:$0xff]
  %v292 = vld [vmem:[%s1 + $0x1b8] sm:$0xff]
  %v293 = vld [vmem:[%s1 + $0x1c0] sm:$0xff]
  %v294 = vld [vmem:[%s1 + $0x1c8] sm:$0xff]
  %v295 = vld [vmem:[%s1 + $0x1d0] sm:$0xff]
  %v296 = vld [vmem:[%s1 + $0x1d8] sm:$0xff]
  %v297 = vld [vmem:[%s1 + $0x1e0] sm:$0xff]
  %v298 = vld [vmem:[%s1 + $0x1e8] sm:$0xff]
  %v299 = vld [vmem:[%s1 + $0x1f0] sm:$0xff]
  %v300 = vld [vmem:[%s1 + $0x1f8] sm:$0xff]
  %v301 = vld [vmem:[%s1 + $0x200] sm:$0xff]
  %v302 = vld [vmem:[%s1 + $0x208] sm:$0xff]
  %v303 = vld [vmem:[%s1 + $0x210] sm:$0xff]
  %v304 = vld [vmem:[%s1 + $0x218] sm:$0xff]
  %v305 = vld [vmem:[%s1 + $0x220] sm:$0xff]
  %v306 = vld [vmem:[%s1 + $0x228] sm:$0xff]
  %v307 = vld [vmem:[%s1 + $0x230] sm:$0xff]
  %v308 = vld [vmem:[%s1 + $0x238] sm:$0xff]
  %v309 = vld [vmem:[%s1 + $0x240] sm:$0xff]
  %v310 = vld [vmem:[%s1 + $0x248] sm:$0xff]
  %v311 = vld [vmem:[%s1 + $0x250] sm:$0xff]
  %v312 = vld [vmem:[%s1 + $0x258] sm:$0xff]
  %v313 = vld [vmem:[%s1 + $0x260] sm:$0xff]
  %v314 = vld [vmem:[%s1 + $0x268] sm:$0xff]
  %v315 = vld [vmem:[%s1 + $0x270] sm:$0xff]
  %v316 = vld [vmem:[%s1 + $0x278] sm:$0xff]
  %v317 = vld [vmem:[%s1 + $0x280] sm:$0xff]
  %v318 = vld [vmem:[%s1 + $0x288] sm:$0xff]
  %v319 = vld [vmem:[%s1 + $0x290] sm:$0xff]
  %v320 = vld [vmem:[%s1 + $0x298] sm:$0xff]
  %v321 = vld [vmem:[%s1 + $0x2a0] sm:$0xff]
  %v322 = vld [vmem:[%s1 + $0x2a8] sm:$0xff]
  %v323 = vld [vmem:[%s1 + $0x2b0] sm:$0xff]
  %v324 = vld [vmem:[%s1 + $0x2b8] sm:$0xff]
  %v325 = vld [vmem:[%s1 + $0x2c0] sm:$0xff]
  %v326 = vld [vmem:[%s1 + $0x2c8] sm:$0xff]
  %v327 = vld [vmem:[%s1 + $0x2d0] sm:$0xff]
  %v328 = vld [vmem:[%s1 + $0x2d8] sm:$0xff]
  %v329 = vld [vmem:[%s1 + $0x2e0] sm:$0xff]
  %v330 = vld [vmem:[%s1 + $0x2e8] sm:$0xff]
  %v331 = vld [vmem:[%s1 + $0x2f0] sm:$0xff]
  %v332 = vld [vmem:[%s1 + $0x2f8] sm:$0xff]
  %v333 = vld [vmem:[%s2] sm:$0x3f]
  %v335 = vlaneseq
  %v336 = vshrl.u32 %v335, 7
  %v337 = vsub.s32 0, %v336
  %v338 = vrot.slane %v333, %v337
  %v339 = vlaneseq
  %v340 = vshrl.u32 %v339, 7
  %v341 = vsub.s32 1, %v340
  %v342 = vrot.slane %v333, %v341
  %v343 = vlaneseq
  %v344 = vshrl.u32 %v343, 7
  %v345 = vsub.s32 2, %v344
  %v346 = vrot.slane %v333, %v345
  %v347 = vlaneseq
  %v348 = vshrl.u32 %v347, 7
  %v349 = vsub.s32 3, %v348
  %v350 = vrot.slane %v333, %v349
  %v351 = vlaneseq
  %v352 = vshrl.u32 %v351, 7
  %v353 = vsub.s32 4, %v352
  %v354 = vrot.slane %v333, %v353
  %v355 = vlaneseq
  %v356 = vshrl.u32 %v355, 7
  %v357 = vsub.s32 5, %v356
  %v358 = vrot.slane %v333, %v357
  %v461 = vunpack.c.l.b16 %v237
  %v462 = vunpack.c.h.b16 %v237
  %v463 = vunpack.c.l.b16 %v238
  %v464 = vunpack.c.h.b16 %v238
  %v465 = vunpack.c.l.b16 %v239
  %v466 = vunpack.c.h.b16 %v239
  %v467 = vunpack.c.l.b16 %v240
  %v468 = vunpack.c.h.b16 %v240
  %v469 = vunpack.c.l.b16 %v241
  %v470 = vunpack.c.h.b16 %v241
  %v471 = vunpack.c.l.b16 %v242
  %v472 = vunpack.c.h.b16 %v242
  %v473 = vunpack.c.l.b16 %v243
  %v474 = vunpack.c.h.b16 %v243
  %v475 = vunpack.c.l.b16 %v244
  %v476 = vunpack.c.h.b16 %v244
  %v477 = vunpack.c.l.b16 %v245
  %v478 = vunpack.c.h.b16 %v245
  %v479 = vunpack.c.l.b16 %v246
  %v480 = vunpack.c.h.b16 %v246
  %v481 = vunpack.c.l.b16 %v247
  %v482 = vunpack.c.h.b16 %v247
  %v483 = vunpack.c.l.b16 %v248
  %v484 = vunpack.c.h.b16 %v248
  %v485 = vunpack.c.l.b16 %v249
  %v486 = vunpack.c.h.b16 %v249
  %v487 = vunpack.c.l.b16 %v250
  %v488 = vunpack.c.h.b16 %v250
  %v489 = vunpack.c.l.b16 %v251
  %v490 = vunpack.c.h.b16 %v251
  %v491 = vunpack.c.l.b16 %v252
  %v492 = vunpack.c.h.b16 %v252
  %v493 = vunpack.c.l.b16 %v253
  %v494 = vunpack.c.h.b16 %v253
  %v495 = vunpack.c.l.b16 %v254
  %v496 = vunpack.c.h.b16 %v254
  %v497 = vunpack.c.l.b16 %v255
  %v498 = vunpack.c.h.b16 %v255
  %v499 = vunpack.c.l.b16 %v256
  %v500 = vunpack.c.h.b16 %v256
  %v501 = vunpack.c.l.b16 %v257
  %v502 = vunpack.c.h.b16 %v257
  %v503 = vunpack.c.l.b16 %v258
  %v504 = vunpack.c.h.b16 %v258
  %v505 = vunpack.c.l.b16 %v259
  %v506 = vunpack.c.h.b16 %v259
  %v507 = vunpack.c.l.b16 %v260
  %v508 = vunpack.c.h.b16 %v260
  %v509 = vunpack.c.l.b16 %v261
  %v510 = vunpack.c.h.b16 %v261
  %v511 = vunpack.c.l.b16 %v262
  %v512 = vunpack.c.h.b16 %v262
  %v513 = vunpack.c.l.b16 %v263
  %v514 = vunpack.c.h.b16 %v263
  %v515 = vunpack.c.l.b16 %v264
  %v516 = vunpack.c.h.b16 %v264
  %v517 = vunpack.c.l.b16 %v265
  %v518 = vunpack.c.h.b16 %v265
  %v519 = vunpack.c.l.b16 %v266
  %v520 = vunpack.c.h.b16 %v266
  %v521 = vunpack.c.l.b16 %v267
  %v522 = vunpack.c.h.b16 %v267
  %v523 = vunpack.c.l.b16 %v268
  %v524 = vunpack.c.h.b16 %v268
  %v525 = vunpack.c.l.b16 %v269
  %v526 = vunpack.c.h.b16 %v269
  %v527 = vunpack.c.l.b16 %v270
  %v528 = vunpack.c.h.b16 %v270
  %v529 = vunpack.c.l.b16 %v271
  %v530 = vunpack.c.h.b16 %v271
  %v531 = vunpack.c.l.b16 %v272
  %v532 = vunpack.c.h.b16 %v272
  %v533 = vunpack.c.l.b16 %v273
  %v534 = vunpack.c.h.b16 %v273
  %v535 = vunpack.c.l.b16 %v274
  %v536 = vunpack.c.h.b16 %v274
  %v537 = vunpack.c.l.b16 %v275
  %v538 = vunpack.c.h.b16 %v275
  %v539 = vunpack.c.l.b16 %v276
  %v540 = vunpack.c.h.b16 %v276
  %v541 = vunpack.c.l.b16 %v277
  %v542 = vunpack.c.h.b16 %v277
  %v543 = vunpack.c.l.b16 %v278
  %v544 = vunpack.c.h.b16 %v278
  %v545 = vunpack.c.l.b16 %v279
  %v546 = vunpack.c.h.b16 %v279
  %v547 = vunpack.c.l.b16 %v280
  %v548 = vunpack.c.h.b16 %v280
  %v549 = vunpack.c.l.b16 %v281
  %v550 = vunpack.c.h.b16 %v281
  %v551 = vunpack.c.l.b16 %v282
  %v552 = vunpack.c.h.b16 %v282
  %v553 = vunpack.c.l.b16 %v283
  %v554 = vunpack.c.h.b16 %v283
  %v555 = vunpack.c.l.b16 %v284
  %v556 = vunpack.c.h.b16 %v284
  %v557 = vunpack.c.l.b16 %v285
  %v558 = vunpack.c.h.b16 %v285
  %v559 = vunpack.c.l.b16 %v286
  %v560 = vunpack.c.h.b16 %v286
  %v561 = vunpack.c.l.b16 %v287
  %v562 = vunpack.c.h.b16 %v287
  %v563 = vunpack.c.l.b16 %v288
  %v564 = vunpack.c.h.b16 %v288
  %v565 = vunpack.c.l.b16 %v289
  %v566 = vunpack.c.h.b16 %v289
  %v567 = vunpack.c.l.b16 %v290
  %v568 = vunpack.c.h.b16 %v290
  %v569 = vunpack.c.l.b16 %v291
  %v570 = vunpack.c.h.b16 %v291
  %v571 = vunpack.c.l.b16 %v292
  %v572 = vunpack.c.h.b16 %v292
  %v573 = vunpack.c.l.b16 %v293
  %v574 = vunpack.c.h.b16 %v293
  %v575 = vunpack.c.l.b16 %v294
  %v576 = vunpack.c.h.b16 %v294
  %v577 = vunpack.c.l.b16 %v295
  %v578 = vunpack.c.h.b16 %v295
  %v579 = vunpack.c.l.b16 %v296
  %v580 = vunpack.c.h.b16 %v296
  %v581 = vunpack.c.l.b16 %v297
  %v582 = vunpack.c.h.b16 %v297
  %v583 = vunpack.c.l.b16 %v298
  %v584 = vunpack.c.h.b16 %v298
  %v585 = vunpack.c.l.b16 %v299
  %v586 = vunpack.c.h.b16 %v299
  %v587 = vunpack.c.l.b16 %v300
  %v588 = vunpack.c.h.b16 %v300
  %v589 = vunpack.c.l.b16 %v301
  %v590 = vunpack.c.h.b16 %v301
  %v591 = vunpack.c.l.b16 %v302
  %v592 = vunpack.c.h.b16 %v302
  %v593 = vunpack.c.l.b16 %v303
  %v594 = vunpack.c.h.b16 %v303
  %v595 = vunpack.c.l.b16 %v304
  %v596 = vunpack.c.h.b16 %v304
  %v597 = vunpack.c.l.b16 %v305
  %v598 = vunpack.c.h.b16 %v305
  %v599 = vunpack.c.l.b16 %v306
  %v600 = vunpack.c.h.b16 %v306
  %v601 = vunpack.c.l.b16 %v307
  %v602 = vunpack.c.h.b16 %v307
  %v603 = vunpack.c.l.b16 %v308
  %v604 = vunpack.c.h.b16 %v308
  %v605 = vunpack.c.l.b16 %v309
  %v606 = vunpack.c.h.b16 %v309
  %v607 = vunpack.c.l.b16 %v310
  %v608 = vunpack.c.h.b16 %v310
  %v609 = vunpack.c.l.b16 %v311
  %v610 = vunpack.c.h.b16 %v311
  %v611 = vunpack.c.l.b16 %v312
  %v612 = vunpack.c.h.b16 %v312
  %v613 = vunpack.c.l.b16 %v313
  %v614 = vunpack.c.h.b16 %v313
  %v615 = vunpack.c.l.b16 %v314
  %v616 = vunpack.c.h.b16 %v314
  %v617 = vunpack.c.l.b16 %v315
  %v618 = vunpack.c.h.b16 %v315
  %v619 = vunpack.c.l.b16 %v316
  %v620 = vunpack.c.h.b16 %v316
  %v621 = vunpack.c.l.b16 %v317
  %v622 = vunpack.c.h.b16 %v317
  %v623 = vunpack.c.l.b16 %v318
  %v624 = vunpack.c.h.b16 %v318
  %v625 = vunpack.c.l.b16 %v319
  %v626 = vunpack.c.h.b16 %v319
  %v627 = vunpack.c.l.b16 %v320
  %v628 = vunpack.c.h.b16 %v320
  %v629 = vunpack.c.l.b16 %v321
  %v630 = vunpack.c.h.b16 %v321
  %v631 = vunpack.c.l.b16 %v322
  %v632 = vunpack.c.h.b16 %v322
  %v633 = vunpack.c.l.b16 %v323
  %v634 = vunpack.c.h.b16 %v323
  %v635 = vunpack.c.l.b16 %v324
  %v636 = vunpack.c.h.b16 %v324
  %v637 = vunpack.c.l.b16 %v325
  %v638 = vunpack.c.h.b16 %v325
  %v639 = vunpack.c.l.b16 %v326
  %v640 = vunpack.c.h.b16 %v326
  %v641 = vunpack.c.l.b16 %v327
  %v642 = vunpack.c.h.b16 %v327
  %v643 = vunpack.c.l.b16 %v328
  %v644 = vunpack.c.h.b16 %v328
  %v645 = vunpack.c.l.b16 %v329
  %v646 = vunpack.c.h.b16 %v329
  %v647 = vunpack.c.l.b16 %v330
  %v648 = vunpack.c.h.b16 %v330
  %v649 = vunpack.c.l.b16 %v331
  %v650 = vunpack.c.h.b16 %v331
  %v651 = vunpack.c.l.b16 %v332
  %v652 = vunpack.c.h.b16 %v332
  %v653 = vpack.c.b16 %v467, %v461
  %v654 = vpack.c.b16 %v468, %v462
  %v655 = vpack.c.b16 %v469, %v463
  %v656 = vpack.c.b16 %v470, %v464
  %v657 = vpack.c.b16 %v471, %v465
  %v658 = vpack.c.b16 %v472, %v466
  %v659 = vpack.c.b16 %v479, %v473
  %v660 = vpack.c.b16 %v480, %v474
  %v661 = vpack.c.b16 %v481, %v475
  %v662 = vpack.c.b16 %v482, %v476
  %v663 = vpack.c.b16 %v483, %v477
  %v664 = vpack.c.b16 %v484, %v478
  %v665 = vpack.c.b16 %v491, %v485
  %v666 = vpack.c.b16 %v492, %v486
  %v667 = vpack.c.b16 %v493, %v487
  %v668 = vpack.c.b16 %v494, %v488
  %v669 = vpack.c.b16 %v495, %v489
  %v670 = vpack.c.b16 %v496, %v490
  %v671 = vpack.c.b16 %v503, %v497
  %v672 = vpack.c.b16 %v504, %v498
  %v673 = vpack.c.b16 %v505, %v499
  %v674 = vpack.c.b16 %v506, %v500
  %v675 = vpack.c.b16 %v507, %v501
  %v676 = vpack.c.b16 %v508, %v502
  %v677 = vpack.c.b16 %v515, %v509
  %v678 = vpack.c.b16 %v516, %v510
  %v679 = vpack.c.b16 %v517, %v511
  %v680 = vpack.c.b16 %v518, %v512
  %v681 = vpack.c.b16 %v519, %v513
  %v682 = vpack.c.b16 %v520, %v514
  %v683 = vpack.c.b16 %v527, %v521
  %v684 = vpack.c.b16 %v528, %v522
  %v685 = vpack.c.b16 %v529, %v523
  %v686 = vpack.c.b16 %v530, %v524
  %v687 = vpack.c.b16 %v531, %v525
  %v688 = vpack.c.b16 %v532, %v526
  %v689 = vpack.c.b16 %v539, %v533
  %v690 = vpack.c.b16 %v540, %v534
  %v691 = vpack.c.b16 %v541, %v535
  %v692 = vpack.c.b16 %v542, %v536
  %v693 = vpack.c.b16 %v543, %v537
  %v694 = vpack.c.b16 %v544, %v538
  %v695 = vpack.c.b16 %v551, %v545
  %v696 = vpack.c.b16 %v552, %v546
  %v697 = vpack.c.b16 %v553, %v547
  %v698 = vpack.c.b16 %v554, %v548
  %v699 = vpack.c.b16 %v555, %v549
  %v700 = vpack.c.b16 %v556, %v550
  %v701 = vpack.c.b16 %v563, %v557
  %v702 = vpack.c.b16 %v564, %v558
  %v703 = vpack.c.b16 %v565, %v559
  %v704 = vpack.c.b16 %v566, %v560
  %v705 = vpack.c.b16 %v567, %v561
  %v706 = vpack.c.b16 %v568, %v562
  %v707 = vpack.c.b16 %v575, %v569
  %v708 = vpack.c.b16 %v576, %v570
  %v709 = vpack.c.b16 %v577, %v571
  %v710 = vpack.c.b16 %v578, %v572
  %v711 = vpack.c.b16 %v579, %v573
  %v712 = vpack.c.b16 %v580, %v574
  %v713 = vpack.c.b16 %v587, %v581
  %v714 = vpack.c.b16 %v588, %v582
  %v715 = vpack.c.b16 %v589, %v583
  %v716 = vpack.c.b16 %v590, %v584
  %v717 = vpack.c.b16 %v591, %v585
  %v718 = vpack.c.b16 %v592, %v586
  %v719 = vpack.c.b16 %v599, %v593
  %v720 = vpack.c.b16 %v600, %v594
  %v721 = vpack.c.b16 %v601, %v595
  %v722 = vpack.c.b16 %v602, %v596
  %v723 = vpack.c.b16 %v603, %v597
  %v724 = vpack.c.b16 %v604, %v598
  %v725 = vpack.c.b16 %v611, %v605
  %v726 = vpack.c.b16 %v612, %v606
  %v727 = vpack.c.b16 %v613, %v607
  %v728 = vpack.c.b16 %v614, %v608
  %v729 = vpack.c.b16 %v615, %v609
  %v730 = vpack.c.b16 %v616, %v610
  %v731 = vpack.c.b16 %v623, %v617
  %v732 = vpack.c.b16 %v624, %v618
  %v733 = vpack.c.b16 %v625, %v619
  %v734 = vpack.c.b16 %v626, %v620
  %v735 = vpack.c.b16 %v627, %v621
  %v736 = vpack.c.b16 %v628, %v622
  %v737 = vpack.c.b16 %v635, %v629
  %v738 = vpack.c.b16 %v636, %v630
  %v739 = vpack.c.b16 %v637, %v631
  %v740 = vpack.c.b16 %v638, %v632
  %v741 = vpack.c.b16 %v639, %v633
  %v742 = vpack.c.b16 %v640, %v634
  %v743 = vpack.c.b16 %v647, %v641
  %v744 = vpack.c.b16 %v648, %v642
  %v745 = vpack.c.b16 %v649, %v643
  %v746 = vpack.c.b16 %v650, %v644
  %v747 = vpack.c.b16 %v651, %v645
  %v748 = vpack.c.b16 %v652, %v646
  %845 = vmatprep.subr.bf16.mxu0 %v696
  %846 = vmatpush1.bf16.msra.mxu0 %v695
  %847 = vmatprep.subr.bf16.mxu0 %v690
  %848 = vmatpush1.bf16.msra.mxu0 %v689
  %849 = vmatprep.subr.bf16.mxu0 %v684
  %850 = vmatpush1.bf16.msra.mxu0 %v683
  %851 = vmatprep.subr.bf16.mxu0 %v678
  %852 = vmatpush1.bf16.msra.mxu0 %v677
  %853 = vmatprep.subr.bf16.mxu0 %v672
  %854 = vmatpush1.bf16.msra.mxu0 %v671
  %855 = vmatprep.subr.bf16.mxu0 %v666
  %856 = vmatpush1.bf16.msra.mxu0 %v665
  %857 = vmatprep.subr.bf16.mxu0 %v660
  %858 = vmatpush1.bf16.msra.mxu0 %v659
  %859 = vmatprep.subr.bf16.mxu0 %v654
  %860 = vmatpush1.bf16.msra.mxu0 %v653
  %861 = vmatprep.subr.bf16.mxu0 %v744
  %862 = vmatpush2.bf16.msra.mxu0 %v743
  %863 = vmatprep.subr.bf16.mxu0 %v738
  %864 = vmatpush2.bf16.msra.mxu0 %v737
  %865 = vmatprep.subr.bf16.mxu0 %v732
  %866 = vmatpush2.bf16.msra.mxu0 %v731
  %867 = vmatprep.subr.bf16.mxu0 %v726
  %868 = vmatpush2.bf16.msra.mxu0 %v725
  %869 = vmatprep.subr.bf16.mxu0 %v720
  %870 = vmatpush2.bf16.msra.mxu0 %v719
  %871 = vmatprep.subr.bf16.mxu0 %v714
  %872 = vmatpush2.bf16.msra.mxu0 %v713
  %873 = vmatprep.subr.bf16.mxu0 %v708
  %874 = vmatpush2.bf16.msra.mxu0 %v707
  %875 = vmatprep.subr.bf16.mxu0 %v702
  %876 = vmatpush2.bf16.msra.mxu0 %v701
  %877 = vmatprep.mubr.bf16.mxu0 %v230
  %878 = vmatmul.mubr.bf16.gmra.mxu0 %v229
  %v879 = vpop.f32.mrf.mxu0
  %v880 = vadd.f32 %v338, %v879
  %v881 = vpop.f32.mrf.mxu0
  %v882 = vadd.f32 %v342, %v881
  %v883 = vpop.f32.mrf.mxu0
  %v884 = vadd.f32 %v338, %v883
  %v885 = vpop.f32.mrf.mxu0
  %v886 = vadd.f32 %v342, %v885
  %887 = vmatprep.mubr.bf16.mxu0 %v232
  %888 = vmatmul.mubr.bf16.gmra.mxu0 %v231
  %v889 = vpop.f32.mrf.mxu0
  %v890 = vadd.f32 %v338, %v889
  %v891 = vpop.f32.mrf.mxu0
  %v892 = vadd.f32 %v342, %v891
  %v893 = vpop.f32.mrf.mxu0
  %v894 = vadd.f32 %v338, %v893
  %v895 = vpop.f32.mrf.mxu0
  %v896 = vadd.f32 %v342, %v895
  %897 = vmatprep.mubr.bf16.mxu0 %v234
  %898 = vmatmul.mubr.bf16.gmra.mxu0 %v233
  %v899 = vpop.f32.mrf.mxu0
  %v900 = vadd.f32 %v338, %v899
  %v901 = vpop.f32.mrf.mxu0
  %v902 = vadd.f32 %v342, %v901
  %v903 = vpop.f32.mrf.mxu0
  %v904 = vadd.f32 %v338, %v903
  %v905 = vpop.f32.mrf.mxu0
  %v906 = vadd.f32 %v342, %v905
  %907 = vmatprep.mubr.bf16.mxu0 %v236
  %908 = vmatmul.mubr.bf16.gmra.mxu0 %v235
  %v909 = vpop.f32.mrf.mxu0
  %v910 = vadd.f32 %v338, %v909
  %v911 = vpop.f32.mrf.mxu0
  %v912 = vadd.f32 %v342, %v911
  %v913 = vpop.f32.mrf.mxu0
  %v914 = vadd.f32 %v338, %v913
  %v915 = vpop.f32.mrf.mxu0
  %v916 = vadd.f32 %v342, %v915
  %917 = vdwg.mxu0
  %918 = vmatprep.subr.bf16.mxu0 %v698
  %919 = vmatpush1.bf16.msra.mxu0 %v697
  %920 = vmatprep.subr.bf16.mxu0 %v692
  %921 = vmatpush1.bf16.msra.mxu0 %v691
  %922 = vmatprep.subr.bf16.mxu0 %v686
  %923 = vmatpush1.bf16.msra.mxu0 %v685
  %924 = vmatprep.subr.bf16.mxu0 %v680
  %925 = vmatpush1.bf16.msra.mxu0 %v679
  %926 = vmatprep.subr.bf16.mxu0 %v674
  %927 = vmatpush1.bf16.msra.mxu0 %v673
  %928 = vmatprep.subr.bf16.mxu0 %v668
  %929 = vmatpush1.bf16.msra.mxu0 %v667
  %930 = vmatprep.subr.bf16.mxu0 %v662
  %931 = vmatpush1.bf16.msra.mxu0 %v661
  %932 = vmatprep.subr.bf16.mxu0 %v656
  %933 = vmatpush1.bf16.msra.mxu0 %v655
  %934 = vmatprep.subr.bf16.mxu0 %v746
  %935 = vmatpush2.bf16.msra.mxu0 %v745
  %936 = vmatprep.subr.bf16.mxu0 %v740
  %937 = vmatpush2.bf16.msra.mxu0 %v739
  %938 = vmatprep.subr.bf16.mxu0 %v734
  %939 = vmatpush2.bf16.msra.mxu0 %v733
  %940 = vmatprep.subr.bf16.mxu0 %v728
  %941 = vmatpush2.bf16.msra.mxu0 %v727
  %942 = vmatprep.subr.bf16.mxu0 %v722
  %943 = vmatpush2.bf16.msra.mxu0 %v721
  %944 = vmatprep.subr.bf16.mxu0 %v716
  %945 = vmatpush2.bf16.msra.mxu0 %v715
  %946 = vmatprep.subr.bf16.mxu0 %v710
  %947 = vmatpush2.bf16.msra.mxu0 %v709
  %948 = vmatprep.subr.bf16.mxu0 %v704
  %949 = vmatpush2.bf16.msra.mxu0 %v703
  %950 = vmatprep.mubr.bf16.mxu0 %v230
  %951 = vmatmul.mubr.bf16.gmra.mxu0 %v229
  %v952 = vpop.f32.mrf.mxu0
  %v953 = vadd.f32 %v346, %v952
  %v954 = vpop.f32.mrf.mxu0
  %v955 = vadd.f32 %v350, %v954
  %v956 = vpop.f32.mrf.mxu0
  %v957 = vadd.f32 %v346, %v956
  %v958 = vpop.f32.mrf.mxu0
  %v959 = vadd.f32 %v350, %v958
  %960 = vmatprep.mubr.bf16.mxu0 %v232
  %961 = vmatmul.mubr.bf16.gmra.mxu0 %v231
  %v962 = vpop.f32.mrf.mxu0
  %v963 = vadd.f32 %v346, %v962
  %v964 = vpop.f32.mrf.mxu0
  %v965 = vadd.f32 %v350, %v964
  %v966 = vpop.f32.mrf.mxu0
  %v967 = vadd.f32 %v346, %v966
  %v968 = vpop.f32.mrf.mxu0
  %v969 = vadd.f32 %v350, %v968
  %970 = vmatprep.mubr.bf16.mxu0 %v234
  %971 = vmatmul.mubr.bf16.gmra.mxu0 %v233
  %v972 = vpop.f32.mrf.mxu0
  %v973 = vadd.f32 %v346, %v972
  %v974 = vpop.f32.mrf.mxu0
  %v975 = vadd.f32 %v350, %v974
  %v976 = vpop.f32.mrf.mxu0
  %v977 = vadd.f32 %v346, %v976
  %v978 = vpop.f32.mrf.mxu0
  %v979 = vadd.f32 %v350, %v978
  %980 = vmatprep.mubr.bf16.mxu0 %v236
  %981 = vmatmul.mubr.bf16.gmra.mxu0 %v235
  %v982 = vpop.f32.mrf.mxu0
  %v983 = vadd.f32 %v346, %v982
  %v984 = vpop.f32.mrf.mxu0
  %v985 = vadd.f32 %v350, %v984
  %v986 = vpop.f32.mrf.mxu0
  %v987 = vadd.f32 %v346, %v986
  %v988 = vpop.f32.mrf.mxu0
  %v989 = vadd.f32 %v350, %v988
  %990 = vdwg.mxu0
  %991 = vmatprep.subr.bf16.mxu0 %v700
  %992 = vmatpush1.bf16.msra.mxu0 %v699
  %993 = vmatprep.subr.bf16.mxu0 %v694
  %994 = vmatpush1.bf16.msra.mxu0 %v693
  %995 = vmatprep.subr.bf16.mxu0 %v688
  %996 = vmatpush1.bf16.msra.mxu0 %v687
  %997 = vmatprep.subr.bf16.mxu0 %v682
  %998 = vmatpush1.bf16.msra.mxu0 %v681
  %999 = vmatprep.subr.bf16.mxu0 %v676
  %1000 = vmatpush1.bf16.msra.mxu0 %v675
  %1001 = vmatprep.subr.bf16.mxu0 %v670
  %1002 = vmatpush1.bf16.msra.mxu0 %v669
  %1003 = vmatprep.subr.bf16.mxu0 %v664
  %1004 = vmatpush1.bf16.msra.mxu0 %v663
  %1005 = vmatprep.subr.bf16.mxu0 %v658
  %1006 = vmatpush1.bf16.msra.mxu0 %v657
  %1007 = vmatprep.subr.bf16.mxu0 %v748
  %1008 = vmatpush2.bf16.msra.mxu0 %v747
  %1009 = vmatprep.subr.bf16.mxu0 %v742
  %1010 = vmatpush2.bf16.msra.mxu0 %v741
  %1011 = vmatprep.subr.bf16.mxu0 %v736
  %1012 = vmatpush2.bf16.msra.mxu0 %v735
  %1013 = vmatprep.subr.bf16.mxu0 %v730
  %1014 = vmatpush2.bf16.msra.mxu0 %v729
  %1015 = vmatprep.subr.bf16.mxu0 %v724
  %1016 = vmatpush2.bf16.msra.mxu0 %v723
  %1017 = vmatprep.subr.bf16.mxu0 %v718
  %1018 = vmatpush2.bf16.msra.mxu0 %v717
  %1019 = vmatprep.subr.bf16.mxu0 %v712
  %1020 = vmatpush2.bf16.msra.mxu0 %v711
  %1021 = vmatprep.subr.bf16.mxu0 %v706
  %1022 = vmatpush2.bf16.msra.mxu0 %v705
  %1023 = vmatprep.mubr.bf16.mxu0 %v230
  %1024 = vmatmul.mubr.bf16.gmra.mxu0 %v229
  %v1025 = vpop.f32.mrf.mxu0
  %v1026 = vadd.f32 %v354, %v1025
  %v1027 = vpop.f32.mrf.mxu0
  %v1028 = vadd.f32 %v358, %v1027
  %v1029 = vpop.f32.mrf.mxu0
  %v1030 = vadd.f32 %v354, %v1029
  %v1031 = vpop.f32.mrf.mxu0
  %v1032 = vadd.f32 %v358, %v1031
  %1033 = vmatprep.mubr.bf16.mxu0 %v232
  %1034 = vmatmul.mubr.bf16.gmra.mxu0 %v231
  %v1035 = vpop.f32.mrf.mxu0
  %v1036 = vadd.f32 %v354, %v1035
  %v1037 = vpop.f32.mrf.mxu0
  %v1038 = vadd.f32 %v358, %v1037
  %v1039 = vpop.f32.mrf.mxu0
  %v1040 = vadd.f32 %v354, %v1039
  %v1041 = vpop.f32.mrf.mxu0
  %v1042 = vadd.f32 %v358, %v1041
  %1043 = vmatprep.mubr.bf16.mxu0 %v234
  %1044 = vmatmul.mubr.bf16.gmra.mxu0 %v233
  %v1045 = vpop.f32.mrf.mxu0
  %v1046 = vadd.f32 %v354, %v1045
  %v1047 = vpop.f32.mrf.mxu0
  %v1048 = vadd.f32 %v358, %v1047
  %v1049 = vpop.f32.mrf.mxu0
  %v1050 = vadd.f32 %v354, %v1049
  %v1051 = vpop.f32.mrf.mxu0
  %v1052 = vadd.f32 %v358, %v1051
  %1053 = vmatprep.mubr.bf16.mxu0 %v236
  %1054 = vmatmul.mubr.bf16.gmra.mxu0 %v235
  %v1055 = vpop.f32.mrf.mxu0
  %v1056 = vadd.f32 %v354, %v1055
  %v1057 = vpop.f32.mrf.mxu0
  %v1058 = vadd.f32 %v358, %v1057
  %v1059 = vpop.f32.mrf.mxu0
  %v1060 = vadd.f32 %v354, %v1059
  %v1061 = vpop.f32.mrf.mxu0
  %v1062 = vadd.f32 %v358, %v1061
  %1063 = vdwg.mxu0
  %v1064 = vpack.c.bf16 %v884, %v880
  %v1065 = vpack.c.bf16 %v886, %v882
  %v1066 = vpack.c.bf16 %v957, %v953
  %v1067 = vpack.c.bf16 %v959, %v955
  %v1068 = vpack.c.bf16 %v1030, %v1026
  %v1069 = vpack.c.bf16 %v1032, %v1028
  %v1070 = vpack.c.bf16 %v894, %v890
  %v1071 = vpack.c.bf16 %v896, %v892
  %v1072 = vpack.c.bf16 %v967, %v963
  %v1073 = vpack.c.bf16 %v969, %v965
  %v1074 = vpack.c.bf16 %v1040, %v1036
  %v1075 = vpack.c.bf16 %v1042, %v1038
  %v1076 = vpack.c.bf16 %v904, %v900
  %v1077 = vpack.c.bf16 %v906, %v902
  %v1078 = vpack.c.bf16 %v977, %v973
  %v1079 = vpack.c.bf16 %v979, %v975
  %v1080 = vpack.c.bf16 %v1050, %v1046
  %v1081 = vpack.c.bf16 %v1052, %v1048
  %v1082 = vpack.c.bf16 %v914, %v910
  %v1083 = vpack.c.bf16 %v916, %v912
  %v1084 = vpack.c.bf16 %v987, %v983
  %v1085 = vpack.c.bf16 %v989, %v985
  %v1086 = vpack.c.bf16 %v1060, %v1056
  %v1087 = vpack.c.bf16 %v1062, %v1058
  %v1112 = vunpack.c.l.b16 %v1064
  %v1113 = vunpack.c.l.b16 %v1065
  %v1114 = vunpack.c.l.b16 %v1066
  %v1115 = vunpack.c.l.b16 %v1067
  %v1116 = vunpack.c.l.b16 %v1068
  %v1117 = vunpack.c.l.b16 %v1069
  %v1118 = vunpack.c.h.b16 %v1064
  %v1119 = vunpack.c.h.b16 %v1065
  %v1120 = vunpack.c.h.b16 %v1066
  %v1121 = vunpack.c.h.b16 %v1067
  %v1122 = vunpack.c.h.b16 %v1068
  %v1123 = vunpack.c.h.b16 %v1069
  %v1124 = vunpack.c.l.b16 %v1070
  %v1125 = vunpack.c.l.b16 %v1071
  %v1126 = vunpack.c.l.b16 %v1072
  %v1127 = vunpack.c.l.b16 %v1073
  %v1128 = vunpack.c.l.b16 %v1074
  %v1129 = vunpack.c.l.b16 %v1075
  %v1130 = vunpack.c.h.b16 %v1070
  %v1131 = vunpack.c.h.b16 %v1071
  %v1132 = vunpack.c.h.b16 %v1072
  %v1133 = vunpack.c.h.b16 %v1073
  %v1134 = vunpack.c.h.b16 %v1074
  %v1135 = vunpack.c.h.b16 %v1075
  %v1136 = vunpack.c.l.b16 %v1076
  %v1137 = vunpack.c.l.b16 %v1077
  %v1138 = vunpack.c.l.b16 %v1078
  %v1139 = vunpack.c.l.b16 %v1079
  %v1140 = vunpack.c.l.b16 %v1080
  %v1141 = vunpack.c.l.b16 %v1081
  %v1142 = vunpack.c.h.b16 %v1076
  %v1143 = vunpack.c.h.b16 %v1077
  %v1144 = vunpack.c.h.b16 %v1078
  %v1145 = vunpack.c.h.b16 %v1079
  %v1146 = vunpack.c.h.b16 %v1080
  %v1147 = vunpack.c.h.b16 %v1081
  %v1148 = vunpack.c.l.b16 %v1082
  %v1149 = vunpack.c.l.b16 %v1083
  %v1150 = vunpack.c.l.b16 %v1084
  %v1151 = vunpack.c.l.b16 %v1085
  %v1152 = vunpack.c.l.b16 %v1086
  %v1153 = vunpack.c.l.b16 %v1087
  %v1154 = vunpack.c.h.b16 %v1082
  %v1155 = vunpack.c.h.b16 %v1083
  %v1156 = vunpack.c.h.b16 %v1084
  %v1157 = vunpack.c.h.b16 %v1085
  %v1158 = vunpack.c.h.b16 %v1086
  %v1159 = vunpack.c.h.b16 %v1087
  %v1160 = vpack.c.b16 %v1113, %v1112
  %v1161 = vpack.c.b16 %v1115, %v1114
  %v1162 = vpack.c.b16 %v1117, %v1116
  %v1163 = vpack.c.b16 %v1119, %v1118
  %v1164 = vpack.c.b16 %v1121, %v1120
  %v1165 = vpack.c.b16 %v1123, %v1122
  %v1166 = vpack.c.b16 %v1125, %v1124
  %v1167 = vpack.c.b16 %v1127, %v1126
  %v1168 = vpack.c.b16 %v1129, %v1128
  %v1169 = vpack.c.b16 %v1131, %v1130
  %v1170 = vpack.c.b16 %v1133, %v1132
  %v1171 = vpack.c.b16 %v1135, %v1134
  %v1172 = vpack.c.b16 %v1137, %v1136
  %v1173 = vpack.c.b16 %v1139, %v1138
  %v1174 = vpack.c.b16 %v1141, %v1140
  %v1175 = vpack.c.b16 %v1143, %v1142
  %v1176 = vpack.c.b16 %v1145, %v1144
  %v1177 = vpack.c.b16 %v1147, %v1146
  %v1178 = vpack.c.b16 %v1149, %v1148
  %v1179 = vpack.c.b16 %v1151, %v1150
  %v1180 = vpack.c.b16 %v1153, %v1152
  %v1181 = vpack.c.b16 %v1155, %v1154
  %v1182 = vpack.c.b16 %v1157, %v1156
  %v1183 = vpack.c.b16 %v1159, %v1158
  %1208 = vst [vmem:[%s5] sm:$0xff] %v1160
  %1209 = vst [vmem:[%s5 + $0x8] sm:$0xff] %v1161
  %1210 = vst [vmem:[%s5 + $0x10] sm:$0xff] %v1162
  %1211 = vst [vmem:[%s5 + $0x18] sm:$0xff] %v1163
  %1212 = vst [vmem:[%s5 + $0x20] sm:$0xff] %v1164
  %1213 = vst [vmem:[%s5 + $0x28] sm:$0xff] %v1165
  %1214 = vst [vmem:[%s5 + $0x30] sm:$0xff] %v1166
  %1215 = vst [vmem:[%s5 + $0x38] sm:$0xff] %v1167
  %1216 = vst [vmem:[%s5 + $0x40] sm:$0xff] %v1168
  %1217 = vst [vmem:[%s5 + $0x48] sm:$0xff] %v1169
  %1218 = vst [vmem:[%s5 + $0x50] sm:$0xff] %v1170
  %1219 = vst [vmem:[%s5 + $0x58] sm:$0xff] %v1171
  %1220 = vst [vmem:[%s5 + $0x60] sm:$0xff] %v1172
  %1221 = vst [vmem:[%s5 + $0x68] sm:$0xff] %v1173
  %1222 = vst [vmem:[%s5 + $0x70] sm:$0xff] %v1174
  %1223 = vst [vmem:[%s5 + $0x78] sm:$0xff] %v1175
  %1224 = vst [vmem:[%s5 + $0x80] sm:$0xff] %v1176
  %1225 = vst [vmem:[%s5 + $0x88] sm:$0xff] %v1177
  %1226 = vst [vmem:[%s5 + $0x90] sm:$0xff] %v1178
  %1227 = vst [vmem:[%s5 + $0x98] sm:$0xff] %v1179
  %1228 = vst [vmem:[%s5 + $0xa0] sm:$0xff] %v1180
  %1229 = vst [vmem:[%s5 + $0xa8] sm:$0xff] %v1181
  %1230 = vst [vmem:[%s5 + $0xb0] sm:$0xff] %v1182
  %1231 = vst [vmem:[%s5 + $0xb8] sm:$0xff] %v1183
  // Predicated region
  $region22: #{vit_forward.11} parent=0 // pred_check
    _
  $region23: #{vit_forward.11} parent=0 // pred_check_branch
    %1233 = sbr.rel (0) target = $region25
  $region24: #{vit_forward.11} parent=0 // pred_region
    _
  $region25: #{vit_forward.11} parent=0 // pred_fallthru
    _
  // Predicated region
  $region26: #{vit_forward.11} parent=0 // pred_check
    _
  $region27: #{vit_forward.11} parent=0 // pred_check_branch
    %1235 = sbr.rel (0) target = $region29
  $region28: #{vit_forward.11} parent=0 // pred_region
    _
  $region29: #{vit_forward.11} parent=0 // pred_fallthru
    _

// kernel: vit_forward.12
$region0: #{vit_forward.12}
  #allocation0 [shape = 'u32[]', space=smem, size = 0x4, offset = 0x4, fixed_abs, tag = 'smem constant byte address 0x4 - core index']
  #allocation1 [shape = 'u32[144,128]{1,0:T(1,128)}', space=vmem, size = 0x12000, scoped, tag = 'internal scratch']
  %s0 = inlined_call_operand.vmem [shape: bf16[2,32,768], index: 0, kind: input, shape index: {}, may-alias: {0,1,2}]
  %s1 = inlined_call_operand.vmem [shape: bf16[2,32,768], index: 1, kind: input, shape index: {}, may-alias: {0,1,2}]
  %s2 = inlined_call_operand.vmem [shape: bf16[2,32,768], index: 2, kind: input, shape index: {}, may-alias: {0,1,2}]
  %s3 = inlined_call_operand.vmem [shape: bf16[2,32,256], index: 3, kind: output, shape index: {}]
  %s4 = sld [smem:[#allocation0]]
  $region159: #{vit_forward.12} parent=0
    _
  %s6 = ssub.s32 1, %s4
  %s7 = scalar_select 0, %s6, %s4
  $region1: #{vit_forward.12} parent=0
    #allocation2 [shape = 'u8[32768]{0}', space=vmem, size = 0x8000, scoped, tag = 'input window, operand 0']
    #allocation3 [shape = 'u8[32768]{0}', space=vmem, size = 0x8000, scoped, tag = 'input window, operand 1']
    #allocation4 [shape = 'u8[32768]{0}', space=vmem, size = 0x8000, scoped, tag = 'input window, operand 2']
    loop: start=0, step=1, limit=4
    $region2: #{vit_forward.12} parent=1 // loop_pre_header
      _
    $region3: #{vit_forward.12} parent=1 // loop_header
      %s9 = sphi 0, %s13
      %p10 = scmp.ge.s32.totalorder %s9, 4
      %s16 = sphi 0, %s28
      %s17 = sphi 0, %s24
      %s18 = sphi 0, %s16
      %s19 = sphi 0, %s17
      %s20 = sphi 0, %s18
      %s21 = sphi 0, %s19
      %s33 = sphi 0, %s35
      %s36 = sphi 0, %s33
      %s37 = sphi 0, %s36
      %s53 = sphi 0, %s37
      %s63 = sphi 0, %s65
      %s66 = sphi 0, %s63
      %s67 = sphi 0, %s66
      %s83 = sphi 0, %s67
      %s93 = sphi 0, %s95
      %s96 = sphi 0, %s93
      %s97 = sphi 0, %s96
      %s113 = sphi 0, %s97
      %s121 = sphi 0, %s123
      %s124 = sphi 0, %s121
      %s125 = sphi 0, %s124
      %s141 = sphi 0, %s125
    $region4: #{vit_forward.12} parent=1 // loop_header_branch
      %12 = sbr.rel (%p10) target = $region8
    $region5: #{vit_forward.12} parent=1 // loop_body
      %s14 = ssub.s32 %s9, 1
      %s15 = ssub.s32 %s9, 2
      %s22 = sadd.s32 1, %s17
      %p23 = scmp.ge.s32.totalorder %s22, 1
      %s24 = scalar_select %p23, 0, %s22
      %s25 = sadd.s32 1, %s16
      %s26 = scalar_select %p23, %s25, %s16
      %p27 = scmp.ge.s32.totalorder %s26, 2
      %s28 = scalar_select %p27, 0, %s26
      %s29 = ssub.s32 %s16, %s28
      %s30 = ssub.s32 %s17, %s24
      %s31 = sor.u32 %s29, %s30
      %p32 = scmp.eq.s32.totalorder %s31, 0
      %s34 = sadd.s32 %s33, 1
      %s35 = scalar_select %p32, %s33, %s34
      %p38 = pneg %p32
      %p39 = scmp.eq.s32.totalorder %s9, 1
      %p40 = por %p38, %p39
      %p41 = scmp.ne.s32.totalorder %s33, %s36
      %p42 = scmp.eq.s32.totalorder %s9, 0
      %p43 = por %p41, %p42
      %p44 = scmp.ne.s32.totalorder %s33, %s36
      %p45 = scmp.eq.s32.totalorder %s14, 1
      %p46 = por %p44, %p45
      %p47 = scmp.ne.s32.totalorder %s36, %s37
      %p48 = scmp.eq.s32.totalorder %s14, 0
      %p49 = por %p47, %p48
      %p50 = scmp.ne.s32.totalorder %s36, %s37
      %p51 = scmp.eq.s32.totalorder %s15, 1
      %p52 = por %p50, %p51
      %p54 = scmp.ne.s32.totalorder %s37, %s53
      %p55 = scmp.eq.s32.totalorder %s15, 0
      %p56 = por %p54, %p55
      %s57 = sadd.s32 %s17, 1
      %s58 = sadd.s32 %s24, 1
      %s59 = ssub.s32 %s16, %s28
      %s60 = ssub.s32 %s57, %s58
      %s61 = sor.u32 %s59, %s60
      %p62 = scmp.eq.s32.totalorder %s61, 0
      %s64 = sadd.s32 %s63, 1
      %s65 = scalar_select %p62, %s63, %s64
      %p68 = pneg %p62
      %p69 = scmp.eq.s32.totalorder %s9, 1
      %p70 = por %p68, %p69
      %p71 = scmp.ne.s32.totalorder %s63, %s66
      %p72 = scmp.eq.s32.totalorder %s9, 0
      %p73 = por %p71, %p72
      %p74 = scmp.ne.s32.totalorder %s63, %s66
      %p75 = scmp.eq.s32.totalorder %s14, 1
      %p76 = por %p74, %p75
      %p77 = scmp.ne.s32.totalorder %s66, %s67
      %p78 = scmp.eq.s32.totalorder %s14, 0
      %p79 = por %p77, %p78
      %p80 = scmp.ne.s32.totalorder %s66, %s67
      %p81 = scmp.eq.s32.totalorder %s15, 1
      %p82 = por %p80, %p81
      %p84 = scmp.ne.s32.totalorder %s67, %s83
      %p85 = scmp.eq.s32.totalorder %s15, 0
      %p86 = por %p84, %p85
      %s87 = sadd.s32 %s17, 2
      %s88 = sadd.s32 %s24, 2
      %s89 = ssub.s32 %s16, %s28
      %s90 = ssub.s32 %s87, %s88
      %s91 = sor.u32 %s89, %s90
      %p92 = scmp.eq.s32.totalorder %s91, 0
      %s94 = sadd.s32 %s93, 1
      %s95 = scalar_select %p92, %s93, %s94
      %p98 = pneg %p92
      %p99 = scmp.eq.s32.totalorder %s9, 1
      %p100 = por %p98, %p99
      %p101 = scmp.ne.s32.totalorder %s93, %s96
      %p102 = scmp.eq.s32.totalorder %s9, 0
      %p103 = por %p101, %p102
      %p104 = scmp.ne.s32.totalorder %s93, %s96
      %p105 = scmp.eq.s32.totalorder %s14, 1
      %p106 = por %p104, %p105
      %p107 = scmp.ne.s32.totalorder %s96, %s97
      %p108 = scmp.eq.s32.totalorder %s14, 0
      %p109 = por %p107, %p108
      %p110 = scmp.ne.s32.totalorder %s96, %s97
      %p111 = scmp.eq.s32.totalorder %s15, 1
      %p112 = por %p110, %p111
      %p114 = scmp.ne.s32.totalorder %s97, %s113
      %p115 = scmp.eq.s32.totalorder %s15, 0
      %p116 = por %p114, %p115
      %s117 = ssub.s32 %s16, %s28
      %s118 = ssub.s32 %s17, %s24
      %s119 = sor.u32 %s117, %s118
      %p120 = scmp.eq.s32.totalorder %s119, 0
      %s122 = sadd.s32 %s121, 1
      %s123 = scalar_select %p120, %s121, %s122
      %p126 = pneg %p120
      %p127 = scmp.eq.s32.totalorder %s9, 1
      %p128 = por %p126, %p127
      %p129 = scmp.ne.s32.totalorder %s121, %s124
      %p130 = scmp.eq.s32.totalorder %s9, 0
      %p131 = por %p129, %p130
      %p132 = scmp.ne.s32.totalorder %s121, %s124
      %p133 = scmp.eq.s32.totalorder %s14, 1
      %p134 = por %p132, %p133
      %p135 = scmp.ne.s32.totalorder %s124, %s125
      %p136 = scmp.eq.s32.totalorder %s14, 0
      %p137 = por %p135, %p136
      %p138 = scmp.ne.s32.totalorder %s124, %s125
      %p139 = scmp.eq.s32.totalorder %s15, 1
      %p140 = por %p138, %p139
      %p142 = scmp.ne.s32.totalorder %s125, %s141
      %p143 = scmp.eq.s32.totalorder %s15, 0
      %p144 = por %p142, %p143
      %p145 = scmp.le.s32.totalorder 1, %s9
      %p146 = scmp.lt.s32.totalorder %s9, 3
      %p147 = pnand %p145, %p146
      %p148 = pneg %p147
      // Predicated region
      $region9: #{vit_forward.12} parent=5 // pred_check
        _
      $region10: #{vit_forward.12} parent=5 // pred_check_branch
        %150 = sbr.rel (%p147) target = $region12
      $region11: #{vit_forward.12} parent=5 // pred_region
        %s151 = ssub.s32 %s9, 1
      $region12: #{vit_forward.12} parent=5 // pred_fallthru
        _
      %p152 = scmp.lt.s32.totalorder %s9, 2
      // Predicated region
      $region13: #{vit_forward.12} parent=5 // pred_check
        %p153 = pneg %p152
      $region14: #{vit_forward.12} parent=5 // pred_check_branch
        %155 = sbr.rel (%p153) target = $region16
      $region15: #{vit_forward.12} parent=5 // pred_region
        // Predicated region
        $region17: #{vit_forward.12} parent=15 // pred_check
          %p156 = pneg %p43
        $region18: #{vit_forward.12} parent=15 // pred_check_branch
          %158 = sbr.rel (%p156) target = $region20
        $region19: #{vit_forward.12} parent=15 // pred_region
          %s159 = sand.u32 %s33, 1
          %s160 = sand.u32 %s33, 1
          %s161 = smul.addr %s160, 32
          %s162 = scalar_lea.vmem [#allocation2], %s161
          %s163 = smul.u32 2, %s17
          %s164 = smul.addr %s16, 24
          %s165 = sadd.s32 %s163, %s164
          %s166 = smul.addr %s165, 4
          %s167 = scalar_lea.vmem %s0, %s166
          // Predicated region
          $region21: #{vit_forward.12} parent=19 // pred_check
            _
          $region22: #{vit_forward.12} parent=19 // pred_check_branch
            %169 = sbr.rel (0) target = $region24
          $region23: #{vit_forward.12} parent=19 // pred_region
            // Predicated region
            $region25: #{vit_forward.12} parent=23 // pred_check
              _
            $region26: #{vit_forward.12} parent=23 // pred_check_branch
              %171 = sbr.rel (0) target = $region28
            $region27: #{vit_forward.12} parent=23 // pred_region
              // Predicated region
              $region40: #{vit_forward.12} parent=27 // pred_check
                _
              $region41: #{vit_forward.12} parent=27 // pred_check_branch
                %193 = sbr.rel (0) target = $region43
              $region42: #{vit_forward.12} parent=27 // pred_region
                loop: start=0, step=1, limit=1
                $region44: #{vit_forward.12} parent=42 // loop_pre_header
                  _
                $region45: #{vit_forward.12} parent=42 // loop_header
                  %s195 = sphi 0, %s199
                  %p196 = scmp.ge.s32.totalorder %s195, 1
                  %s200 = sphi %s167, %s167
                  %s201 = sphi %s162, %s162
                $region46: #{vit_forward.12} parent=42 // loop_header_branch
                  %198 = sbr.rel (%p196) target = $region50
                $region47: #{vit_forward.12} parent=42 // loop_body
                  %v202 = vld [vmem:[%s200] sm:$0xff]
                  %203 = vst [vmem:[%s201] sm:$0xff] %v202
                  %v204 = vld [vmem:[%s200 + $0x18] sm:$0xff]
                  %205 = vst [vmem:[%s201 + $0x8] sm:$0xff] %v204
                  %v206 = vld [vmem:[%s200 + $0x30] sm:$0xff]
                  %207 = vst [vmem:[%s201 + $0x10] sm:$0xff] %v206
                  %v208 = vld [vmem:[%s200 + $0x48] sm:$0xff]
                  %209 = vst [vmem:[%s201 + $0x18] sm:$0xff] %v208
                $region48: #{vit_forward.12} parent=42 // loop_footer
                  %s199 = sadd.s32 1, %s195
                $region49: #{vit_forward.12} parent=42 // loop_footer_branch
                  %194 = sbr.rel target = $region45
                $region50: #{vit_forward.12} parent=42 // loop_exit
                  _
              $region43: #{vit_forward.12} parent=27 // pred_fallthru
                _
              // Predicated region
              $region51: #{vit_forward.12} parent=27 // pred_check
                _
              $region52: #{vit_forward.12} parent=27 // pred_check_branch
                %211 = sbr.rel target = $region54
              $region53: #{vit_forward.12} parent=27 // pred_region
                _
              $region54: #{vit_forward.12} parent=27 // pred_fallthru
                _
            $region28: #{vit_forward.12} parent=23 // pred_fallthru
              _
            // Predicated region
            $region29: #{vit_forward.12} parent=23 // pred_check
              _
            $region30: #{vit_forward.12} parent=23 // pred_check_branch
              %173 = sbr.rel target = $region32
            $region31: #{vit_forward.12} parent=23 // pred_region
              %s175 = ssub.s32 256, 1
              loop: start=0, step=1, limit=1
              $region33: #{vit_forward.12} parent=31 // loop_pre_header
                _
              $region34: #{vit_forward.12} parent=31 // loop_header
                %s177 = sphi 0, %s181
                %p178 = scmp.ge.s32.totalorder %s177, 1
                %s182 = sphi %s167, %s167
                %s183 = sphi %s162, %s162
              $region35: #{vit_forward.12} parent=31 // loop_header_branch
                %180 = sbr.rel (%p178) target = $region39
              $region36: #{vit_forward.12} parent=31 // loop_body
                %v184 = vld [vmem:[%s182] sm:%s175]
                %185 = vst [vmem:[%s183] sm:%s175] %v184
                %v186 = vld [vmem:[%s182 + $0x18] sm:%s175]
                %187 = vst [vmem:[%s183 + $0x8] sm:%s175] %v186
                %v188 = vld [vmem:[%s182 + $0x30] sm:%s175]
                %189 = vst [vmem:[%s183 + $0x10] sm:%s175] %v188
                %v190 = vld [vmem:[%s182 + $0x48] sm:%s175]
                %191 = vst [vmem:[%s183 + $0x18] sm:%s175] %v190
              $region37: #{vit_forward.12} parent=31 // loop_footer
                %s181 = sadd.s32 1, %s177
              $region38: #{vit_forward.12} parent=31 // loop_footer_branch
                %176 = sbr.rel target = $region34
              $region39: #{vit_forward.12} parent=31 // loop_exit
                _
            $region32: #{vit_forward.12} parent=23 // pred_fallthru
              _
          $region24: #{vit_forward.12} parent=19 // pred_fallthru
            _
          %212 = vnop
        $region20: #{vit_forward.12} parent=15 // pred_fallthru
          _
        // Predicated region
        $region55: #{vit_forward.12} parent=15 // pred_check
          %p213 = pneg %p73
        $region56: #{vit_forward.12} parent=15 // pred_check_branch
          %215 = sbr.rel (%p213) target = $region58
        $region57: #{vit_forward.12} parent=15 // pred_region
          %s216 = sand.u32 %s63, 1
          %s217 = sand.u32 %s63, 1
          %s218 = smul.addr %s217, 32
          %s219 = scalar_lea.vmem [#allocation3], %s218
          %s220 = sadd.s32 %s17, 1
          %s221 = smul.u32 2, %s220
          %s222 = smul.addr %s16, 24
          %s223 = sadd.s32 %s221, %s222
          %s224 = smul.addr %s223, 4
          %s225 = scalar_lea.vmem %s1, %s224
          // Predicated region
          $region59: #{vit_forward.12} parent=57 // pred_check
            _
          $region60: #{vit_forward.12} parent=57 // pred_check_branch
            %227 = sbr.rel (0) target = $region62
          $region61: #{vit_forward.12} parent=57 // pred_region
            // Predicated region
            $region63: #{vit_forward.12} parent=61 // pred_check
              _
            $region64: #{vit_forward.12} parent=61 // pred_check_branch
              %229 = sbr.rel (0) target = $region66
            $region65: #{vit_forward.12} parent=61 // pred_region
              // Predicated region
              $region78: #{vit_forward.12} parent=65 // pred_check
                _
              $region79: #{vit_forward.12} parent=65 // pred_check_branch
                %251 = sbr.rel (0) target = $region81
              $region80: #{vit_forward.12} parent=65 // pred_region
                loop: start=0, step=1, limit=1
                $region82: #{vit_forward.12} parent=80 // loop_pre_header
                  _
                $region83: #{vit_forward.12} parent=80 // loop_header
                  %s253 = sphi 0, %s257
                  %p254 = scmp.ge.s32.totalorder %s253, 1
                  %s258 = sphi %s225, %s225
                  %s259 = sphi %s219, %s219
                $region84: #{vit_forward.12} parent=80 // loop_header_branch
                  %256 = sbr.rel (%p254) target = $region88
                $region85: #{vit_forward.12} parent=80 // loop_body
                  %v260 = vld [vmem:[%s258] sm:$0xff]
                  %261 = vst [vmem:[%s259] sm:$0xff] %v260
                  %v262 = vld [vmem:[%s258 + $0x18] sm:$0xff]
                  %263 = vst [vmem:[%s259 + $0x8] sm:$0xff] %v262
                  %v264 = vld [vmem:[%s258 + $0x30] sm:$0xff]
                  %265 = vst [vmem:[%s259 + $0x10] sm:$0xff] %v264
                  %v266 = vld [vmem:[%s258 + $0x48] sm:$0xff]
                  %267 = vst [vmem:[%s259 + $0x18] sm:$0xff] %v266
                $region86: #{vit_forward.12} parent=80 // loop_footer
                  %s257 = sadd.s32 1, %s253
                $region87: #{vit_forward.12} parent=80 // loop_footer_branch
                  %252 = sbr.rel target = $region83
                $region88: #{vit_forward.12} parent=80 // loop_exit
                  _
              $region81: #{vit_forward.12} parent=65 // pred_fallthru
                _
              // Predicated region
              $region89: #{vit_forward.12} parent=65 // pred_check
                _
              $region90: #{vit_forward.12} parent=65 // pred_check_branch
                %269 = sbr.rel target = $region92
              $region91: #{vit_forward.12} parent=65 // pred_region
                _
              $region92: #{vit_forward.12} parent=65 // pred_fallthru
                _
            $region66: #{vit_forward.12} parent=61 // pred_fallthru
              _
            // Predicated region
            $region67: #{vit_forward.12} parent=61 // pred_check
              _
            $region68: #{vit_forward.12} parent=61 // pred_check_branch
              %231 = sbr.rel target = $region70
            $region69: #{vit_forward.12} parent=61 // pred_region
              %s233 = ssub.s32 256, 1
              loop: start=0, step=1, limit=1
              $region71: #{vit_forward.12} parent=69 // loop_pre_header
                _
              $region72: #{vit_forward.12} parent=69 // loop_header
                %s235 = sphi 0, %s239
                %p236 = scmp.ge.s32.totalorder %s235, 1
                %s240 = sphi %s225, %s225
                %s241 = sphi %s219, %s219
              $region73: #{vit_forward.12} parent=69 // loop_header_branch
                %238 = sbr.rel (%p236) target = $region77
              $region74: #{vit_forward.12} parent=69 // loop_body
                %v242 = vld [vmem:[%s240] sm:%s233]
                %243 = vst [vmem:[%s241] sm:%s233] %v242
                %v244 = vld [vmem:[%s240 + $0x18] sm:%s233]
                %245 = vst [vmem:[%s241 + $0x8] sm:%s233] %v244
                %v246 = vld [vmem:[%s240 + $0x30] sm:%s233]
                %247 = vst [vmem:[%s241 + $0x10] sm:%s233] %v246
                %v248 = vld [vmem:[%s240 + $0x48] sm:%s233]
                %249 = vst [vmem:[%s241 + $0x18] sm:%s233] %v248
              $region75: #{vit_forward.12} parent=69 // loop_footer
                %s239 = sadd.s32 1, %s235
              $region76: #{vit_forward.12} parent=69 // loop_footer_branch
                %234 = sbr.rel target = $region72
              $region77: #{vit_forward.12} parent=69 // loop_exit
                _
            $region70: #{vit_forward.12} parent=61 // pred_fallthru
              _
          $region62: #{vit_forward.12} parent=57 // pred_fallthru
            _
          %270 = vnop
        $region58: #{vit_forward.12} parent=15 // pred_fallthru
          _
        // Predicated region
        $region93: #{vit_forward.12} parent=15 // pred_check
          %p271 = pneg %p103
        $region94: #{vit_forward.12} parent=15 // pred_check_branch
          %273 = sbr.rel (%p271) target = $region96
        $region95: #{vit_forward.12} parent=15 // pred_region
          %s274 = sand.u32 %s93, 1
          %s275 = sand.u32 %s93, 1
          %s276 = smul.addr %s275, 32
          %s277 = scalar_lea.vmem [#allocation4], %s276
          %s278 = sadd.s32 %s17, 2
          %s279 = smul.u32 2, %s278
          %s280 = smul.addr %s16, 24
          %s281 = sadd.s32 %s279, %s280
          %s282 = smul.addr %s281, 4
          %s283 = scalar_lea.vmem %s2, %s282
          // Predicated region
          $region97: #{vit_forward.12} parent=95 // pred_check
            _
          $region98: #{vit_forward.12} parent=95 // pred_check_branch
            %285 = sbr.rel (0) target = $region100
          $region99: #{vit_forward.12} parent=95 // pred_region
            // Predicated region
            $region101: #{vit_forward.12} parent=99 // pred_check
              _
            $region102: #{vit_forward.12} parent=99 // pred_check_branch
              %287 = sbr.rel (0) target = $region104
            $region103: #{vit_forward.12} parent=99 // pred_region
              // Predicated region
              $region116: #{vit_forward.12} parent=103 // pred_check
                _
              $region117: #{vit_forward.12} parent=103 // pred_check_branch
                %309 = sbr.rel (0) target = $region119
              $region118: #{vit_forward.12} parent=103 // pred_region
                loop: start=0, step=1, limit=1
                $region120: #{vit_forward.12} parent=118 // loop_pre_header
                  _
                $region121: #{vit_forward.12} parent=118 // loop_header
                  %s311 = sphi 0, %s315
                  %p312 = scmp.ge.s32.totalorder %s311, 1
                  %s316 = sphi %s283, %s283
                  %s317 = sphi %s277, %s277
                $region122: #{vit_forward.12} parent=118 // loop_header_branch
                  %314 = sbr.rel (%p312) target = $region126
                $region123: #{vit_forward.12} parent=118 // loop_body
                  %v318 = vld [vmem:[%s316] sm:$0xff]
                  %319 = vst [vmem:[%s317] sm:$0xff] %v318
                  %v320 = vld [vmem:[%s316 + $0x18] sm:$0xff]
                  %321 = vst [vmem:[%s317 + $0x8] sm:$0xff] %v320
                  %v322 = vld [vmem:[%s316 + $0x30] sm:$0xff]
                  %323 = vst [vmem:[%s317 + $0x10] sm:$0xff] %v322
                  %v324 = vld [vmem:[%s316 + $0x48] sm:$0xff]
                  %325 = vst [vmem:[%s317 + $0x18] sm:$0xff] %v324
                $region124: #{vit_forward.12} parent=118 // loop_footer
                  %s315 = sadd.s32 1, %s311
                $region125: #{vit_forward.12} parent=118 // loop_footer_branch
                  %310 = sbr.rel target = $region121
                $region126: #{vit_forward.12} parent=118 // loop_exit
                  _
              $region119: #{vit_forward.12} parent=103 // pred_fallthru
                _
              // Predicated region
              $region127: #{vit_forward.12} parent=103 // pred_check
                _
              $region128: #{vit_forward.12} parent=103 // pred_check_branch
                %327 = sbr.rel target = $region130
              $region129: #{vit_forward.12} parent=103 // pred_region
                _
              $region130: #{vit_forward.12} parent=103 // pred_fallthru
                _
            $region104: #{vit_forward.12} parent=99 // pred_fallthru
              _
            // Predicated region
            $region105: #{vit_forward.12} parent=99 // pred_check
              _
            $region106: #{vit_forward.12} parent=99 // pred_check_branch
              %289 = sbr.rel target = $region108
            $region107: #{vit_forward.12} parent=99 // pred_region
              %s291 = ssub.s32 256, 1
              loop: start=0, step=1, limit=1
              $region109: #{vit_forward.12} parent=107 // loop_pre_header
                _
              $region110: #{vit_forward.12} parent=107 // loop_header
                %s293 = sphi 0, %s297
                %p294 = scmp.ge.s32.totalorder %s293, 1
                %s298 = sphi %s283, %s283
                %s299 = sphi %s277, %s277
              $region111: #{vit_forward.12} parent=107 // loop_header_branch
                %296 = sbr.rel (%p294) target = $region115
              $region112: #{vit_forward.12} parent=107 // loop_body
                %v300 = vld [vmem:[%s298] sm:%s291]
                %301 = vst [vmem:[%s299] sm:%s291] %v300
                %v302 = vld [vmem:[%s298 + $0x18] sm:%s291]
                %303 = vst [vmem:[%s299 + $0x8] sm:%s291] %v302
                %v304 = vld [vmem:[%s298 + $0x30] sm:%s291]
                %305 = vst [vmem:[%s299 + $0x10] sm:%s291] %v304
                %v306 = vld [vmem:[%s298 + $0x48] sm:%s291]
                %307 = vst [vmem:[%s299 + $0x18] sm:%s291] %v306
              $region113: #{vit_forward.12} parent=107 // loop_footer
                %s297 = sadd.s32 1, %s293
              $region114: #{vit_forward.12} parent=107 // loop_footer_branch
                %292 = sbr.rel target = $region110
              $region115: #{vit_forward.12} parent=107 // loop_exit
                _
            $region108: #{vit_forward.12} parent=99 // pred_fallthru
              _
          $region100: #{vit_forward.12} parent=95 // pred_fallthru
            _
          %328 = vnop
        $region96: #{vit_forward.12} parent=15 // pred_fallthru
          _
      $region16: #{vit_forward.12} parent=5 // pred_fallthru
        _
      %p329 = scmp.le.s32.totalorder 1, %s9
      %p330 = scmp.lt.s32.totalorder %s9, 3
      %p331 = pnand %p329, %p330
      %p332 = pneg %p331
      // Predicated region
      $region131: #{vit_forward.12} parent=5 // pred_check
        _
      $region132: #{vit_forward.12} parent=5 // pred_check_branch
        %334 = sbr.rel (%p331) target = $region134
      $region133: #{vit_forward.12} parent=5 // pred_region
        %s335 = ssub.s32 %s9, 1
        %s336 = sand.u32 %s36, 1
        %s337 = sand.u32 %s36, 1
        %s338 = smul.addr %s337, 32
        %s339 = scalar_lea.vmem [#allocation2], %s338
        // Predicated region
        $region135: #{vit_forward.12} parent=133 // pred_check
          %p340 = pneg %p49
        $region136: #{vit_forward.12} parent=133 // pred_check_branch
          %342 = sbr.rel (%p340) target = $region138
        $region137: #{vit_forward.12} parent=133 // pred_region
          _
        $region138: #{vit_forward.12} parent=133 // pred_fallthru
          _
        %s343 = sand.u32 %s66, 1
        %s344 = sand.u32 %s66, 1
        %s345 = smul.addr %s344, 32
        %s346 = scalar_lea.vmem [#allocation3], %s345
        // Predicated region
        $region139: #{vit_forward.12} parent=133 // pred_check
          %p347 = pneg %p79
        $region140: #{vit_forward.12} parent=133 // pred_check_branch
          %349 = sbr.rel (%p347) target = $region142
        $region141: #{vit_forward.12} parent=133 // pred_region
          _
        $region142: #{vit_forward.12} parent=133 // pred_fallthru
          _
        %s350 = sand.u32 %s96, 1
        %s351 = sand.u32 %s96, 1
        %s352 = smul.addr %s351, 32
        %s353 = scalar_lea.vmem [#allocation4], %s352
        // Predicated region
        $region143: #{vit_forward.12} parent=133 // pred_check
          %p354 = pneg %p109
        $region144: #{vit_forward.12} parent=133 // pred_check_branch
          %356 = sbr.rel (%p354) target = $region146
        $region145: #{vit_forward.12} parent=133 // pred_region
          _
        $region146: #{vit_forward.12} parent=133 // pred_fallthru
          _
        %s357 = sand.u32 %s36, 1
        %s358 = sand.u32 %s36, 1
        %s359 = smul.addr %s358, 32
        %s360 = scalar_lea.vmem [#allocation2], %s359
        %p361 = pneg %p49
        %p362 = pneg %p46
        %s363 = sand.u32 %s66, 1
        %s364 = sand.u32 %s66, 1
        %s365 = smul.addr %s364, 32
        %s366 = scalar_lea.vmem [#allocation3], %s365
        %p367 = pneg %p79
        %p368 = pneg %p76
        %s369 = sand.u32 %s96, 1
        %s370 = sand.u32 %s96, 1
        %s371 = smul.addr %s370, 32
        %s372 = scalar_lea.vmem [#allocation4], %s371
        %p373 = pneg %p109
        %p374 = pneg %p106
        %p375 = pneg %p137
        %p376 = pneg %p134
        %s377 = smul.u32 2, %s19
        %p378 = scmp.lt.s32.totalorder %s18, 1
        %s379 = scalar_select %p378, %s18, 1
        %p380 = scmp.lt.s32.totalorder %s377, 1
        %s381 = scalar_select %p380, %s377, 1
        %s382 = smul.addr %s379, 8
        %s383 = sadd.s32 %s381, %s382
        %s384 = smul.addr %s383, 4
        %s385 = scalar_lea.vmem %s3, %s384
        %s386 = smul.u32 2, %s19
        %s387 = sadd.s32 %s19, 1
        %s388 = smul.u32 2, %s387
        %s389 = sadd.s32 %s19, 2
        %s390 = smul.u32 2, %s389
        %s391 = smul.u32 2, %s19
        %p392 = scmp.lt.s32.totalorder %s18, 1
        %s393 = scalar_select %p392, %s18, 1
        %p394 = scmp.lt.s32.totalorder %s391, 1
        %s395 = scalar_select %p394, %s391, 1
        %s396 = smul.addr %s393, 8
        %s397 = sadd.s32 %s395, %s396
        %s398 = smul.addr %s397, 4
        %s399 = scalar_lea.vmem %s3, %s398
        %s400 = smul.u32 2, %s19
        %v402 = vlaneseq
        %v403 = vand.u32 %v402, 127
        %vm404 = vcmp.lt.s32.totalorder %v403, 17
        %v405 = vsel %vm404, 0.0, -1e+30
        %v406 = vld [vmem:[%s339] sm:$0xf]
        %v407 = vld [vmem:[%s339 + $0x8] sm:$0xf]
        %v408 = vld [vmem:[%s339 + $0x10] sm:$0xf]
        %v409 = vld [vmem:[%s339 + $0x18] sm:$0xf]
        %v410 = vld [vmem:[%s346] sm:$0xf]
        %v411 = vld [vmem:[%s346 + $0x8] sm:$0xf]
        %v412 = vld [vmem:[%s346 + $0x10] sm:$0xf]
        %v413 = vld [vmem:[%s346 + $0x18] sm:$0xf]
        %v414 = vld [vmem:[%s353] sm:$0xf]
        %v415 = vld [vmem:[%s353 + $0x8] sm:$0xf]
        %v416 = vld [vmem:[%s353 + $0x10] sm:$0xf]
        %v417 = vld [vmem:[%s353 + $0x18] sm:$0xf]
        %v422 = vunpack.c.l.b16 %v406
        %v423 = vunpack.c.l.b16 %v407
        %v424 = vunpack.c.l.b16 %v408
        %v425 = vunpack.c.l.b16 %v409
        %v426 = vpack.c.b16 %v423, %v422
        %v427 = vpack.c.b16 %v425, %v424
        %v432 = vunpack.c.l.b16 %v410
        %v433 = vunpack.c.l.b16 %v411
        %v434 = vunpack.c.l.b16 %v412
        %v435 = vunpack.c.l.b16 %v413
        %v436 = vpack.c.b16 %v433, %v432
        %v437 = vpack.c.b16 %v435, %v434
        %vm438 = vcmask 523264
        %v440 = vsel %vm438, %v426, 0
        %v443 = vsel %vm438, %v427, 0
        %v446 = vsel %vm438, %v436, 0
        %v449 = vsel %vm438, %v437, 0
        %451 = vmatprep.subr.bf16.mxu0 0
        %452 = vmatpush1.bf16.xpose.msra.mxu0 0
        %453 = vmatprep.subr.bf16.mxu0 0
        %454 = vmatpush1.bf16.xpose.msra.mxu0 0
        %455 = vmatprep.subr.bf16.mxu0 0
        %456 = vmatpush1.bf16.xpose.msra.mxu0 0
        %457 = vmatprep.subr.bf16.mxu0 0
        %458 = vmatpush1.bf16.xpose.msra.mxu0 0
        %459 = vmatprep.subr.bf16.mxu0 0
        %460 = vmatpush1.bf16.xpose.msra.mxu0 0
        %461 = vmatprep.subr.bf16.mxu0 0
        %462 = vmatpush1.bf16.xpose.msra.mxu0 0
        %463 = vmatprep.subr.bf16.mxu0 0
        %464 = vmatpush1.bf16.xpose.msra.mxu0 %v449
        %465 = vmatprep.subr.bf16.mxu0 0
        %466 = vmatpush1.bf16.xpose.msra.mxu0 %v446
        %467 = vmatprep.subr.bf16.mxu0 0
        %468 = vmatpush2.bf16.xpose.msra.mxu0 0
        %469 = vmatprep.subr.bf16.mxu0 0
        %470 = vmatpush2.bf16.xpose.msra.mxu0 0
        %471 = vmatprep.subr.bf16.mxu0 0
        %472 = vmatpush2.bf16.xpose.msra.mxu0 0
        %473 = vmatprep.subr.bf16.mxu0 0
        %474 = vmatpush2.bf16.xpose.msra.mxu0 0
        %475 = vmatprep.subr.bf16.mxu0 0
        %476 = vmatpush2.bf16.xpose.msra.mxu0 0
        %477 = vmatprep.subr.bf16.mxu0 0
        %478 = vmatpush2.bf16.xpose.msra.mxu0 0
        %479 = vmatprep.subr.bf16.mxu0 0
        %480 = vmatpush2.bf16.xpose.msra.mxu0 0
        %481 = vmatprep.subr.bf16.mxu0 0
        %482 = vmatpush2.bf16.xpose.msra.mxu0 0
        %483 = vmatprep.mubr.bf16.mxu0 0
        %484 = vmatmul.mubr.bf16.gmra.mxu0 %v440
        %v485 = vpop.f32.mrf.mxu0
        %v486 = vadd.f32 0.0, %v485
        %v487 = vpop.f32.mrf.mxu0
        %v488 = vpop.f32.mrf.mxu0
        %v489 = vadd.f32 0.0, %v488
        %v490 = vpop.f32.mrf.mxu0
        %491 = vmatprep.mubr.bf16.mxu0 0
        %492 = vmatmul.mubr.bf16.gmra.mxu0 %v443
        %v493 = vpop.f32.mrf.mxu0
        %v494 = vadd.f32 0.0, %v493
        %v495 = vpop.f32.mrf.mxu0
        %v496 = vpop.f32.mrf.mxu0
        %v497 = vadd.f32 0.0, %v496
        %v498 = vpop.f32.mrf.mxu0
        %499 = vdwg.mxu0
        %v500 = vmul.f32 %v486, 0.125
        %v501 = vmul.f32 %v489, 0.125
        %v502 = vmul.f32 %v494, 0.125
        %v503 = vmul.f32 %v497, 0.125
        %v504 = vadd.f32 %v500, %v405
        %v505 = vadd.f32 %v501, %v405
        %v506 = vadd.f32 %v502, %v405
        %v507 = vadd.f32 %v503, %v405
        %vm508 = vcmask 261120
        %v509 = vsel %vm508, %v504, -inf
        %510 = vmax.xlane.f32.xlu0 %v509
        %v511 = vpop.xlane.xlu0 %510
        %v512 = vsel %vm508, %v505, -inf
        %513 = vmax.xlane.f32.xlu0 %v512
        %v514 = vpop.xlane.xlu0 %513
        %v515 = vsel %vm508, %v506, -inf
        %516 = vmax.xlane.f32.xlu0 %v515
        %v517 = vpop.xlane.xlu0 %516
        %v518 = vsel %vm508, %v507, -inf
        %519 = vmax.xlane.f32.xlu0 %v518
        %v520 = vpop.xlane.xlu0 %519
        %v521 = vsub.f32 %v504, %v511
        %v522 = vsub.f32 %v505, %v514
        %v523 = vsub.f32 %v506, %v517
        %v524 = vsub.f32 %v507, %v520
        %v525 = vmul.f32 %v521, 1.442695
        %v526 = vpow.pop %v525
        %v527 = vmul.f32 %v522, 1.442695
        %v528 = vpow.pop %v527
        %v529 = vmul.f32 %v523, 1.442695
        %v530 = vpow.pop %v529
        %v531 = vmul.f32 %v524, 1.442695
        %v532 = vpow.pop %v531
        %v533 = vsel %vm508, %v526, 0.0
        %534 = vadd.xlane.f32.xlu0 %v533
        %v535 = vpop.xlane.xlu0 %534
        %v536 = vsel %vm508, %v528, 0.0
        %537 = vadd.xlane.f32.xlu0 %v536
        %v538 = vpop.xlane.xlu0 %537
        %v539 = vsel %vm508, %v530, 0.0
        %540 = vadd.xlane.f32.xlu0 %v539
        %v541 = vpop.xlane.xlu0 %540
        %v542 = vsel %vm508, %v532, 0.0
        %543 = vadd.xlane.f32.xlu0 %v542
        %v544 = vpop.xlane.xlu0 %543
        %v545 = vpack.c.bf16 %v528, %v526
        %v546 = vpack.c.bf16 %v532, %v530
        %v551 = vunpack.c.l.b16 %v414
        %v552 = vunpack.c.l.b16 %v415
        %v553 = vunpack.c.l.b16 %v416
        %v554 = vunpack.c.l.b16 %v417
        %v555 = vpack.c.b16 %v552, %v551
        %v556 = vpack.c.b16 %v554, %v553
        %v560 = vsel %vm508, %v545, 0
        %v563 = vsel %vm508, %v546, 0
        %565 = vmatprep.subr.bf16.mxu0 0
        %566 = vmatpush1.bf16.msra.mxu0 0
        %567 = vmatprep.subr.bf16.mxu0 0
        %568 = vmatpush1.bf16.msra.mxu0 0
        %569 = vmatprep.subr.bf16.mxu0 0
        %570 = vmatpush1.bf16.msra.mxu0 0
        %571 = vmatprep.subr.bf16.mxu0 0
        %572 = vmatpush1.bf16.msra.mxu0 0
        %573 = vmatprep.subr.bf16.mxu0 0
        %574 = vmatpush1.bf16.msra.mxu0 0
        %575 = vmatprep.subr.bf16.mxu0 0
        %576 = vmatpush1.bf16.msra.mxu0 0
        %577 = vmatprep.subr.bf16.mxu0 0
        %578 = vmatpush1.bf16.msra.mxu0 %v556
        %579 = vmatprep.subr.bf16.mxu0 0
        %580 = vmatpush1.bf16.msra.mxu0 %v555
        %581 = vmatprep.subr.bf16.mxu0 0
        %582 = vmatpush2.bf16.msra.mxu0 0
        %583 = vmatprep.subr.bf16.mxu0 0
        %584 = vmatpush2.bf16.msra.mxu0 0
        %585 = vmatprep.subr.bf16.mxu0 0
        %586 = vmatpush2.bf16.msra.mxu0 0
        %587 = vmatprep.subr.bf16.mxu0 0
        %588 = vmatpush2.bf16.msra.mxu0 0
        %589 = vmatprep.subr.bf16.mxu0 0
        %590 = vmatpush2.bf16.msra.mxu0 0
        %591 = vmatprep.subr.bf16.mxu0 0
        %592 = vmatpush2.bf16.msra.mxu0 0
        %593 = vmatprep.subr.bf16.mxu0 0
        %594 = vmatpush2.bf16.msra.mxu0 0
        %595 = vmatprep.subr.bf16.mxu0 0
        %596 = vmatpush2.bf16.msra.mxu0 0
        %597 = vmatprep.mubr.bf16.mxu0 0
        %598 = vmatmul.mubr.bf16.gmra.mxu0 %v560
        %v599 = vpop.f32.mrf.mxu0
        %v600 = vadd.f32 0.0, %v599
        %v601 = vpop.f32.mrf.mxu0
        %v602 = vpop.f32.mrf.mxu0
        %v603 = vadd.f32 0.0, %v602
        %v604 = vpop.f32.mrf.mxu0
        %605 = vmatprep.mubr.bf16.mxu0 0
        %606 = vmatmul.mubr.bf16.gmra.mxu0 %v563
        %v607 = vpop.f32.mrf.mxu0
        %v608 = vadd.f32 0.0, %v607
        %v609 = vpop.f32.mrf.mxu0
        %v610 = vpop.f32.mrf.mxu0
        %v611 = vadd.f32 0.0, %v610
        %v612 = vpop.f32.mrf.mxu0
        %613 = vdwg.mxu0
        %v614 = vrcp.pop %v535
        %v615 = vmul.f32 %v600, %v614
        %v616 = vrcp.pop %v538
        %v617 = vmul.f32 %v603, %v616
        %v618 = vrcp.pop %v541
        %v619 = vmul.f32 %v608, %v618
        %v620 = vrcp.pop %v544
        %v621 = vmul.f32 %v611, %v620
        %622 = vrot.lane.b32.xlu0 %v426, 64
        %v623 = vpop.permute.xlu0 %622
        %624 = vrot.lane.b32.xlu0 %v427, 64
        %v625 = vpop.permute.xlu0 %624
        %626 = vrot.lane.b32.xlu0 %v436, 64
        %v627 = vpop.permute.xlu0 %626
        %628 = vrot.lane.b32.xlu0 %v437, 64
        %v629 = vpop.permute.xlu0 %628
        %v631 = vsel %vm438, %v623, 0
        %v634 = vsel %vm438, %v625, 0
        %v637 = vsel %vm438, %v627, 0
        %v640 = vsel %vm438, %v629, 0
        %642 = vmatprep.subr.bf16.mxu0 0
        %643 = vmatpush1.bf16.xpose.msra.mxu0 0
        %644 = vmatprep.subr.bf16.mxu0 0
        %645 = vmatpush1.bf16.xpose.msra.mxu0 0
        %646 = vmatprep.subr.bf16.mxu0 0
        %647 = vmatpush1.bf16.xpose.msra.mxu0 0
        %648 = vmatprep.subr.bf16.mxu0 0
        %649 = vmatpush1.bf16.xpose.msra.mxu0 0
        %650 = vmatprep.subr.bf16.mxu0 0
        %651 = vmatpush1.bf16.xpose.msra.mxu0 0
        %652 = vmatprep.subr.bf16.mxu0 0
        %653 = vmatpush1.bf16.xpose.msra.mxu0 0
        %654 = vmatprep.subr.bf16.mxu0 0
        %655 = vmatpush1.bf16.xpose.msra.mxu0 %v640
        %656 = vmatprep.subr.bf16.mxu0 0
        %657 = vmatpush1.bf16.xpose.msra.mxu0 %v637
        %658 = vmatprep.subr.bf16.mxu0 0
        %659 = vmatpush2.bf16.xpose.msra.mxu0 0
        %660 = vmatprep.subr.bf16.mxu0 0
        %661 = vmatpush2.bf16.xpose.msra.mxu0 0
        %662 = vmatprep.subr.bf16.mxu0 0
        %663 = vmatpush2.bf16.xpose.msra.mxu0 0
        %664 = vmatprep.subr.bf16.mxu0 0
        %665 = vmatpush2.bf16.xpose.msra.mxu0 0
        %666 = vmatprep.subr.bf16.mxu0 0
        %667 = vmatpush2.bf16.xpose.msra.mxu0 0
        %668 = vmatprep.subr.bf16.mxu0 0
        %669 = vmatpush2.bf16.xpose.msra.mxu0 0
        %670 = vmatprep.subr.bf16.mxu0 0
        %671 = vmatpush2.bf16.xpose.msra.mxu0 0
        %672 = vmatprep.subr.bf16.mxu0 0
        %673 = vmatpush2.bf16.xpose.msra.mxu0 0
        %674 = vmatprep.mubr.bf16.mxu0 0
        %675 = vmatmul.mubr.bf16.gmra.mxu0 %v631
        %v676 = vpop.f32.mrf.mxu0
        %v677 = vadd.f32 0.0, %v676
        %v678 = vpop.f32.mrf.mxu0
        %v679 = vpop.f32.mrf.mxu0
        %v680 = vadd.f32 0.0, %v679
        %v681 = vpop.f32.mrf.mxu0
        %682 = vmatprep.mubr.bf16.mxu0 0
        %683 = vmatmul.mubr.bf16.gmra.mxu0 %v634
        %v684 = vpop.f32.mrf.mxu0
        %v685 = vadd.f32 0.0, %v684
        %v686 = vpop.f32.mrf.mxu0
        %v687 = vpop.f32.mrf.mxu0
        %v688 = vadd.f32 0.0, %v687
        %v689 = vpop.f32.mrf.mxu0
        %690 = vdwg.mxu0
        %v691 = vmul.f32 %v677, 0.125
        %v692 = vmul.f32 %v680, 0.125
        %v693 = vmul.f32 %v685, 0.125
        %v694 = vmul.f32 %v688, 0.125
        %v695 = vadd.f32 %v691, %v405
        %v696 = vadd.f32 %v692, %v405
        %v697 = vadd.f32 %v693, %v405
        %v698 = vadd.f32 %v694, %v405
        %v699 = vsel %vm508, %v695, -inf
        %700 = vmax.xlane.f32.xlu0 %v699
        %v701 = vpop.xlane.xlu0 %700
        %v702 = vsel %vm508, %v696, -inf
        %703 = vmax.xlane.f32.xlu0 %v702
        %v704 = vpop.xlane.xlu0 %703
        %v705 = vsel %vm508, %v697, -inf
        %706 = vmax.xlane.f32.xlu0 %v705
        %v707 = vpop.xlane.xlu0 %706
        %v708 = vsel %vm508, %v698, -inf
        %709 = vmax.xlane.f32.xlu0 %v708
        %v710 = vpop.xlane.xlu0 %709
        %v711 = vsub.f32 %v695, %v701
        %v712 = vsub.f32 %v696, %v704
        %v713 = vsub.f32 %v697, %v707
        %v714 = vsub.f32 %v698, %v710
        %v715 = vmul.f32 %v711, 1.442695
        %v716 = vpow.pop %v715
        %v717 = vmul.f32 %v712, 1.442695
        %v718 = vpow.pop %v717
        %v719 = vmul.f32 %v713, 1.442695
        %v720 = vpow.pop %v719
        %v721 = vmul.f32 %v714, 1.442695
        %v722 = vpow.pop %v721
        %v723 = vsel %vm508, %v716, 0.0
        %724 = vadd.xlane.f32.xlu0 %v723
        %v725 = vpop.xlane.xlu0 %724
        %v726 = vsel %vm508, %v718, 0.0
        %727 = vadd.xlane.f32.xlu0 %v726
        %v728 = vpop.xlane.xlu0 %727
        %v729 = vsel %vm508, %v720, 0.0
        %730 = vadd.xlane.f32.xlu0 %v729
        %v731 = vpop.xlane.xlu0 %730
        %v732 = vsel %vm508, %v722, 0.0
        %733 = vadd.xlane.f32.xlu0 %v732
        %v734 = vpop.xlane.xlu0 %733
        %v735 = vpack.c.bf16 %v718, %v716
        %v736 = vpack.c.bf16 %v722, %v720
        %737 = vrot.lane.b32.xlu0 %v555, 64
        %v738 = vpop.permute.xlu0 %737
        %739 = vrot.lane.b32.xlu0 %v556, 64
        %v740 = vpop.permute.xlu0 %739
        %v744 = vsel %vm508, %v735, 0
        %v747 = vsel %vm508, %v736, 0
        %749 = vmatprep.subr.bf16.mxu0 0
        %750 = vmatpush1.bf16.msra.mxu0 0
        %751 = vmatprep.subr.bf16.mxu0 0
        %752 = vmatpush1.bf16.msra.mxu0 0
        %753 = vmatprep.subr.bf16.mxu0 0
        %754 = vmatpush1.bf16.msra.mxu0 0
        %755 = vmatprep.subr.bf16.mxu0 0
        %756 = vmatpush1.bf16.msra.mxu0 0
        %757 = vmatprep.subr.bf16.mxu0 0
        %758 = vmatpush1.bf16.msra.mxu0 0
        %759 = vmatprep.subr.bf16.mxu0 0
        %760 = vmatpush1.bf16.msra.mxu0 0
        %761 = vmatprep.subr.bf16.mxu0 0
        %762 = vmatpush1.bf16.msra.mxu0 %v740
        %763 = vmatprep.subr.bf16.mxu0 0
        %764 = vmatpush1.bf16.msra.mxu0 %v738
        %765 = vmatprep.subr.bf16.mxu0 0
        %766 = vmatpush2.bf16.msra.mxu0 0
        %767 = vmatprep.subr.bf16.mxu0 0
        %768 = vmatpush2.bf16.msra.mxu0 0
        %769 = vmatprep.subr.bf16.mxu0 0
        %770 = vmatpush2.bf16.msra.mxu0 0
        %771 = vmatprep.subr.bf16.mxu0 0
        %772 = vmatpush2.bf16.msra.mxu0 0
        %773 = vmatprep.subr.bf16.mxu0 0
        %774 = vmatpush2.bf16.msra.mxu0 0
        %775 = vmatprep.subr.bf16.mxu0 0
        %776 = vmatpush2.bf16.msra.mxu0 0
        %777 = vmatprep.subr.bf16.mxu0 0
        %778 = vmatpush2.bf16.msra.mxu0 0
        %779 = vmatprep.subr.bf16.mxu0 0
        %780 = vmatpush2.bf16.msra.mxu0 0
        %781 = vmatprep.mubr.bf16.mxu0 0
        %782 = vmatmul.mubr.bf16.gmra.mxu0 %v744
        %v783 = vpop.f32.mrf.mxu0
        %v784 = vadd.f32 0.0, %v783
        %v785 = vpop.f32.mrf.mxu0
        %v786 = vpop.f32.mrf.mxu0
        %v787 = vadd.f32 0.0, %v786
        %v788 = vpop.f32.mrf.mxu0
        %789 = vmatprep.mubr.bf16.mxu0 0
        %790 = vmatmul.mubr.bf16.gmra.mxu0 %v747
        %v791 = vpop.f32.mrf.mxu0
        %v792 = vadd.f32 0.0, %v791
        %v793 = vpop.f32.mrf.mxu0
        %v794 = vpop.f32.mrf.mxu0
        %v795 = vadd.f32 0.0, %v794
        %v796 = vpop.f32.mrf.mxu0
        %797 = vdwg.mxu0
        %v798 = vrcp.pop %v725
        %v799 = vmul.f32 %v784, %v798
        %v800 = vrcp.pop %v728
        %v801 = vmul.f32 %v787, %v800
        %v802 = vrcp.pop %v731
        %v803 = vmul.f32 %v792, %v802
        %v804 = vrcp.pop %v734
        %v805 = vmul.f32 %v795, %v804
        %v806 = vld [vmem:[%s339 + $0x4] sm:$0xf]
        %v807 = vld [vmem:[%s339 + $0xc] sm:$0xf]
        %v808 = vld [vmem:[%s339 + $0x14] sm:$0xf]
        %v809 = vld [vmem:[%s339 + $0x1c] sm:$0xf]
        %v810 = vld [vmem:[%s346 + $0x4] sm:$0xf]
        %v811 = vld [vmem:[%s346 + $0xc] sm:$0xf]
        %v812 = vld [vmem:[%s346 + $0x14] sm:$0xf]
        %v813 = vld [vmem:[%s346 + $0x1c] sm:$0xf]
        %v814 = vld [vmem:[%s353 + $0x4] sm:$0xf]
        %v815 = vld [vmem:[%s353 + $0xc] sm:$0xf]
        %v816 = vld [vmem:[%s353 + $0x14] sm:$0xf]
        %v817 = vld [vmem:[%s353 + $0x1c] sm:$0xf]
        %v822 = vunpack.c.l.b16 %v806
        %v823 = vunpack.c.l.b16 %v807
        %v824 = vunpack.c.l.b16 %v808
        %v825 = vunpack.c.l.b16 %v809
        %v826 = vpack.c.b16 %v823, %v822
        %v827 = vpack.c.b16 %v825, %v824
        %v832 = vunpack.c.l.b16 %v810
        %v833 = vunpack.c.l.b16 %v811
        %v834 = vunpack.c.l.b16 %v812
        %v835 = vunpack.c.l.b16 %v813
        %v836 = vpack.c.b16 %v833, %v832
        %v837 = vpack.c.b16 %v835, %v834
        %v839 = vsel %vm438, %v826, 0
        %v842 = vsel %vm438, %v827, 0
        %v845 = vsel %vm438, %v836, 0
        %v848 = vsel %vm438, %v837, 0
        %850 = vmatprep.subr.bf16.mxu0 0
        %851 = vmatpush1.bf16.xpose.msra.mxu0 0
        %852 = vmatprep.subr.bf16.mxu0 0
        %853 = vmatpush1.bf16.xpose.msra.mxu0 0
        %854 = vmatprep.subr.bf16.mxu0 0
        %855 = vmatpush1.bf16.xpose.msra.mxu0 0
        %856 = vmatprep.subr.bf16.mxu0 0
        %857 = vmatpush1.bf16.xpose.msra.mxu0 0
        %858 = vmatprep.subr.bf16.mxu0 0
        %859 = vmatpush1.bf16.xpose.msra.mxu0 0
        %860 = vmatprep.subr.bf16.mxu0 0
        %861 = vmatpush1.bf16.xpose.msra.mxu0 0
        %862 = vmatprep.subr.bf16.mxu0 0
        %863 = vmatpush1.bf16.xpose.msra.mxu0 %v848
        %864 = vmatprep.subr.bf16.mxu0 0
        %865 = vmatpush1.bf16.xpose.msra.mxu0 %v845
        %866 = vmatprep.subr.bf16.mxu0 0
        %867 = vmatpush2.bf16.xpose.msra.mxu0 0
        %868 = vmatprep.subr.bf16.mxu0 0
        %869 = vmatpush2.bf16.xpose.msra.mxu0 0
        %870 = vmatprep.subr.bf16.mxu0 0
        %871 = vmatpush2.bf16.xpose.msra.mxu0 0
        %872 = vmatprep.subr.bf16.mxu0 0
        %873 = vmatpush2.bf16.xpose.msra.mxu0 0
        %874 = vmatprep.subr.bf16.mxu0 0
        %875 = vmatpush2.bf16.xpose.msra.mxu0 0
        %876 = vmatprep.subr.bf16.mxu0 0
        %877 = vmatpush2.bf16.xpose.msra.mxu0 0
        %878 = vmatprep.subr.bf16.mxu0 0
        %879 = vmatpush2.bf16.xpose.msra.mxu0 0
        %880 = vmatprep.subr.bf16.mxu0 0
        %881 = vmatpush2.bf16.xpose.msra.mxu0 0
        %882 = vmatprep.mubr.bf16.mxu0 0
        %883 = vmatmul.mubr.bf16.gmra.mxu0 %v839
        %v884 = vpop.f32.mrf.mxu0
        %v885 = vadd.f32 0.0, %v884
        %v886 = vpop.f32.mrf.mxu0
        %v887 = vpop.f32.mrf.mxu0
        %v888 = vadd.f32 0.0, %v887
        %v889 = vpop.f32.mrf.mxu0
        %890 = vmatprep.mubr.bf16.mxu0 0
        %891 = vmatmul.mubr.bf16.gmra.mxu0 %v842
        %v892 = vpop.f32.mrf.mxu0
        %v893 = vadd.f32 0.0, %v892
        %v894 = vpop.f32.mrf.mxu0
        %v895 = vpop.f32.mrf.mxu0
        %v896 = vadd.f32 0.0, %v895
        %v897 = vpop.f32.mrf.mxu0
        %898 = vdwg.mxu0
        %v899 = vmul.f32 %v885, 0.125
        %v900 = vmul.f32 %v888, 0.125
        %v901 = vmul.f32 %v893, 0.125
        %v902 = vmul.f32 %v896, 0.125
        %v903 = vadd.f32 %v899, %v405
        %v904 = vadd.f32 %v900, %v405
        %v905 = vadd.f32 %v901, %v405
        %v906 = vadd.f32 %v902, %v405
        %v907 = vsel %vm508, %v903, -inf
        %908 = vmax.xlane.f32.xlu0 %v907
        %v909 = vpop.xlane.xlu0 %908
        %v910 = vsel %vm508, %v904, -inf
        %911 = vmax.xlane.f32.xlu0 %v910
        %v912 = vpop.xlane.xlu0 %911
        %v913 = vsel %vm508, %v905, -inf
        %914 = vmax.xlane.f32.xlu0 %v913
        %v915 = vpop.xlane.xlu0 %914
        %v916 = vsel %vm508, %v906, -inf
        %917 = vmax.xlane.f32.xlu0 %v916
        %v918 = vpop.xlane.xlu0 %917
        %v919 = vsub.f32 %v903, %v909
        %v920 = vsub.f32 %v904, %v912
        %v921 = vsub.f32 %v905, %v915
        %v922 = vsub.f32 %v906, %v918
        %v923 = vmul.f32 %v919, 1.442695
        %v924 = vpow.pop %v923
        %v925 = vmul.f32 %v920, 1.442695
        %v926 = vpow.pop %v925
        %v927 = vmul.f32 %v921, 1.442695
        %v928 = vpow.pop %v927
        %v929 = vmul.f32 %v922, 1.442695
        %v930 = vpow.pop %v929
        %v931 = vsel %vm508, %v924, 0.0
        %932 = vadd.xlane.f32.xlu0 %v931
        %v933 = vpop.xlane.xlu0 %932
        %v934 = vsel %vm508, %v926, 0.0
        %935 = vadd.xlane.f32.xlu0 %v934
        %v936 = vpop.xlane.xlu0 %935
        %v937 = vsel %vm508, %v928, 0.0
        %938 = vadd.xlane.f32.xlu0 %v937
        %v939 = vpop.xlane.xlu0 %938
        %v940 = vsel %vm508, %v930, 0.0
        %941 = vadd.xlane.f32.xlu0 %v940
        %v942 = vpop.xlane.xlu0 %941
        %v943 = vpack.c.bf16 %v926, %v924
        %v944 = vpack.c.bf16 %v930, %v928
        %v949 = vunpack.c.l.b16 %v814
        %v950 = vunpack.c.l.b16 %v815
        %v951 = vunpack.c.l.b16 %v816
        %v952 = vunpack.c.l.b16 %v817
        %v953 = vpack.c.b16 %v950, %v949
        %v954 = vpack.c.b16 %v952, %v951
        %v958 = vsel %vm508, %v943, 0
        %v961 = vsel %vm508, %v944, 0
        %963 = vmatprep.subr.bf16.mxu0 0
        %964 = vmatpush1.bf16.msra.mxu0 0
        %965 = vmatprep.subr.bf16.mxu0 0
        %966 = vmatpush1.bf16.msra.mxu0 0
        %967 = vmatprep.subr.bf16.mxu0 0
        %968 = vmatpush1.bf16.msra.mxu0 0
        %969 = vmatprep.subr.bf16.mxu0 0
        %970 = vmatpush1.bf16.msra.mxu0 0
        %971 = vmatprep.subr.bf16.mxu0 0
        %972 = vmatpush1.bf16.msra.mxu0 0
        %973 = vmatprep.subr.bf16.mxu0 0
        %974 = vmatpush1.bf16.msra.mxu0 0
        %975 = vmatprep.subr.bf16.mxu0 0
        %976 = vmatpush1.bf16.msra.mxu0 %v954
        %977 = vmatprep.subr.bf16.mxu0 0
        %978 = vmatpush1.bf16.msra.mxu0 %v953
        %979 = vmatprep.subr.bf16.mxu0 0
        %980 = vmatpush2.bf16.msra.mxu0 0
        %981 = vmatprep.subr.bf16.mxu0 0
        %982 = vmatpush2.bf16.msra.mxu0 0
        %983 = vmatprep.subr.bf16.mxu0 0
        %984 = vmatpush2.bf16.msra.mxu0 0
        %985 = vmatprep.subr.bf16.mxu0 0
        %986 = vmatpush2.bf16.msra.mxu0 0
        %987 = vmatprep.subr.bf16.mxu0 0
        %988 = vmatpush2.bf16.msra.mxu0 0
        %989 = vmatprep.subr.bf16.mxu0 0
        %990 = vmatpush2.bf16.msra.mxu0 0
        %991 = vmatprep.subr.bf16.mxu0 0
        %992 = vmatpush2.bf16.msra.mxu0 0
        %993 = vmatprep.subr.bf16.mxu0 0
        %994 = vmatpush2.bf16.msra.mxu0 0
        %995 = vmatprep.mubr.bf16.mxu0 0
        %996 = vmatmul.mubr.bf16.gmra.mxu0 %v958
        %v997 = vpop.f32.mrf.mxu0
        %v998 = vadd.f32 0.0, %v997
        %v999 = vpop.f32.mrf.mxu0
        %v1000 = vpop.f32.mrf.mxu0
        %v1001 = vadd.f32 0.0, %v1000
        %v1002 = vpop.f32.mrf.mxu0
        %1003 = vmatprep.mubr.bf16.mxu0 0
        %1004 = vmatmul.mubr.bf16.gmra.mxu0 %v961
        %v1005 = vpop.f32.mrf.mxu0
        %v1006 = vadd.f32 0.0, %v1005
        %v1007 = vpop.f32.mrf.mxu0
        %v1008 = vpop.f32.mrf.mxu0
        %v1009 = vadd.f32 0.0, %v1008
        %v1010 = vpop.f32.mrf.mxu0
        %1011 = vdwg.mxu0
        %v1012 = vrcp.pop %v933
        %v1013 = vmul.f32 %v998, %v1012
        %v1014 = vrcp.pop %v936
        %v1015 = vmul.f32 %v1001, %v1014
        %v1016 = vrcp.pop %v939
        %v1017 = vmul.f32 %v1006, %v1016
        %v1018 = vrcp.pop %v942
        %v1019 = vmul.f32 %v1009, %v1018
        %1020 = vrot.lane.b32.xlu0 %v826, 64
        %v1021 = vpop.permute.xlu0 %1020
        %1022 = vrot.lane.b32.xlu0 %v827, 64
        %v1023 = vpop.permute.xlu0 %1022
        %1024 = vrot.lane.b32.xlu0 %v836, 64
        %v1025 = vpop.permute.xlu0 %1024
        %1026 = vrot.lane.b32.xlu0 %v837, 64
        %v1027 = vpop.permute.xlu0 %1026
        %v1029 = vsel %vm438, %v1021, 0
        %v1032 = vsel %vm438, %v1023, 0
        %v1035 = vsel %vm438, %v1025, 0
        %v1038 = vsel %vm438, %v1027, 0
        %1040 = vmatprep.subr.bf16.mxu0 0
        %1041 = vmatpush1.bf16.xpose.msra.mxu0 0
        %1042 = vmatprep.subr.bf16.mxu0 0
        %1043 = vmatpush1.bf16.xpose.msra.mxu0 0
        %1044 = vmatprep.subr.bf16.mxu0 0
        %1045 = vmatpush1.bf16.xpose.msra.mxu0 0
        %1046 = vmatprep.subr.bf16.mxu0 0
        %1047 = vmatpush1.bf16.xpose.msra.mxu0 0
        %1048 = vmatprep.subr.bf16.mxu0 0
        %1049 = vmatpush1.bf16.xpose.msra.mxu0 0
        %1050 = vmatprep.subr.bf16.mxu0 0
        %1051 = vmatpush1.bf16.xpose.msra.mxu0 0
        %1052 = vmatprep.subr.bf16.mxu0 0
        %1053 = vmatpush1.bf16.xpose.msra.mxu0 %v1038
        %1054 = vmatprep.subr.bf16.mxu0 0
        %1055 = vmatpush1.bf16.xpose.msra.mxu0 %v1035
        %1056 = vmatprep.subr.bf16.mxu0 0
        %1057 = vmatpush2.bf16.xpose.msra.mxu0 0
        %1058 = vmatprep.subr.bf16.mxu0 0
        %1059 = vmatpush2.bf16.xpose.msra.mxu0 0
        %1060 = vmatprep.subr.bf16.mxu0 0
        %1061 = vmatpush2.bf16.xpose.msra.mxu0 0
        %1062 = vmatprep.subr.bf16.mxu0 0
        %1063 = vmatpush2.bf16.xpose.msra.mxu0 0
        %1064 = vmatprep.subr.bf16.mxu0 0
        %1065 = vmatpush2.bf16.xpose.msra.mxu0 0
        %1066 = vmatprep.subr.bf16.mxu0 0
        %1067 = vmatpush2.bf16.xpose.msra.mxu0 0
        %1068 = vmatprep.subr.bf16.mxu0 0
        %1069 = vmatpush2.bf16.xpose.msra.mxu0 0
        %1070 = vmatprep.subr.bf16.mxu0 0
        %1071 = vmatpush2.bf16.xpose.msra.mxu0 0
        %1072 = vmatprep.mubr.bf16.mxu0 0
        %1073 = vmatmul.mubr.bf16.gmra.mxu0 %v1029
        %v1074 = vpop.f32.mrf.mxu0
        %v1075 = vadd.f32 0.0, %v1074
        %v1076 = vpop.f32.mrf.mxu0
        %v1077 = vpop.f32.mrf.mxu0
        %v1078 = vadd.f32 0.0, %v1077
        %v1079 = vpop.f32.mrf.mxu0
        %1080 = vmatprep.mubr.bf16.mxu0 0
        %1081 = vmatmul.mubr.bf16.gmra.mxu0 %v1032
        %v1082 = vpop.f32.mrf.mxu0
        %v1083 = vadd.f32 0.0, %v1082
        %v1084 = vpop.f32.mrf.mxu0
        %v1085 = vpop.f32.mrf.mxu0
        %v1086 = vadd.f32 0.0, %v1085
        %v1087 = vpop.f32.mrf.mxu0
        %1088 = vdwg.mxu0
        %v1089 = vmul.f32 %v1075, 0.125
        %v1090 = vmul.f32 %v1078, 0.125
        %v1091 = vmul.f32 %v1083, 0.125
        %v1092 = vmul.f32 %v1086, 0.125
        %v1093 = vadd.f32 %v1089, %v405
        %v1094 = vadd.f32 %v1090, %v405
        %v1095 = vadd.f32 %v1091, %v405
        %v1096 = vadd.f32 %v1092, %v405
        %v1097 = vsel %vm508, %v1093, -inf
        %1098 = vmax.xlane.f32.xlu0 %v1097
        %v1099 = vpop.xlane.xlu0 %1098
        %v1100 = vsel %vm508, %v1094, -inf
        %1101 = vmax.xlane.f32.xlu0 %v1100
        %v1102 = vpop.xlane.xlu0 %1101
        %v1103 = vsel %vm508, %v1095, -inf
        %1104 = vmax.xlane.f32.xlu0 %v1103
        %v1105 = vpop.xlane.xlu0 %1104
        %v1106 = vsel %vm508, %v1096, -inf
        %1107 = vmax.xlane.f32.xlu0 %v1106
        %v1108 = vpop.xlane.xlu0 %1107
        %v1109 = vsub.f32 %v1093, %v1099
        %v1110 = vsub.f32 %v1094, %v1102
        %v1111 = vsub.f32 %v1095, %v1105
        %v1112 = vsub.f32 %v1096, %v1108
        %v1113 = vmul.f32 %v1109, 1.442695
        %v1114 = vpow.pop %v1113
        %v1115 = vmul.f32 %v1110, 1.442695
        %v1116 = vpow.pop %v1115
        %v1117 = vmul.f32 %v1111, 1.442695
        %v1118 = vpow.pop %v1117
        %v1119 = vmul.f32 %v1112, 1.442695
        %v1120 = vpow.pop %v1119
        %v1121 = vsel %vm508, %v1114, 0.0
        %1122 = vadd.xlane.f32.xlu0 %v1121
        %v1123 = vpop.xlane.xlu0 %1122
        %v1124 = vsel %vm508, %v1116, 0.0
        %1125 = vadd.xlane.f32.xlu0 %v1124
        %v1126 = vpop.xlane.xlu0 %1125
        %v1127 = vsel %vm508, %v1118, 0.0
        %1128 = vadd.xlane.f32.xlu0 %v1127
        %v1129 = vpop.xlane.xlu0 %1128
        %v1130 = vsel %vm508, %v1120, 0.0
        %1131 = vadd.xlane.f32.xlu0 %v1130
        %v1132 = vpop.xlane.xlu0 %1131
        %v1133 = vpack.c.bf16 %v1116, %v1114
        %v1134 = vpack.c.bf16 %v1120, %v1118
        %1135 = vrot.lane.b32.xlu0 %v953, 64
        %v1136 = vpop.permute.xlu0 %1135
        %1137 = vrot.lane.b32.xlu0 %v954, 64
        %v1138 = vpop.permute.xlu0 %1137
        %v1142 = vsel %vm508, %v1133, 0
        %v1145 = vsel %vm508, %v1134, 0
        %1147 = vmatprep.subr.bf16.mxu0 0
        %1148 = vmatpush1.bf16.msra.mxu0 0
        %1149 = vmatprep.subr.bf16.mxu0 0
        %1150 = vmatpush1.bf16.msra.mxu0 0
        %1151 = vmatprep.subr.bf16.mxu0 0
        %1152 = vmatpush1.bf16.msra.mxu0 0
        %1153 = vmatprep.subr.bf16.mxu0 0
        %1154 = vmatpush1.bf16.msra.mxu0 0
        %1155 = vmatprep.subr.bf16.mxu0 0
        %1156 = vmatpush1.bf16.msra.mxu0 0
        %1157 = vmatprep.subr.bf16.mxu0 0
        %1158 = vmatpush1.bf16.msra.mxu0 0
        %1159 = vmatprep.subr.bf16.mxu0 0
        %1160 = vmatpush1.bf16.msra.mxu0 %v1138
        %1161 = vmatprep.subr.bf16.mxu0 0
        %1162 = vmatpush1.bf16.msra.mxu0 %v1136
        %1163 = vmatprep.subr.bf16.mxu0 0
        %1164 = vmatpush2.bf16.msra.mxu0 0
        %1165 = vmatprep.subr.bf16.mxu0 0
        %1166 = vmatpush2.bf16.msra.mxu0 0
        %1167 = vmatprep.subr.bf16.mxu0 0
        %1168 = vmatpush2.bf16.msra.mxu0 0
        %1169 = vmatprep.subr.bf16.mxu0 0
        %1170 = vmatpush2.bf16.msra.mxu0 0
        %1171 = vmatprep.subr.bf16.mxu0 0
        %1172 = vmatpush2.bf16.msra.mxu0 0
        %1173 = vmatprep.subr.bf16.mxu0 0
        %1174 = vmatpush2.bf16.msra.mxu0 0
        %1175 = vmatprep.subr.bf16.mxu0 0
        %1176 = vmatpush2.bf16.msra.mxu0 0
        %1177 = vmatprep.subr.bf16.mxu0 0
        %1178 = vmatpush2.bf16.msra.mxu0 0
        %1179 = vmatprep.mubr.bf16.mxu0 0
        %1180 = vmatmul.mubr.bf16.gmra.mxu0 %v1142
        %v1181 = vpop.f32.mrf.mxu0
        %v1182 = vadd.f32 0.0, %v1181
        %v1183 = vpop.f32.mrf.mxu0
        %v1184 = vpop.f32.mrf.mxu0
        %v1185 = vadd.f32 0.0, %v1184
        %v1186 = vpop.f32.mrf.mxu0
        %1187 = vmatprep.mubr.bf16.mxu0 0
        %1188 = vmatmul.mubr.bf16.gmra.mxu0 %v1145
        %v1189 = vpop.f32.mrf.mxu0
        %v1190 = vadd.f32 0.0, %v1189
        %v1191 = vpop.f32.mrf.mxu0
        %v1192 = vpop.f32.mrf.mxu0
        %v1193 = vadd.f32 0.0, %v1192
        %v1194 = vpop.f32.mrf.mxu0
        %1195 = vdwg.mxu0
        %v1196 = vrcp.pop %v1123
        %v1197 = vmul.f32 %v1182, %v1196
        %v1198 = vrcp.pop %v1126
        %v1199 = vmul.f32 %v1185, %v1198
        %v1200 = vrcp.pop %v1129
        %v1201 = vmul.f32 %v1190, %v1200
        %v1202 = vrcp.pop %v1132
        %v1203 = vmul.f32 %v1193, %v1202
        %1208 = vrot.lane.b32.xlu0 %v799, 64
        %v1209 = vpop.permute.xlu0 %1208
        %1210 = vrot.lane.b32.xlu0 %v801, 64
        %v1211 = vpop.permute.xlu0 %1210
        %1212 = vrot.lane.b32.xlu0 %v803, 64
        %v1213 = vpop.permute.xlu0 %1212
        %1214 = vrot.lane.b32.xlu0 %v805, 64
        %v1215 = vpop.permute.xlu0 %1214
        %1224 = vrot.lane.b32.xlu0 %v1197, 64
        %v1225 = vpop.permute.xlu0 %1224
        %1226 = vrot.lane.b32.xlu0 %v1199, 64
        %v1227 = vpop.permute.xlu0 %1226
        %1228 = vrot.lane.b32.xlu0 %v1201, 64
        %v1229 = vpop.permute.xlu0 %1228
        %1230 = vrot.lane.b32.xlu0 %v1203, 64
        %v1231 = vpop.permute.xlu0 %1230
        %v1236 = vsel %vm438, %v615, %v1209
        %v1237 = vsel %vm438, %v617, %v1211
        %v1238 = vsel %vm438, %v619, %v1213
        %v1239 = vsel %vm438, %v621, %v1215
        %v1240 = vsel %vm438, %v1013, %v1225
        %v1241 = vsel %vm438, %v1015, %v1227
        %v1242 = vsel %vm438, %v1017, %v1229
        %v1243 = vsel %vm438, %v1019, %v1231
        %v1244 = vpack.c.bf16 %v1237, %v1236
        %v1245 = vpack.c.bf16 %v1241, %v1240
        %v1246 = vpack.c.bf16 %v1239, %v1238
        %v1247 = vpack.c.bf16 %v1243, %v1242
        %v1252 = vunpack.c.l.b16 %v1244
        %v1253 = vunpack.c.l.b16 %v1245
        %v1254 = vunpack.c.h.b16 %v1244
        %v1255 = vunpack.c.h.b16 %v1245
        %v1256 = vunpack.c.l.b16 %v1246
        %v1257 = vunpack.c.l.b16 %v1247
        %v1258 = vunpack.c.h.b16 %v1246
        %v1259 = vunpack.c.h.b16 %v1247
        %v1260 = vpack.c.b16 %v1253, %v1252
        %v1261 = vpack.c.b16 %v1255, %v1254
        %v1262 = vpack.c.b16 %v1257, %v1256
        %v1263 = vpack.c.b16 %v1259, %v1258
        %1268 = vst [vmem:[%s399] sm:$0xff] %v1260
        %1269 = vst [vmem:[%s399 + $0x8] sm:$0xff] %v1261
        %1270 = vst [vmem:[%s399 + $0x10] sm:$0xff] %v1262
        %1271 = vst [vmem:[%s399 + $0x18] sm:$0xff] %v1263
        %s1272 = smul.u32 2, %s19
        %p1273 = scmp.lt.s32.totalorder %s18, 1
        %s1274 = scalar_select %p1273, %s18, 1
        %p1275 = scmp.lt.s32.totalorder %s1272, 1
        %s1276 = scalar_select %p1275, %s1272, 1
        %s1277 = smul.addr %s1274, 8
        %s1278 = sadd.s32 %s1276, %s1277
        %s1279 = smul.addr %s1278, 4
        %s1280 = scalar_lea.vmem %s3, %s1279
        // Predicated region
        $region147: #{vit_forward.12} parent=133 // pred_check
          %p1281 = pneg %p134
        $region148: #{vit_forward.12} parent=133 // pred_check_branch
          %1283 = sbr.rel (%p1281) target = $region150
        $region149: #{vit_forward.12} parent=133 // pred_region
          %s1284 = smul.u32 2, %s19
        $region150: #{vit_forward.12} parent=133 // pred_fallthru
          _
      $region134: #{vit_forward.12} parent=5 // pred_fallthru
        _
      %p1285 = scmp.le.s32.totalorder 2, %s9
      // Predicated region
      $region151: #{vit_forward.12} parent=5 // pred_check
        %p1286 = pneg %p1285
      $region152: #{vit_forward.12} parent=5 // pred_check_branch
        %1288 = sbr.rel (%p1286) target = $region154
      $region153: #{vit_forward.12} parent=5 // pred_region
        %s1289 = ssub.s32 %s9, 2
        // Predicated region
        $region155: #{vit_forward.12} parent=153 // pred_check
          %p1290 = pneg %p140
        $region156: #{vit_forward.12} parent=153 // pred_check_branch
          %1292 = sbr.rel (%p1290) target = $region158
        $region157: #{vit_forward.12} parent=153 // pred_region
          %s1293 = smul.u32 2, %s21
          %p1294 = scmp.lt.s32.totalorder %s20, 1
          %s1295 = scalar_select %p1294, %s20, 1
          %p1296 = scmp.lt.s32.totalorder %s1293, 1
          %s1297 = scalar_select %p1296, %s1293, 1
          %s1298 = smul.addr %s1295, 8
          %s1299 = sadd.s32 %s1297, %s1298
          %s1300 = smul.addr %s1299, 4
          %s1301 = scalar_lea.vmem %s3, %s1300
        $region158: #{vit_forward.12} parent=153 // pred_fallthru
          _
      $region154: #{vit_forward.12} parent=5 // pred_fallthru
        _
    $region6: #{vit_forward.12} parent=1 // loop_footer
      %s13 = sadd.s32 1, %s9
    $region7: #{vit_forward.12} parent=1 // loop_footer_branch
      %8 = sbr.rel target = $region3
    $region8: #{vit_forward.12} parent=1 // loop_exit
      _

// kernel: vit_forward.14
$region0: #{vit_forward.14}
  #allocation0 [shape = 'u32[]', space=smem, size = 0x4, offset = 0x4, fixed_abs, tag = 'smem constant byte address 0x4 - core index']
  #allocation1 [shape = 'u32[144,128]{1,0:T(1,128)}', space=vmem, size = 0x12000, scoped, tag = 'internal scratch']
  %s0 = inlined_call_operand.vmem [shape: bf16[64,256], index: 0, kind: input, shape index: {}]
  %s1 = inlined_call_operand.vmem [shape: bf16[256,512], index: 1, kind: input, shape index: {}]
  %s2 = inlined_call_operand.vmem [shape: f32[1,512], index: 2, kind: input, shape index: {}]
  %s3 = inlined_call_operand.vmem [shape: bf16[512,256], index: 3, kind: input, shape index: {}]
  %s4 = inlined_call_operand.vmem [shape: f32[1,256], index: 4, kind: input, shape index: {}]
  %s5 = inlined_call_operand.vmem [shape: f32[1,256], index: 5, kind: input, shape index: {}]
  %s6 = inlined_call_operand.vmem [shape: f32[1,256], index: 6, kind: input, shape index: {}]
  %s7 = inlined_call_operand.vmem [shape: bf16[64,256], index: 7, kind: output, shape index: {}]
  %s8 = sld [smem:[#allocation0]]
  $region38: #{vit_forward.14} parent=0
    _
  %s10 = ssub.s32 1, %s8
  %s11 = scalar_select 0, %s10, %s8
  // Predicated region
  $region2: #{vit_forward.14} parent=0 // pred_check
    _
  $region3: #{vit_forward.14} parent=0 // pred_check_branch
    %13 = sbr.rel (0) target = $region5
  $region4: #{vit_forward.14} parent=0 // pred_region
    _
  $region5: #{vit_forward.14} parent=0 // pred_fallthru
    _
  // Predicated region
  $region6: #{vit_forward.14} parent=0 // pred_check
    _
  $region7: #{vit_forward.14} parent=0 // pred_check_branch
    %15 = sbr.rel (0) target = $region9
  $region8: #{vit_forward.14} parent=0 // pred_region
    _
  $region9: #{vit_forward.14} parent=0 // pred_fallthru
    _
  // Predicated region
  $region10: #{vit_forward.14} parent=0 // pred_check
    _
  $region11: #{vit_forward.14} parent=0 // pred_check_branch
    %17 = sbr.rel (0) target = $region13
  $region12: #{vit_forward.14} parent=0 // pred_region
    _
  $region13: #{vit_forward.14} parent=0 // pred_fallthru
    _
  // Predicated region
  $region14: #{vit_forward.14} parent=0 // pred_check
    _
  $region15: #{vit_forward.14} parent=0 // pred_check_branch
    %19 = sbr.rel (0) target = $region17
  $region16: #{vit_forward.14} parent=0 // pred_region
    _
  $region17: #{vit_forward.14} parent=0 // pred_fallthru
    _
  // Predicated region
  $region18: #{vit_forward.14} parent=0 // pred_check
    _
  $region19: #{vit_forward.14} parent=0 // pred_check_branch
    %21 = sbr.rel (0) target = $region21
  $region20: #{vit_forward.14} parent=0 // pred_region
    _
  $region21: #{vit_forward.14} parent=0 // pred_fallthru
    _
  // Predicated region
  $region22: #{vit_forward.14} parent=0 // pred_check
    _
  $region23: #{vit_forward.14} parent=0 // pred_check_branch
    %23 = sbr.rel (0) target = $region25
  $region24: #{vit_forward.14} parent=0 // pred_region
    _
  $region25: #{vit_forward.14} parent=0 // pred_fallthru
    _
  // Predicated region
  $region26: #{vit_forward.14} parent=0 // pred_check
    _
  $region27: #{vit_forward.14} parent=0 // pred_check_branch
    %25 = sbr.rel (0) target = $region29
  $region28: #{vit_forward.14} parent=0 // pred_region
    _
  $region29: #{vit_forward.14} parent=0 // pred_fallthru
    _
  %v26 = vld [vmem:[%s0] sm:$0xff]
  %v27 = vld [vmem:[%s0 + $0x8] sm:$0xff]
  %v28 = vld [vmem:[%s0 + $0x10] sm:$0xff]
  %v29 = vld [vmem:[%s0 + $0x18] sm:$0xff]
  %v30 = vld [vmem:[%s0 + $0x20] sm:$0xff]
  %v31 = vld [vmem:[%s0 + $0x28] sm:$0xff]
  %v32 = vld [vmem:[%s0 + $0x30] sm:$0xff]
  %v33 = vld [vmem:[%s0 + $0x38] sm:$0xff]
  %v34 = vunpack.c.l.bf16 %v26
  %v35 = vunpack.c.h.bf16 %v26
  %v36 = vunpack.c.l.bf16 %v27
  %v37 = vunpack.c.h.bf16 %v27
  %v38 = vunpack.c.l.bf16 %v28
  %v39 = vunpack.c.h.bf16 %v28
  %v40 = vunpack.c.l.bf16 %v29
  %v41 = vunpack.c.h.bf16 %v29
  %v42 = vunpack.c.l.bf16 %v30
  %v43 = vunpack.c.h.bf16 %v30
  %v44 = vunpack.c.l.bf16 %v31
  %v45 = vunpack.c.h.bf16 %v31
  %v46 = vunpack.c.l.bf16 %v32
  %v47 = vunpack.c.h.bf16 %v32
  %v48 = vunpack.c.l.bf16 %v33
  %v49 = vunpack.c.h.bf16 %v33
  %v50 = vadd.f32 %v34, %v35
  %51 = vadd.xlane.f32.xlu0 %v50
  %v52 = vpop.xlane.xlu0 %51
  %v53 = vadd.f32 %v36, %v37
  %54 = vadd.xlane.f32.xlu0 %v53
  %v55 = vpop.xlane.xlu0 %54
  %v56 = vadd.f32 %v38, %v39
  %57 = vadd.xlane.f32.xlu0 %v56
  %v58 = vpop.xlane.xlu0 %57
  %v59 = vadd.f32 %v40, %v41
  %60 = vadd.xlane.f32.xlu0 %v59
  %v61 = vpop.xlane.xlu0 %60
  %v62 = vadd.f32 %v42, %v43
  %63 = vadd.xlane.f32.xlu0 %v62
  %v64 = vpop.xlane.xlu0 %63
  %v65 = vadd.f32 %v44, %v45
  %66 = vadd.xlane.f32.xlu0 %v65
  %v67 = vpop.xlane.xlu0 %66
  %v68 = vadd.f32 %v46, %v47
  %69 = vadd.xlane.f32.xlu0 %v68
  %v70 = vpop.xlane.xlu0 %69
  %v71 = vadd.f32 %v48, %v49
  %72 = vadd.xlane.f32.xlu0 %v71
  %v73 = vpop.xlane.xlu0 %72
  %v74 = vrcp.pop 256.0
  %v75 = vmul.f32 %v52, %v74
  %v76 = vmul.f32 %v55, %v74
  %v77 = vmul.f32 %v58, %v74
  %v78 = vmul.f32 %v61, %v74
  %v79 = vmul.f32 %v64, %v74
  %v80 = vmul.f32 %v67, %v74
  %v81 = vmul.f32 %v70, %v74
  %v82 = vmul.f32 %v73, %v74
  %v83 = vsub.f32 %v34, %v75
  %v84 = vsub.f32 %v35, %v75
  %v85 = vsub.f32 %v36, %v76
  %v86 = vsub.f32 %v37, %v76
  %v87 = vsub.f32 %v38, %v77
  %v88 = vsub.f32 %v39, %v77
  %v89 = vsub.f32 %v40, %v78
  %v90 = vsub.f32 %v41, %v78
  %v91 = vsub.f32 %v42, %v79
  %v92 = vsub.f32 %v43, %v79
  %v93 = vsub.f32 %v44, %v80
  %v94 = vsub.f32 %v45, %v80
  %v95 = vsub.f32 %v46, %v81
  %v96 = vsub.f32 %v47, %v81
  %v97 = vsub.f32 %v48, %v82
  %v98 = vsub.f32 %v49, %v82
  %v99 = vmul.f32 %v83, %v83
  %v100 = vmul.f32 %v84, %v84
  %v101 = vmul.f32 %v85, %v85
  %v102 = vmul.f32 %v86, %v86
  %v103 = vmul.f32 %v87, %v87
  %v104 = vmul.f32 %v88, %v88
  %v105 = vmul.f32 %v89, %v89
  %v106 = vmul.f32 %v90, %v90
  %v107 = vmul.f32 %v91, %v91
  %v108 = vmul.f32 %v92, %v92
  %v109 = vmul.f32 %v93, %v93
  %v110 = vmul.f32 %v94, %v94
  %v111 = vmul.f32 %v95, %v95
  %v112 = vmul.f32 %v96, %v96
  %v113 = vmul.f32 %v97, %v97
  %v114 = vmul.f32 %v98, %v98
  %v115 = vadd.f32 %v99, %v100
  %116 = vadd.xlane.f32.xlu0 %v115
  %v117 = vpop.xlane.xlu0 %116
  %v118 = vadd.f32 %v101, %v102
  %119 = vadd.xlane.f32.xlu0 %v118
  %v120 = vpop.xlane.xlu0 %119
  %v121 = vadd.f32 %v103, %v104
  %122 = vadd.xlane.f32.xlu0 %v121
  %v123 = vpop.xlane.xlu0 %122
  %v124 = vadd.f32 %v105, %v106
  %125 = vadd.xlane.f32.xlu0 %v124
  %v126 = vpop.xlane.xlu0 %125
  %v127 = vadd.f32 %v107, %v108
  %128 = vadd.xlane.f32.xlu0 %v127
  %v129 = vpop.xlane.xlu0 %128
  %v130 = vadd.f32 %v109, %v110
  %131 = vadd.xlane.f32.xlu0 %v130
  %v132 = vpop.xlane.xlu0 %131
  %v133 = vadd.f32 %v111, %v112
  %134 = vadd.xlane.f32.xlu0 %v133
  %v135 = vpop.xlane.xlu0 %134
  %v136 = vadd.f32 %v113, %v114
  %137 = vadd.xlane.f32.xlu0 %v136
  %v138 = vpop.xlane.xlu0 %137
  %v139 = vmul.f32 %v117, %v74
  %v140 = vmul.f32 %v120, %v74
  %v141 = vmul.f32 %v123, %v74
  %v142 = vmul.f32 %v126, %v74
  %v143 = vmul.f32 %v129, %v74
  %v144 = vmul.f32 %v132, %v74
  %v145 = vmul.f32 %v135, %v74
  %v146 = vmul.f32 %v138, %v74
  %v147 = vadd.f32 %v139, 1e-06
  %v148 = vadd.f32 %v140, 1e-06
  %v149 = vadd.f32 %v141, 1e-06
  %v150 = vadd.f32 %v142, 1e-06
  %v151 = vadd.f32 %v143, 1e-06
  %v152 = vadd.f32 %v144, 1e-06
  %v153 = vadd.f32 %v145, 1e-06
  %v154 = vadd.f32 %v146, 1e-06
  %v155 = vrsqrt.pop %v147
  %v156 = vrsqrt.pop %v148
  %v157 = vrsqrt.pop %v149
  %v158 = vrsqrt.pop %v150
  %v159 = vrsqrt.pop %v151
  %v160 = vrsqrt.pop %v152
  %v161 = vrsqrt.pop %v153
  %v162 = vrsqrt.pop %v154
  %v163 = vmul.f32 %v83, %v155
  %v164 = vmul.f32 %v84, %v155
  %v165 = vmul.f32 %v85, %v156
  %v166 = vmul.f32 %v86, %v156
  %v167 = vmul.f32 %v87, %v157
  %v168 = vmul.f32 %v88, %v157
  %v169 = vmul.f32 %v89, %v158
  %v170 = vmul.f32 %v90, %v158
  %v171 = vmul.f32 %v91, %v159
  %v172 = vmul.f32 %v92, %v159
  %v173 = vmul.f32 %v93, %v160
  %v174 = vmul.f32 %v94, %v160
  %v175 = vmul.f32 %v95, %v161
  %v176 = vmul.f32 %v96, %v161
  %v177 = vmul.f32 %v97, %v162
  %v178 = vmul.f32 %v98, %v162
  %v179 = vld [vmem:[%s5] sm:$0x3]
  %v181 = vlaneseq
  %v182 = vshrl.u32 %v181, 7
  %v183 = vsub.s32 0, %v182
  %v184 = vrot.slane %v179, %v183
  %v185 = vlaneseq
  %v186 = vshrl.u32 %v185, 7
  %v187 = vsub.s32 1, %v186
  %v188 = vrot.slane %v179, %v187
  %v191 = vmul.f32 %v163, %v184
  %v192 = vmul.f32 %v164, %v188
  %v193 = vmul.f32 %v165, %v184
  %v194 = vmul.f32 %v166, %v188
  %v195 = vmul.f32 %v167, %v184
  %v196 = vmul.f32 %v168, %v188
  %v197 = vmul.f32 %v169, %v184
  %v198 = vmul.f32 %v170, %v188
  %v199 = vmul.f32 %v171, %v184
  %v200 = vmul.f32 %v172, %v188
  %v201 = vmul.f32 %v173, %v184
  %v202 = vmul.f32 %v174, %v188
  %v203 = vmul.f32 %v175, %v184
  %v204 = vmul.f32 %v176, %v188
  %v205 = vmul.f32 %v177, %v184
  %v206 = vmul.f32 %v178, %v188
  %v207 = vld [vmem:[%s6] sm:$0x3]
  %v209 = vlaneseq
  %v210 = vshrl.u32 %v209, 7
  %v211 = vsub.s32 0, %v210
  %v212 = vrot.slane %v207, %v211
  %v213 = vlaneseq
  %v214 = vshrl.u32 %v213, 7
  %v215 = vsub.s32 1, %v214
  %v216 = vrot.slane %v207, %v215
  %v219 = vadd.f32 %v191, %v212
  %v220 = vadd.f32 %v192, %v216
  %v221 = vadd.f32 %v193, %v212
  %v222 = vadd.f32 %v194, %v216
  %v223 = vadd.f32 %v195, %v212
  %v224 = vadd.f32 %v196, %v216
  %v225 = vadd.f32 %v197, %v212
  %v226 = vadd.f32 %v198, %v216
  %v227 = vadd.f32 %v199, %v212
  %v228 = vadd.f32 %v200, %v216
  %v229 = vadd.f32 %v201, %v212
  %v230 = vadd.f32 %v202, %v216
  %v231 = vadd.f32 %v203, %v212
  %v232 = vadd.f32 %v204, %v216
  %v233 = vadd.f32 %v205, %v212
  %v234 = vadd.f32 %v206, %v216
  %v235 = vpack.c.bf16 %v221, %v219
  %v236 = vpack.c.bf16 %v222, %v220
  %v237 = vpack.c.bf16 %v225, %v223
  %v238 = vpack.c.bf16 %v226, %v224
  %v239 = vpack.c.bf16 %v229, %v227
  %v240 = vpack.c.bf16 %v230, %v228
  %v241 = vpack.c.bf16 %v233, %v231
  %v242 = vpack.c.bf16 %v234, %v232
  %v243 = vld [vmem:[%s1] sm:$0xff]
  %v244 = vld [vmem:[%s1 + $0x8] sm:$0xff]
  %v245 = vld [vmem:[%s1 + $0x10] sm:$0xff]
  %v246 = vld [vmem:[%s1 + $0x18] sm:$0xff]
  %v247 = vld [vmem:[%s1 + $0x20] sm:$0xff]
  %v248 = vld [vmem:[%s1 + $0x28] sm:$0xff]
  %v249 = vld [vmem:[%s1 + $0x30] sm:$0xff]
  %v250 = vld [vmem:[%s1 + $0x38] sm:$0xff]
  %v251 = vld [vmem:[%s1 + $0x40] sm:$0xff]
  %v252 = vld [vmem:[%s1 + $0x48] sm:$0xff]
  %v253 = vld [vmem:[%s1 + $0x50] sm:$0xff]
  %v254 = vld [vmem:[%s1 + $0x58] sm:$0xff]
  %v255 = vld [vmem:[%s1 + $0x60] sm:$0xff]
  %v256 = vld [vmem:[%s1 + $0x68] sm:$0xff]
  %v257 = vld [vmem:[%s1 + $0x70] sm:$0xff]
  %v258 = vld [vmem:[%s1 + $0x78] sm:$0xff]
  %v259 = vld [vmem:[%s1 + $0x80] sm:$0xff]
  %v260 = vld [vmem:[%s1 + $0x88] sm:$0xff]
  %v261 = vld [vmem:[%s1 + $0x90] sm:$0xff]
  %v262 = vld [vmem:[%s1 + $0x98] sm:$0xff]
  %v263 = vld [vmem:[%s1 + $0xa0] sm:$0xff]
  %v264 = vld [vmem:[%s1 + $0xa8] sm:$0xff]
  %v265 = vld [vmem:[%s1 + $0xb0] sm:$0xff]
  %v266 = vld [vmem:[%s1 + $0xb8] sm:$0xff]
  %v267 = vld [vmem:[%s1 + $0xc0] sm:$0xff]
  %v268 = vld [vmem:[%s1 + $0xc8] sm:$0xff]
  %v269 = vld [vmem:[%s1 + $0xd0] sm:$0xff]
  %v270 = vld [vmem:[%s1 + $0xd8] sm:$0xff]
  %v271 = vld [vmem:[%s1 + $0xe0] sm:$0xff]
  %v272 = vld [vmem:[%s1 + $0xe8] sm:$0xff]
  %v273 = vld [vmem:[%s1 + $0xf0] sm:$0xff]
  %v274 = vld [vmem:[%s1 + $0xf8] sm:$0xff]
  %v275 = vld [vmem:[%s1 + $0x100] sm:$0xff]
  %v276 = vld [vmem:[%s1 + $0x108] sm:$0xff]
  %v277 = vld [vmem:[%s1 + $0x110] sm:$0xff]
  %v278 = vld [vmem:[%s1 + $0x118] sm:$0xff]
  %v279 = vld [vmem:[%s1 + $0x120] sm:$0xff]
  %v280 = vld [vmem:[%s1 + $0x128] sm:$0xff]
  %v281 = vld [vmem:[%s1 + $0x130] sm:$0xff]
  %v282 = vld [vmem:[%s1 + $0x138] sm:$0xff]
  %v283 = vld [vmem:[%s1 + $0x140] sm:$0xff]
  %v284 = vld [vmem:[%s1 + $0x148] sm:$0xff]
  %v285 = vld [vmem:[%s1 + $0x150] sm:$0xff]
  %v286 = vld [vmem:[%s1 + $0x158] sm:$0xff]
  %v287 = vld [vmem:[%s1 + $0x160] sm:$0xff]
  %v288 = vld [vmem:[%s1 + $0x168] sm:$0xff]
  %v289 = vld [vmem:[%s1 + $0x170] sm:$0xff]
  %v290 = vld [vmem:[%s1 + $0x178] sm:$0xff]
  %v291 = vld [vmem:[%s1 + $0x180] sm:$0xff]
  %v292 = vld [vmem:[%s1 + $0x188] sm:$0xff]
  %v293 = vld [vmem:[%s1 + $0x190] sm:$0xff]
  %v294 = vld [vmem:[%s1 + $0x198] sm:$0xff]
  %v295 = vld [vmem:[%s1 + $0x1a0] sm:$0xff]
  %v296 = vld [vmem:[%s1 + $0x1a8] sm:$0xff]
  %v297 = vld [vmem:[%s1 + $0x1b0] sm:$0xff]
  %v298 = vld [vmem:[%s1 + $0x1b8] sm:$0xff]
  %v299 = vld [vmem:[%s1 + $0x1c0] sm:$0xff]
  %v300 = vld [vmem:[%s1 + $0x1c8] sm:$0xff]
  %v301 = vld [vmem:[%s1 + $0x1d0] sm:$0xff]
  %v302 = vld [vmem:[%s1 + $0x1d8] sm:$0xff]
  %v303 = vld [vmem:[%s1 + $0x1e0] sm:$0xff]
  %v304 = vld [vmem:[%s1 + $0x1e8] sm:$0xff]
  %v305 = vld [vmem:[%s1 + $0x1f0] sm:$0xff]
  %v306 = vld [vmem:[%s1 + $0x1f8] sm:$0xff]
  %v307 = vld [vmem:[%s2] sm:$0xf]
  %v309 = vlaneseq
  %v310 = vshrl.u32 %v309, 7
  %v311 = vsub.s32 0, %v310
  %v312 = vrot.slane %v307, %v311
  %v313 = vlaneseq
  %v314 = vshrl.u32 %v313, 7
  %v315 = vsub.s32 1, %v314
  %v316 = vrot.slane %v307, %v315
  %v317 = vlaneseq
  %v318 = vshrl.u32 %v317, 7
  %v319 = vsub.s32 2, %v318
  %v320 = vrot.slane %v307, %v319
  %v321 = vlaneseq
  %v322 = vshrl.u32 %v321, 7
  %v323 = vsub.s32 3, %v322
  %v324 = vrot.slane %v307, %v323
  %v393 = vunpack.c.l.b16 %v243
  %v394 = vunpack.c.h.b16 %v243
  %v395 = vunpack.c.l.b16 %v244
  %v396 = vunpack.c.h.b16 %v244
  %v397 = vunpack.c.l.b16 %v245
  %v398 = vunpack.c.h.b16 %v245
  %v399 = vunpack.c.l.b16 %v246
  %v400 = vunpack.c.h.b16 %v246
  %v401 = vunpack.c.l.b16 %v247
  %v402 = vunpack.c.h.b16 %v247
  %v403 = vunpack.c.l.b16 %v248
  %v404 = vunpack.c.h.b16 %v248
  %v405 = vunpack.c.l.b16 %v249
  %v406 = vunpack.c.h.b16 %v249
  %v407 = vunpack.c.l.b16 %v250
  %v408 = vunpack.c.h.b16 %v250
  %v409 = vunpack.c.l.b16 %v251
  %v410 = vunpack.c.h.b16 %v251
  %v411 = vunpack.c.l.b16 %v252
  %v412 = vunpack.c.h.b16 %v252
  %v413 = vunpack.c.l.b16 %v253
  %v414 = vunpack.c.h.b16 %v253
  %v415 = vunpack.c.l.b16 %v254
  %v416 = vunpack.c.h.b16 %v254
  %v417 = vunpack.c.l.b16 %v255
  %v418 = vunpack.c.h.b16 %v255
  %v419 = vunpack.c.l.b16 %v256
  %v420 = vunpack.c.h.b16 %v256
  %v421 = vunpack.c.l.b16 %v257
  %v422 = vunpack.c.h.b16 %v257
  %v423 = vunpack.c.l.b16 %v258
  %v424 = vunpack.c.h.b16 %v258
  %v425 = vunpack.c.l.b16 %v259
  %v426 = vunpack.c.h.b16 %v259
  %v427 = vunpack.c.l.b16 %v260
  %v428 = vunpack.c.h.b16 %v260
  %v429 = vunpack.c.l.b16 %v261
  %v430 = vunpack.c.h.b16 %v261
  %v431 = vunpack.c.l.b16 %v262
  %v432 = vunpack.c.h.b16 %v262
  %v433 = vunpack.c.l.b16 %v263
  %v434 = vunpack.c.h.b16 %v263
  %v435 = vunpack.c.l.b16 %v264
  %v436 = vunpack.c.h.b16 %v264
  %v437 = vunpack.c.l.b16 %v265
  %v438 = vunpack.c.h.b16 %v265
  %v439 = vunpack.c.l.b16 %v266
  %v440 = vunpack.c.h.b16 %v266
  %v441 = vunpack.c.l.b16 %v267
  %v442 = vunpack.c.h.b16 %v267
  %v443 = vunpack.c.l.b16 %v268
  %v444 = vunpack.c.h.b16 %v268
  %v445 = vunpack.c.l.b16 %v269
  %v446 = vunpack.c.h.b16 %v269
  %v447 = vunpack.c.l.b16 %v270
  %v448 = vunpack.c.h.b16 %v270
  %v449 = vunpack.c.l.b16 %v271
  %v450 = vunpack.c.h.b16 %v271
  %v451 = vunpack.c.l.b16 %v272
  %v452 = vunpack.c.h.b16 %v272
  %v453 = vunpack.c.l.b16 %v273
  %v454 = vunpack.c.h.b16 %v273
  %v455 = vunpack.c.l.b16 %v274
  %v456 = vunpack.c.h.b16 %v274
  %v457 = vunpack.c.l.b16 %v275
  %v458 = vunpack.c.h.b16 %v275
  %v459 = vunpack.c.l.b16 %v276
  %v460 = vunpack.c.h.b16 %v276
  %v461 = vunpack.c.l.b16 %v277
  %v462 = vunpack.c.h.b16 %v277
  %v463 = vunpack.c.l.b16 %v278
  %v464 = vunpack.c.h.b16 %v278
  %v465 = vunpack.c.l.b16 %v279
  %v466 = vunpack.c.h.b16 %v279
  %v467 = vunpack.c.l.b16 %v280
  %v468 = vunpack.c.h.b16 %v280
  %v469 = vunpack.c.l.b16 %v281
  %v470 = vunpack.c.h.b16 %v281
  %v471 = vunpack.c.l.b16 %v282
  %v472 = vunpack.c.h.b16 %v282
  %v473 = vunpack.c.l.b16 %v283
  %v474 = vunpack.c.h.b16 %v283
  %v475 = vunpack.c.l.b16 %v284
  %v476 = vunpack.c.h.b16 %v284
  %v477 = vunpack.c.l.b16 %v285
  %v478 = vunpack.c.h.b16 %v285
  %v479 = vunpack.c.l.b16 %v286
  %v480 = vunpack.c.h.b16 %v286
  %v481 = vunpack.c.l.b16 %v287
  %v482 = vunpack.c.h.b16 %v287
  %v483 = vunpack.c.l.b16 %v288
  %v484 = vunpack.c.h.b16 %v288
  %v485 = vunpack.c.l.b16 %v289
  %v486 = vunpack.c.h.b16 %v289
  %v487 = vunpack.c.l.b16 %v290
  %v488 = vunpack.c.h.b16 %v290
  %v489 = vunpack.c.l.b16 %v291
  %v490 = vunpack.c.h.b16 %v291
  %v491 = vunpack.c.l.b16 %v292
  %v492 = vunpack.c.h.b16 %v292
  %v493 = vunpack.c.l.b16 %v293
  %v494 = vunpack.c.h.b16 %v293
  %v495 = vunpack.c.l.b16 %v294
  %v496 = vunpack.c.h.b16 %v294
  %v497 = vunpack.c.l.b16 %v295
  %v498 = vunpack.c.h.b16 %v295
  %v499 = vunpack.c.l.b16 %v296
  %v500 = vunpack.c.h.b16 %v296
  %v501 = vunpack.c.l.b16 %v297
  %v502 = vunpack.c.h.b16 %v297
  %v503 = vunpack.c.l.b16 %v298
  %v504 = vunpack.c.h.b16 %v298
  %v505 = vunpack.c.l.b16 %v299
  %v506 = vunpack.c.h.b16 %v299
  %v507 = vunpack.c.l.b16 %v300
  %v508 = vunpack.c.h.b16 %v300
  %v509 = vunpack.c.l.b16 %v301
  %v510 = vunpack.c.h.b16 %v301
  %v511 = vunpack.c.l.b16 %v302
  %v512 = vunpack.c.h.b16 %v302
  %v513 = vunpack.c.l.b16 %v303
  %v514 = vunpack.c.h.b16 %v303
  %v515 = vunpack.c.l.b16 %v304
  %v516 = vunpack.c.h.b16 %v304
  %v517 = vunpack.c.l.b16 %v305
  %v518 = vunpack.c.h.b16 %v305
  %v519 = vunpack.c.l.b16 %v306
  %v520 = vunpack.c.h.b16 %v306
  %v521 = vpack.c.b16 %v397, %v393
  %v522 = vpack.c.b16 %v398, %v394
  %v523 = vpack.c.b16 %v399, %v395
  %v524 = vpack.c.b16 %v400, %v396
  %v525 = vpack.c.b16 %v405, %v401
  %v526 = vpack.c.b16 %v406, %v402
  %v527 = vpack.c.b16 %v407, %v403
  %v528 = vpack.c.b16 %v408, %v404
  %v529 = vpack.c.b16 %v413, %v409
  %v530 = vpack.c.b16 %v414, %v410
  %v531 = vpack.c.b16 %v415, %v411
  %v532 = vpack.c.b16 %v416, %v412
  %v533 = vpack.c.b16 %v421, %v417
  %v534 = vpack.c.b16 %v422, %v418
  %v535 = vpack.c.b16 %v423, %v419
  %v536 = vpack.c.b16 %v424, %v420
  %v537 = vpack.c.b16 %v429, %v425
  %v538 = vpack.c.b16 %v430, %v426
  %v539 = vpack.c.b16 %v431, %v427
  %v540 = vpack.c.b16 %v432, %v428
  %v541 = vpack.c.b16 %v437, %v433
  %v542 = vpack.c.b16 %v438, %v434
  %v543 = vpack.c.b16 %v439, %v435
  %v544 = vpack.c.b16 %v440, %v436
  %v545 = vpack.c.b16 %v445, %v441
  %v546 = vpack.c.b16 %v446, %v442
  %v547 = vpack.c.b16 %v447, %v443
  %v548 = vpack.c.b16 %v448, %v444
  %v549 = vpack.c.b16 %v453, %v449
  %v550 = vpack.c.b16 %v454, %v450
  %v551 = vpack.c.b16 %v455, %v451
  %v552 = vpack.c.b16 %v456, %v452
  %v553 = vpack.c.b16 %v461, %v457
  %v554 = vpack.c.b16 %v462, %v458
  %v555 = vpack.c.b16 %v463, %v459
  %v556 = vpack.c.b16 %v464, %v460
  %v557 = vpack.c.b16 %v469, %v465
  %v558 = vpack.c.b16 %v470, %v466
  %v559 = vpack.c.b16 %v471, %v467
  %v560 = vpack.c.b16 %v472, %v468
  %v561 = vpack.c.b16 %v477, %v473
  %v562 = vpack.c.b16 %v478, %v474
  %v563 = vpack.c.b16 %v479, %v475
  %v564 = vpack.c.b16 %v480, %v476
  %v565 = vpack.c.b16 %v485, %v481
  %v566 = vpack.c.b16 %v486, %v482
  %v567 = vpack.c.b16 %v487, %v483
  %v568 = vpack.c.b16 %v488, %v484
  %v569 = vpack.c.b16 %v493, %v489
  %v570 = vpack.c.b16 %v494, %v490
  %v571 = vpack.c.b16 %v495, %v491
  %v572 = vpack.c.b16 %v496, %v492
  %v573 = vpack.c.b16 %v501, %v497
  %v574 = vpack.c.b16 %v502, %v498
  %v575 = vpack.c.b16 %v503, %v499
  %v576 = vpack.c.b16 %v504, %v500
  %v577 = vpack.c.b16 %v509, %v505
  %v578 = vpack.c.b16 %v510, %v506
  %v579 = vpack.c.b16 %v511, %v507
  %v580 = vpack.c.b16 %v512, %v508
  %v581 = vpack.c.b16 %v517, %v513
  %v582 = vpack.c.b16 %v518, %v514
  %v583 = vpack.c.b16 %v519, %v515
  %v584 = vpack.c.b16 %v520, %v516
  %649 = vmatprep.subr.bf16.mxu0 %v550
  %650 = vmatpush1.bf16.msra.mxu0 %v549
  %651 = vmatprep.subr.bf16.mxu0 %v546
  %652 = vmatpush1.bf16.msra.mxu0 %v545
  %653 = vmatprep.subr.bf16.mxu0 %v542
  %654 = vmatpush1.bf16.msra.mxu0 %v541
  %655 = vmatprep.subr.bf16.mxu0 %v538
  %656 = vmatpush1.bf16.msra.mxu0 %v537
  %657 = vmatprep.subr.bf16.mxu0 %v534
  %658 = vmatpush1.bf16.msra.mxu0 %v533
  %659 = vmatprep.subr.bf16.mxu0 %v530
  %660 = vmatpush1.bf16.msra.mxu0 %v529
  %661 = vmatprep.subr.bf16.mxu0 %v526
  %662 = vmatpush1.bf16.msra.mxu0 %v525
  %663 = vmatprep.subr.bf16.mxu0 %v522
  %664 = vmatpush1.bf16.msra.mxu0 %v521
  %665 = vmatprep.subr.bf16.mxu0 %v582
  %666 = vmatpush2.bf16.msra.mxu0 %v581
  %667 = vmatprep.subr.bf16.mxu0 %v578
  %668 = vmatpush2.bf16.msra.mxu0 %v577
  %669 = vmatprep.subr.bf16.mxu0 %v574
  %670 = vmatpush2.bf16.msra.mxu0 %v573
  %671 = vmatprep.subr.bf16.mxu0 %v570
  %672 = vmatpush2.bf16.msra.mxu0 %v569
  %673 = vmatprep.subr.bf16.mxu0 %v566
  %674 = vmatpush2.bf16.msra.mxu0 %v565
  %675 = vmatprep.subr.bf16.mxu0 %v562
  %676 = vmatpush2.bf16.msra.mxu0 %v561
  %677 = vmatprep.subr.bf16.mxu0 %v558
  %678 = vmatpush2.bf16.msra.mxu0 %v557
  %679 = vmatprep.subr.bf16.mxu0 %v554
  %680 = vmatpush2.bf16.msra.mxu0 %v553
  %681 = vmatprep.mubr.bf16.mxu0 %v236
  %682 = vmatmul.mubr.bf16.gmra.mxu0 %v235
  %v683 = vpop.f32.mrf.mxu0
  %v684 = vadd.f32 %v312, %v683
  %v685 = vpop.f32.mrf.mxu0
  %v686 = vadd.f32 %v316, %v685
  %v687 = vpop.f32.mrf.mxu0
  %v688 = vadd.f32 %v312, %v687
  %v689 = vpop.f32.mrf.mxu0
  %v690 = vadd.f32 %v316, %v689
  %691 = vmatprep.mubr.bf16.mxu0 %v238
  %692 = vmatmul.mubr.bf16.gmra.mxu0 %v237
  %v693 = vpop.f32.mrf.mxu0
  %v694 = vadd.f32 %v312, %v693
  %v695 = vpop.f32.mrf.mxu0
  %v696 = vadd.f32 %v316, %v695
  %v697 = vpop.f32.mrf.mxu0
  %v698 = vadd.f32 %v312, %v697
  %v699 = vpop.f32.mrf.mxu0
  %v700 = vadd.f32 %v316, %v699
  %701 = vmatprep.mubr.bf16.mxu0 %v240
  %702 = vmatmul.mubr.bf16.gmra.mxu0 %v239
  %v703 = vpop.f32.mrf.mxu0
  %v704 = vadd.f32 %v312, %v703
  %v705 = vpop.f32.mrf.mxu0
  %v706 = vadd.f32 %v316, %v705
  %v707 = vpop.f32.mrf.mxu0
  %v708 = vadd.f32 %v312, %v707
  %v709 = vpop.f32.mrf.mxu0
  %v710 = vadd.f32 %v316, %v709
  %711 = vmatprep.mubr.bf16.mxu0 %v242
  %712 = vmatmul.mubr.bf16.gmra.mxu0 %v241
  %v713 = vpop.f32.mrf.mxu0
  %v714 = vadd.f32 %v312, %v713
  %v715 = vpop.f32.mrf.mxu0
  %v716 = vadd.f32 %v316, %v715
  %v717 = vpop.f32.mrf.mxu0
  %v718 = vadd.f32 %v312, %v717
  %v719 = vpop.f32.mrf.mxu0
  %v720 = vadd.f32 %v316, %v719
  %721 = vdwg.mxu0
  %722 = vmatprep.subr.bf16.mxu0 %v552
  %723 = vmatpush1.bf16.msra.mxu0 %v551
  %724 = vmatprep.subr.bf16.mxu0 %v548
  %725 = vmatpush1.bf16.msra.mxu0 %v547
  %726 = vmatprep.subr.bf16.mxu0 %v544
  %727 = vmatpush1.bf16.msra.mxu0 %v543
  %728 = vmatprep.subr.bf16.mxu0 %v540
  %729 = vmatpush1.bf16.msra.mxu0 %v539
  %730 = vmatprep.subr.bf16.mxu0 %v536
  %731 = vmatpush1.bf16.msra.mxu0 %v535
  %732 = vmatprep.subr.bf16.mxu0 %v532
  %733 = vmatpush1.bf16.msra.mxu0 %v531
  %734 = vmatprep.subr.bf16.mxu0 %v528
  %735 = vmatpush1.bf16.msra.mxu0 %v527
  %736 = vmatprep.subr.bf16.mxu0 %v524
  %737 = vmatpush1.bf16.msra.mxu0 %v523
  %738 = vmatprep.subr.bf16.mxu0 %v584
  %739 = vmatpush2.bf16.msra.mxu0 %v583
  %740 = vmatprep.subr.bf16.mxu0 %v580
  %741 = vmatpush2.bf16.msra.mxu0 %v579
  %742 = vmatprep.subr.bf16.mxu0 %v576
  %743 = vmatpush2.bf16.msra.mxu0 %v575
  %744 = vmatprep.subr.bf16.mxu0 %v572
  %745 = vmatpush2.bf16.msra.mxu0 %v571
  %746 = vmatprep.subr.bf16.mxu0 %v568
  %747 = vmatpush2.bf16.msra.mxu0 %v567
  %748 = vmatprep.subr.bf16.mxu0 %v564
  %749 = vmatpush2.bf16.msra.mxu0 %v563
  %750 = vmatprep.subr.bf16.mxu0 %v560
  %751 = vmatpush2.bf16.msra.mxu0 %v559
  %752 = vmatprep.subr.bf16.mxu0 %v556
  %753 = vmatpush2.bf16.msra.mxu0 %v555
  %754 = vmatprep.mubr.bf16.mxu0 %v236
  %755 = vmatmul.mubr.bf16.gmra.mxu0 %v235
  %v756 = vpop.f32.mrf.mxu0
  %v757 = vadd.f32 %v320, %v756
  %v758 = vpop.f32.mrf.mxu0
  %v759 = vadd.f32 %v324, %v758
  %v760 = vpop.f32.mrf.mxu0
  %v761 = vadd.f32 %v320, %v760
  %v762 = vpop.f32.mrf.mxu0
  %v763 = vadd.f32 %v324, %v762
  %764 = vmatprep.mubr.bf16.mxu0 %v238
  %765 = vmatmul.mubr.bf16.gmra.mxu0 %v237
  %v766 = vpop.f32.mrf.mxu0
  %v767 = vadd.f32 %v320, %v766
  %v768 = vpop.f32.mrf.mxu0
  %v769 = vadd.f32 %v324, %v768
  %v770 = vpop.f32.mrf.mxu0
  %v771 = vadd.f32 %v320, %v770
  %v772 = vpop.f32.mrf.mxu0
  %v773 = vadd.f32 %v324, %v772
  %774 = vmatprep.mubr.bf16.mxu0 %v240
  %775 = vmatmul.mubr.bf16.gmra.mxu0 %v239
  %v776 = vpop.f32.mrf.mxu0
  %v777 = vadd.f32 %v320, %v776
  %v778 = vpop.f32.mrf.mxu0
  %v779 = vadd.f32 %v324, %v778
  %v780 = vpop.f32.mrf.mxu0
  %v781 = vadd.f32 %v320, %v780
  %v782 = vpop.f32.mrf.mxu0
  %v783 = vadd.f32 %v324, %v782
  %784 = vmatprep.mubr.bf16.mxu0 %v242
  %785 = vmatmul.mubr.bf16.gmra.mxu0 %v241
  %v786 = vpop.f32.mrf.mxu0
  %v787 = vadd.f32 %v320, %v786
  %v788 = vpop.f32.mrf.mxu0
  %v789 = vadd.f32 %v324, %v788
  %v790 = vpop.f32.mrf.mxu0
  %v791 = vadd.f32 %v320, %v790
  %v792 = vpop.f32.mrf.mxu0
  %v793 = vadd.f32 %v324, %v792
  %794 = vdwg.mxu0
  %v795 = vmul.f32 %v684, 0.5
  %v796 = vmul.f32 %v686, 0.5
  %v797 = vmul.f32 %v757, 0.5
  %v798 = vmul.f32 %v759, 0.5
  %v799 = vmul.f32 %v688, 0.5
  %v800 = vmul.f32 %v690, 0.5
  %v801 = vmul.f32 %v761, 0.5
  %v802 = vmul.f32 %v763, 0.5
  %v803 = vmul.f32 %v694, 0.5
  %v804 = vmul.f32 %v696, 0.5
  %v805 = vmul.f32 %v767, 0.5
  %v806 = vmul.f32 %v769, 0.5
  %v807 = vmul.f32 %v698, 0.5
  %v808 = vmul.f32 %v700, 0.5
  %v809 = vmul.f32 %v771, 0.5
  %v810 = vmul.f32 %v773, 0.5
  %v811 = vmul.f32 %v704, 0.5
  %v812 = vmul.f32 %v706, 0.5
  %v813 = vmul.f32 %v777, 0.5
  %v814 = vmul.f32 %v779, 0.5
  %v815 = vmul.f32 %v708, 0.5
  %v816 = vmul.f32 %v710, 0.5
  %v817 = vmul.f32 %v781, 0.5
  %v818 = vmul.f32 %v783, 0.5
  %v819 = vmul.f32 %v714, 0.5
  %v820 = vmul.f32 %v716, 0.5
  %v821 = vmul.f32 %v787, 0.5
  %v822 = vmul.f32 %v789, 0.5
  %v823 = vmul.f32 %v718, 0.5
  %v824 = vmul.f32 %v720, 0.5
  %v825 = vmul.f32 %v791, 0.5
  %v826 = vmul.f32 %v793, 0.5
  %v827 = vmul.f32 %v684, 0.70710677
  %v828 = vmul.f32 %v686, 0.70710677
  %v829 = vmul.f32 %v757, 0.70710677
  %v830 = vmul.f32 %v759, 0.70710677
  %v831 = vmul.f32 %v688, 0.70710677
  %v832 = vmul.f32 %v690, 0.70710677
  %v833 = vmul.f32 %v761, 0.70710677
  %v834 = vmul.f32 %v763, 0.70710677
  %v835 = vmul.f32 %v694, 0.70710677
  %v836 = vmul.f32 %v696, 0.70710677
  %v837 = vmul.f32 %v767, 0.70710677
  %v838 = vmul.f32 %v769, 0.70710677
  %v839 = vmul.f32 %v698, 0.70710677
  %v840 = vmul.f32 %v700, 0.70710677
  %v841 = vmul.f32 %v771, 0.70710677
  %v842 = vmul.f32 %v773, 0.70710677
  %v843 = vmul.f32 %v704, 0.70710677
  %v844 = vmul.f32 %v706, 0.70710677
  %v845 = vmul.f32 %v777, 0.70710677
  %v846 = vmul.f32 %v779, 0.70710677
  %v847 = vmul.f32 %v708, 0.70710677
  %v848 = vmul.f32 %v710, 0.70710677
  %v849 = vmul.f32 %v781, 0.70710677
  %v850 = vmul.f32 %v783, 0.70710677
  %v851 = vmul.f32 %v714, 0.70710677
  %v852 = vmul.f32 %v716, 0.70710677
  %v853 = vmul.f32 %v787, 0.70710677
  %v854 = vmul.f32 %v789, 0.70710677
  %v855 = vmul.f32 %v718, 0.70710677
  %v856 = vmul.f32 %v720, 0.70710677
  %v857 = vmul.f32 %v791, 0.70710677
  %v858 = vmul.f32 %v793, 0.70710677
  %v859 = verf.f32.pop %v827
  %v860 = verf.f32.pop %v828
  %v861 = verf.f32.pop %v829
  %v862 = verf.f32.pop %v830
  %v863 = verf.f32.pop %v831
  %v864 = verf.f32.pop %v832
  %v865 = verf.f32.pop %v833
  %v866 = verf.f32.pop %v834
  %v867 = verf.f32.pop %v835
  %v868 = verf.f32.pop %v836
  %v869 = verf.f32.pop %v837
  %v870 = verf.f32.pop %v838
  %v871 = verf.f32.pop %v839
  %v872 = verf.f32.pop %v840
  %v873 = verf.f32.pop %v841
  %v874 = verf.f32.pop %v842
  %v875 = verf.f32.pop %v843
  %v876 = verf.f32.pop %v844
  %v877 = verf.f32.pop %v845
  %v878 = verf.f32.pop %v846
  %v879 = verf.f32.pop %v847
  %v880 = verf.f32.pop %v848
  %v881 = verf.f32.pop %v849
  %v882 = verf.f32.pop %v850
  %v883 = verf.f32.pop %v851
  %v884 = verf.f32.pop %v852
  %v885 = verf.f32.pop %v853
  %v886 = verf.f32.pop %v854
  %v887 = verf.f32.pop %v855
  %v888 = verf.f32.pop %v856
  %v889 = verf.f32.pop %v857
  %v890 = verf.f32.pop %v858
  %v891 = vadd.f32 %v859, 1.0
  %v892 = vadd.f32 %v860, 1.0
  %v893 = vadd.f32 %v861, 1.0
  %v894 = vadd.f32 %v862, 1.0
  %v895 = vadd.f32 %v863, 1.0
  %v896 = vadd.f32 %v864, 1.0
  %v897 = vadd.f32 %v865, 1.0
  %v898 = vadd.f32 %v866, 1.0
  %v899 = vadd.f32 %v867, 1.0
  %v900 = vadd.f32 %v868, 1.0
  %v901 = vadd.f32 %v869, 1.0
  %v902 = vadd.f32 %v870, 1.0
  %v903 = vadd.f32 %v871, 1.0
  %v904 = vadd.f32 %v872, 1.0
  %v905 = vadd.f32 %v873, 1.0
  %v906 = vadd.f32 %v874, 1.0
  %v907 = vadd.f32 %v875, 1.0
  %v908 = vadd.f32 %v876, 1.0
  %v909 = vadd.f32 %v877, 1.0
  %v910 = vadd.f32 %v878, 1.0
  %v911 = vadd.f32 %v879, 1.0
  %v912 = vadd.f32 %v880, 1.0
  %v913 = vadd.f32 %v881, 1.0
  %v914 = vadd.f32 %v882, 1.0
  %v915 = vadd.f32 %v883, 1.0
  %v916 = vadd.f32 %v884, 1.0
  %v917 = vadd.f32 %v885, 1.0
  %v918 = vadd.f32 %v886, 1.0
  %v919 = vadd.f32 %v887, 1.0
  %v920 = vadd.f32 %v888, 1.0
  %v921 = vadd.f32 %v889, 1.0
  %v922 = vadd.f32 %v890, 1.0
  %v923 = vmul.f32 %v795, %v891
  %v924 = vmul.f32 %v796, %v892
  %v925 = vmul.f32 %v797, %v893
  %v926 = vmul.f32 %v798, %v894
  %v927 = vmul.f32 %v799, %v895
  %v928 = vmul.f32 %v800, %v896
  %v929 = vmul.f32 %v801, %v897
  %v930 = vmul.f32 %v802, %v898
  %v931 = vmul.f32 %v803, %v899
  %v932 = vmul.f32 %v804, %v900
  %v933 = vmul.f32 %v805, %v901
  %v934 = vmul.f32 %v806, %v902
  %v935 = vmul.f32 %v807, %v903
  %v936 = vmul.f32 %v808, %v904
  %v937 = vmul.f32 %v809, %v905
  %v938 = vmul.f32 %v810, %v906
  %v939 = vmul.f32 %v811, %v907
  %v940 = vmul.f32 %v812, %v908
  %v941 = vmul.f32 %v813, %v909
  %v942 = vmul.f32 %v814, %v910
  %v943 = vmul.f32 %v815, %v911
  %v944 = vmul.f32 %v816, %v912
  %v945 = vmul.f32 %v817, %v913
  %v946 = vmul.f32 %v818, %v914
  %v947 = vmul.f32 %v819, %v915
  %v948 = vmul.f32 %v820, %v916
  %v949 = vmul.f32 %v821, %v917
  %v950 = vmul.f32 %v822, %v918
  %v951 = vmul.f32 %v823, %v919
  %v952 = vmul.f32 %v824, %v920
  %v953 = vmul.f32 %v825, %v921
  %v954 = vmul.f32 %v826, %v922
  %v955 = vpack.c.bf16 %v927, %v923
  %v956 = vpack.c.bf16 %v928, %v924
  %v957 = vpack.c.bf16 %v929, %v925
  %v958 = vpack.c.bf16 %v930, %v926
  %v959 = vpack.c.bf16 %v935, %v931
  %v960 = vpack.c.bf16 %v936, %v932
  %v961 = vpack.c.bf16 %v937, %v933
  %v962 = vpack.c.bf16 %v938, %v934
  %v963 = vpack.c.bf16 %v943, %v939
  %v964 = vpack.c.bf16 %v944, %v940
  %v965 = vpack.c.bf16 %v945, %v941
  %v966 = vpack.c.bf16 %v946, %v942
  %v967 = vpack.c.bf16 %v951, %v947
  %v968 = vpack.c.bf16 %v952, %v948
  %v969 = vpack.c.bf16 %v953, %v949
  %v970 = vpack.c.bf16 %v954, %v950
  %v971 = vld [vmem:[%s3] sm:$0xff]
  %v972 = vld [vmem:[%s3 + $0x8] sm:$0xff]
  %v973 = vld [vmem:[%s3 + $0x10] sm:$0xff]
  %v974 = vld [vmem:[%s3 + $0x18] sm:$0xff]
  %v975 = vld [vmem:[%s3 + $0x20] sm:$0xff]
  %v976 = vld [vmem:[%s3 + $0x28] sm:$0xff]
  %v977 = vld [vmem:[%s3 + $0x30] sm:$0xff]
  %v978 = vld [vmem:[%s3 + $0x38] sm:$0xff]
  %v979 = vld [vmem:[%s3 + $0x40] sm:$0xff]
  %v980 = vld [vmem:[%s3 + $0x48] sm:$0xff]
  %v981 = vld [vmem:[%s3 + $0x50] sm:$0xff]
  %v982 = vld [vmem:[%s3 + $0x58] sm:$0xff]
  %v983 = vld [vmem:[%s3 + $0x60] sm:$0xff]
  %v984 = vld [vmem:[%s3 + $0x68] sm:$0xff]
  %v985 = vld [vmem:[%s3 + $0x70] sm:$0xff]
  %v986 = vld [vmem:[%s3 + $0x78] sm:$0xff]
  %v987 = vld [vmem:[%s3 + $0x80] sm:$0xff]
  %v988 = vld [vmem:[%s3 + $0x88] sm:$0xff]
  %v989 = vld [vmem:[%s3 + $0x90] sm:$0xff]
  %v990 = vld [vmem:[%s3 + $0x98] sm:$0xff]
  %v991 = vld [vmem:[%s3 + $0xa0] sm:$0xff]
  %v992 = vld [vmem:[%s3 + $0xa8] sm:$0xff]
  %v993 = vld [vmem:[%s3 + $0xb0] sm:$0xff]
  %v994 = vld [vmem:[%s3 + $0xb8] sm:$0xff]
  %v995 = vld [vmem:[%s3 + $0xc0] sm:$0xff]
  %v996 = vld [vmem:[%s3 + $0xc8] sm:$0xff]
  %v997 = vld [vmem:[%s3 + $0xd0] sm:$0xff]
  %v998 = vld [vmem:[%s3 + $0xd8] sm:$0xff]
  %v999 = vld [vmem:[%s3 + $0xe0] sm:$0xff]
  %v1000 = vld [vmem:[%s3 + $0xe8] sm:$0xff]
  %v1001 = vld [vmem:[%s3 + $0xf0] sm:$0xff]
  %v1002 = vld [vmem:[%s3 + $0xf8] sm:$0xff]
  %v1003 = vld [vmem:[%s3 + $0x100] sm:$0xff]
  %v1004 = vld [vmem:[%s3 + $0x108] sm:$0xff]
  %v1005 = vld [vmem:[%s3 + $0x110] sm:$0xff]
  %v1006 = vld [vmem:[%s3 + $0x118] sm:$0xff]
  %v1007 = vld [vmem:[%s3 + $0x120] sm:$0xff]
  %v1008 = vld [vmem:[%s3 + $0x128] sm:$0xff]
  %v1009 = vld [vmem:[%s3 + $0x130] sm:$0xff]
  %v1010 = vld [vmem:[%s3 + $0x138] sm:$0xff]
  %v1011 = vld [vmem:[%s3 + $0x140] sm:$0xff]
  %v1012 = vld [vmem:[%s3 + $0x148] sm:$0xff]
  %v1013 = vld [vmem:[%s3 + $0x150] sm:$0xff]
  %v1014 = vld [vmem:[%s3 + $0x158] sm:$0xff]
  %v1015 = vld [vmem:[%s3 + $0x160] sm:$0xff]
  %v1016 = vld [vmem:[%s3 + $0x168] sm:$0xff]
  %v1017 = vld [vmem:[%s3 + $0x170] sm:$0xff]
  %v1018 = vld [vmem:[%s3 + $0x178] sm:$0xff]
  %v1019 = vld [vmem:[%s3 + $0x180] sm:$0xff]
  %v1020 = vld [vmem:[%s3 + $0x188] sm:$0xff]
  %v1021 = vld [vmem:[%s3 + $0x190] sm:$0xff]
  %v1022 = vld [vmem:[%s3 + $0x198] sm:$0xff]
  %v1023 = vld [vmem:[%s3 + $0x1a0] sm:$0xff]
  %v1024 = vld [vmem:[%s3 + $0x1a8] sm:$0xff]
  %v1025 = vld [vmem:[%s3 + $0x1b0] sm:$0xff]
  %v1026 = vld [vmem:[%s3 + $0x1b8] sm:$0xff]
  %v1027 = vld [vmem:[%s3 + $0x1c0] sm:$0xff]
  %v1028 = vld [vmem:[%s3 + $0x1c8] sm:$0xff]
  %v1029 = vld [vmem:[%s3 + $0x1d0] sm:$0xff]
  %v1030 = vld [vmem:[%s3 + $0x1d8] sm:$0xff]
  %v1031 = vld [vmem:[%s3 + $0x1e0] sm:$0xff]
  %v1032 = vld [vmem:[%s3 + $0x1e8] sm:$0xff]
  %v1033 = vld [vmem:[%s3 + $0x1f0] sm:$0xff]
  %v1034 = vld [vmem:[%s3 + $0x1f8] sm:$0xff]
  %v1035 = vld [vmem:[%s4] sm:$0x3]
  %v1037 = vlaneseq
  %v1038 = vshrl.u32 %v1037, 7
  %v1039 = vsub.s32 0, %v1038
  %v1040 = vrot.slane %v1035, %v1039
  %v1041 = vlaneseq
  %v1042 = vshrl.u32 %v1041, 7
  %v1043 = vsub.s32 1, %v1042
  %v1044 = vrot.slane %v1035, %v1043
  %v1111 = vunpack.c.l.b16 %v971
  %v1112 = vunpack.c.h.b16 %v971
  %v1113 = vunpack.c.l.b16 %v972
  %v1114 = vunpack.c.h.b16 %v972
  %v1115 = vunpack.c.l.b16 %v973
  %v1116 = vunpack.c.h.b16 %v973
  %v1117 = vunpack.c.l.b16 %v974
  %v1118 = vunpack.c.h.b16 %v974
  %v1119 = vunpack.c.l.b16 %v975
  %v1120 = vunpack.c.h.b16 %v975
  %v1121 = vunpack.c.l.b16 %v976
  %v1122 = vunpack.c.h.b16 %v976
  %v1123 = vunpack.c.l.b16 %v977
  %v1124 = vunpack.c.h.b16 %v977
  %v1125 = vunpack.c.l.b16 %v978
  %v1126 = vunpack.c.h.b16 %v978
  %v1127 = vunpack.c.l.b16 %v979
  %v1128 = vunpack.c.h.b16 %v979
  %v1129 = vunpack.c.l.b16 %v980
  %v1130 = vunpack.c.h.b16 %v980
  %v1131 = vunpack.c.l.b16 %v981
  %v1132 = vunpack.c.h.b16 %v981
  %v1133 = vunpack.c.l.b16 %v982
  %v1134 = vunpack.c.h.b16 %v982
  %v1135 = vunpack.c.l.b16 %v983
  %v1136 = vunpack.c.h.b16 %v983
  %v1137 = vunpack.c.l.b16 %v984
  %v1138 = vunpack.c.h.b16 %v984
  %v1139 = vunpack.c.l.b16 %v985
  %v1140 = vunpack.c.h.b16 %v985
  %v1141 = vunpack.c.l.b16 %v986
  %v1142 = vunpack.c.h.b16 %v986
  %v1143 = vunpack.c.l.b16 %v987
  %v1144 = vunpack.c.h.b16 %v987
  %v1145 = vunpack.c.l.b16 %v988
  %v1146 = vunpack.c.h.b16 %v988
  %v1147 = vunpack.c.l.b16 %v989
  %v1148 = vunpack.c.h.b16 %v989
  %v1149 = vunpack.c.l.b16 %v990
  %v1150 = vunpack.c.h.b16 %v990
  %v1151 = vunpack.c.l.b16 %v991
  %v1152 = vunpack.c.h.b16 %v991
  %v1153 = vunpack.c.l.b16 %v992
  %v1154 = vunpack.c.h.b16 %v992
  %v1155 = vunpack.c.l.b16 %v993
  %v1156 = vunpack.c.h.b16 %v993
  %v1157 = vunpack.c.l.b16 %v994
  %v1158 = vunpack.c.h.b16 %v994
  %v1159 = vunpack.c.l.b16 %v995
  %v1160 = vunpack.c.h.b16 %v995
  %v1161 = vunpack.c.l.b16 %v996
  %v1162 = vunpack.c.h.b16 %v996
  %v1163 = vunpack.c.l.b16 %v997
  %v1164 = vunpack.c.h.b16 %v997
  %v1165 = vunpack.c.l.b16 %v998
  %v1166 = vunpack.c.h.b16 %v998
  %v1167 = vunpack.c.l.b16 %v999
  %v1168 = vunpack.c.h.b16 %v999
  %v1169 = vunpack.c.l.b16 %v1000
  %v1170 = vunpack.c.h.b16 %v1000
  %v1171 = vunpack.c.l.b16 %v1001
  %v1172 = vunpack.c.h.b16 %v1001
  %v1173 = vunpack.c.l.b16 %v1002
  %v1174 = vunpack.c.h.b16 %v1002
  %v1175 = vunpack.c.l.b16 %v1003
  %v1176 = vunpack.c.h.b16 %v1003
  %v1177 = vunpack.c.l.b16 %v1004
  %v1178 = vunpack.c.h.b16 %v1004
  %v1179 = vunpack.c.l.b16 %v1005
  %v1180 = vunpack.c.h.b16 %v1005
  %v1181 = vunpack.c.l.b16 %v1006
  %v1182 = vunpack.c.h.b16 %v1006
  %v1183 = vunpack.c.l.b16 %v1007
  %v1184 = vunpack.c.h.b16 %v1007
  %v1185 = vunpack.c.l.b16 %v1008
  %v1186 = vunpack.c.h.b16 %v1008
  %v1187 = vunpack.c.l.b16 %v1009
  %v1188 = vunpack.c.h.b16 %v1009
  %v1189 = vunpack.c.l.b16 %v1010
  %v1190 = vunpack.c.h.b16 %v1010
  %v1191 = vunpack.c.l.b16 %v1011
  %v1192 = vunpack.c.h.b16 %v1011
  %v1193 = vunpack.c.l.b16 %v1012
  %v1194 = vunpack.c.h.b16 %v1012
  %v1195 = vunpack.c.l.b16 %v1013
  %v1196 = vunpack.c.h.b16 %v1013
  %v1197 = vunpack.c.l.b16 %v1014
  %v1198 = vunpack.c.h.b16 %v1014
  %v1199 = vunpack.c.l.b16 %v1015
  %v1200 = vunpack.c.h.b16 %v1015
  %v1201 = vunpack.c.l.b16 %v1016
  %v1202 = vunpack.c.h.b16 %v1016
  %v1203 = vunpack.c.l.b16 %v1017
  %v1204 = vunpack.c.h.b16 %v1017
  %v1205 = vunpack.c.l.b16 %v1018
  %v1206 = vunpack.c.h.b16 %v1018
  %v1207 = vunpack.c.l.b16 %v1019
  %v1208 = vunpack.c.h.b16 %v1019
  %v1209 = vunpack.c.l.b16 %v1020
  %v1210 = vunpack.c.h.b16 %v1020
  %v1211 = vunpack.c.l.b16 %v1021
  %v1212 = vunpack.c.h.b16 %v1021
  %v1213 = vunpack.c.l.b16 %v1022
  %v1214 = vunpack.c.h.b16 %v1022
  %v1215 = vunpack.c.l.b16 %v1023
  %v1216 = vunpack.c.h.b16 %v1023
  %v1217 = vunpack.c.l.b16 %v1024
  %v1218 = vunpack.c.h.b16 %v1024
  %v1219 = vunpack.c.l.b16 %v1025
  %v1220 = vunpack.c.h.b16 %v1025
  %v1221 = vunpack.c.l.b16 %v1026
  %v1222 = vunpack.c.h.b16 %v1026
  %v1223 = vunpack.c.l.b16 %v1027
  %v1224 = vunpack.c.h.b16 %v1027
  %v1225 = vunpack.c.l.b16 %v1028
  %v1226 = vunpack.c.h.b16 %v1028
  %v1227 = vunpack.c.l.b16 %v1029
  %v1228 = vunpack.c.h.b16 %v1029
  %v1229 = vunpack.c.l.b16 %v1030
  %v1230 = vunpack.c.h.b16 %v1030
  %v1231 = vunpack.c.l.b16 %v1031
  %v1232 = vunpack.c.h.b16 %v1031
  %v1233 = vunpack.c.l.b16 %v1032
  %v1234 = vunpack.c.h.b16 %v1032
  %v1235 = vunpack.c.l.b16 %v1033
  %v1236 = vunpack.c.h.b16 %v1033
  %v1237 = vunpack.c.l.b16 %v1034
  %v1238 = vunpack.c.h.b16 %v1034
  %v1239 = vpack.c.b16 %v1113, %v1111
  %v1240 = vpack.c.b16 %v1114, %v1112
  %v1241 = vpack.c.b16 %v1117, %v1115
  %v1242 = vpack.c.b16 %v1118, %v1116
  %v1243 = vpack.c.b16 %v1121, %v1119
  %v1244 = vpack.c.b16 %v1122, %v1120
  %v1245 = vpack.c.b16 %v1125, %v1123
  %v1246 = vpack.c.b16 %v1126, %v1124
  %v1247 = vpack.c.b16 %v1129, %v1127
  %v1248 = vpack.c.b16 %v1130, %v1128
  %v1249 = vpack.c.b16 %v1133, %v1131
  %v1250 = vpack.c.b16 %v1134, %v1132
  %v1251 = vpack.c.b16 %v1137, %v1135
  %v1252 = vpack.c.b16 %v1138, %v1136
  %v1253 = vpack.c.b16 %v1141, %v1139
  %v1254 = vpack.c.b16 %v1142, %v1140
  %v1255 = vpack.c.b16 %v1145, %v1143
  %v1256 = vpack.c.b16 %v1146, %v1144
  %v1257 = vpack.c.b16 %v1149, %v1147
  %v1258 = vpack.c.b16 %v1150, %v1148
  %v1259 = vpack.c.b16 %v1153, %v1151
  %v1260 = vpack.c.b16 %v1154, %v1152
  %v1261 = vpack.c.b16 %v1157, %v1155
  %v1262 = vpack.c.b16 %v1158, %v1156
  %v1263 = vpack.c.b16 %v1161, %v1159
  %v1264 = vpack.c.b16 %v1162, %v1160
  %v1265 = vpack.c.b16 %v1165, %v1163
  %v1266 = vpack.c.b16 %v1166, %v1164
  %v1267 = vpack.c.b16 %v1169, %v1167
  %v1268 = vpack.c.b16 %v1170, %v1168
  %v1269 = vpack.c.b16 %v1173, %v1171
  %v1270 = vpack.c.b16 %v1174, %v1172
  %v1271 = vpack.c.b16 %v1177, %v1175
  %v1272 = vpack.c.b16 %v1178, %v1176
  %v1273 = vpack.c.b16 %v1181, %v1179
  %v1274 = vpack.c.b16 %v1182, %v1180
  %v1275 = vpack.c.b16 %v1185, %v1183
  %v1276 = vpack.c.b16 %v1186, %v1184
  %v1277 = vpack.c.b16 %v1189, %v1187
  %v1278 = vpack.c.b16 %v1190, %v1188
  %v1279 = vpack.c.b16 %v1193, %v1191
  %v1280 = vpack.c.b16 %v1194, %v1192
  %v1281 = vpack.c.b16 %v1197, %v1195
  %v1282 = vpack.c.b16 %v1198, %v1196
  %v1283 = vpack.c.b16 %v1201, %v1199
  %v1284 = vpack.c.b16 %v1202, %v1200
  %v1285 = vpack.c.b16 %v1205, %v1203
  %v1286 = vpack.c.b16 %v1206, %v1204
  %v1287 = vpack.c.b16 %v1209, %v1207
  %v1288 = vpack.c.b16 %v1210, %v1208
  %v1289 = vpack.c.b16 %v1213, %v1211
  %v1290 = vpack.c.b16 %v1214, %v1212
  %v1291 = vpack.c.b16 %v1217, %v1215
  %v1292 = vpack.c.b16 %v1218, %v1216
  %v1293 = vpack.c.b16 %v1221, %v1219
  %v1294 = vpack.c.b16 %v1222, %v1220
  %v1295 = vpack.c.b16 %v1225, %v1223
  %v1296 = vpack.c.b16 %v1226, %v1224
  %v1297 = vpack.c.b16 %v1229, %v1227
  %v1298 = vpack.c.b16 %v1230, %v1228
  %v1299 = vpack.c.b16 %v1233, %v1231
  %v1300 = vpack.c.b16 %v1234, %v1232
  %v1301 = vpack.c.b16 %v1237, %v1235
  %v1302 = vpack.c.b16 %v1238, %v1236
  %1367 = vmatprep.subr.bf16.mxu0 %v1254
  %1368 = vmatpush1.bf16.msra.mxu0 %v1253
  %1369 = vmatprep.subr.bf16.mxu0 %v1252
  %1370 = vmatpush1.bf16.msra.mxu0 %v1251
  %1371 = vmatprep.subr.bf16.mxu0 %v1250
  %1372 = vmatpush1.bf16.msra.mxu0 %v1249
  %1373 = vmatprep.subr.bf16.mxu0 %v1248
  %1374 = vmatpush1.bf16.msra.mxu0 %v1247
  %1375 = vmatprep.subr.bf16.mxu0 %v1246
  %1376 = vmatpush1.bf16.msra.mxu0 %v1245
  %1377 = vmatprep.subr.bf16.mxu0 %v1244
  %1378 = vmatpush1.bf16.msra.mxu0 %v1243
  %1379 = vmatprep.subr.bf16.mxu0 %v1242
  %1380 = vmatpush1.bf16.msra.mxu0 %v1241
  %1381 = vmatprep.subr.bf16.mxu0 %v1240
  %1382 = vmatpush1.bf16.msra.mxu0 %v1239
  %1383 = vmatprep.subr.bf16.mxu0 %v1270
  %1384 = vmatpush2.bf16.msra.mxu0 %v1269
  %1385 = vmatprep.subr.bf16.mxu0 %v1268
  %1386 = vmatpush2.bf16.msra.mxu0 %v1267
  %1387 = vmatprep.subr.bf16.mxu0 %v1266
  %1388 = vmatpush2.bf16.msra.mxu0 %v1265
  %1389 = vmatprep.subr.bf16.mxu0 %v1264
  %1390 = vmatpush2.bf16.msra.mxu0 %v1263
  %1391 = vmatprep.subr.bf16.mxu0 %v1262
  %1392 = vmatpush2.bf16.msra.mxu0 %v1261
  %1393 = vmatprep.subr.bf16.mxu0 %v1260
  %1394 = vmatpush2.bf16.msra.mxu0 %v1259
  %1395 = vmatprep.subr.bf16.mxu0 %v1258
  %1396 = vmatpush2.bf16.msra.mxu0 %v1257
  %1397 = vmatprep.subr.bf16.mxu0 %v1256
  %1398 = vmatpush2.bf16.msra.mxu0 %v1255
  %1399 = vmatprep.mubr.bf16.mxu0 %v956
  %1400 = vmatmul.mubr.bf16.gmra.mxu0 %v955
  %v1401 = vpop.f32.mrf.mxu0
  %v1402 = vadd.f32 %v1040, %v1401
  %v1403 = vpop.f32.mrf.mxu0
  %v1404 = vadd.f32 %v1044, %v1403
  %v1405 = vpop.f32.mrf.mxu0
  %v1406 = vadd.f32 %v1040, %v1405
  %v1407 = vpop.f32.mrf.mxu0
  %v1408 = vadd.f32 %v1044, %v1407
  %1409 = vmatprep.mubr.bf16.mxu0 %v960
  %1410 = vmatmul.mubr.bf16.gmra.mxu0 %v959
  %v1411 = vpop.f32.mrf.mxu0
  %v1412 = vadd.f32 %v1040, %v1411
  %v1413 = vpop.f32.mrf.mxu0
  %v1414 = vadd.f32 %v1044, %v1413
  %v1415 = vpop.f32.mrf.mxu0
  %v1416 = vadd.f32 %v1040, %v1415
  %v1417 = vpop.f32.mrf.mxu0
  %v1418 = vadd.f32 %v1044, %v1417
  %1419 = vmatprep.mubr.bf16.mxu0 %v964
  %1420 = vmatmul.mubr.bf16.gmra.mxu0 %v963
  %v1421 = vpop.f32.mrf.mxu0
  %v1422 = vadd.f32 %v1040, %v1421
  %v1423 = vpop.f32.mrf.mxu0
  %v1424 = vadd.f32 %v1044, %v1423
  %v1425 = vpop.f32.mrf.mxu0
  %v1426 = vadd.f32 %v1040, %v1425
  %v1427 = vpop.f32.mrf.mxu0
  %v1428 = vadd.f32 %v1044, %v1427
  %1429 = vmatprep.mubr.bf16.mxu0 %v968
  %1430 = vmatmul.mubr.bf16.gmra.mxu0 %v967
  %v1431 = vpop.f32.mrf.mxu0
  %v1432 = vadd.f32 %v1040, %v1431
  %v1433 = vpop.f32.mrf.mxu0
  %v1434 = vadd.f32 %v1044, %v1433
  %v1435 = vpop.f32.mrf.mxu0
  %v1436 = vadd.f32 %v1040, %v1435
  %v1437 = vpop.f32.mrf.mxu0
  %v1438 = vadd.f32 %v1044, %v1437
  %1439 = vdwg.mxu0
  %1440 = vmatprep.subr.bf16.mxu0 %v1286
  %1441 = vmatpush1.bf16.msra.mxu0 %v1285
  %1442 = vmatprep.subr.bf16.mxu0 %v1284
  %1443 = vmatpush1.bf16.msra.mxu0 %v1283
  %1444 = vmatprep.subr.bf16.mxu0 %v1282
  %1445 = vmatpush1.bf16.msra.mxu0 %v1281
  %1446 = vmatprep.subr.bf16.mxu0 %v1280
  %1447 = vmatpush1.bf16.msra.mxu0 %v1279
  %1448 = vmatprep.subr.bf16.mxu0 %v1278
  %1449 = vmatpush1.bf16.msra.mxu0 %v1277
  %1450 = vmatprep.subr.bf16.mxu0 %v1276
  %1451 = vmatpush1.bf16.msra.mxu0 %v1275
  %1452 = vmatprep.subr.bf16.mxu0 %v1274
  %1453 = vmatpush1.bf16.msra.mxu0 %v1273
  %1454 = vmatprep.subr.bf16.mxu0 %v1272
  %1455 = vmatpush1.bf16.msra.mxu0 %v1271
  %1456 = vmatprep.subr.bf16.mxu0 %v1302
  %1457 = vmatpush2.bf16.msra.mxu0 %v1301
  %1458 = vmatprep.subr.bf16.mxu0 %v1300
  %1459 = vmatpush2.bf16.msra.mxu0 %v1299
  %1460 = vmatprep.subr.bf16.mxu0 %v1298
  %1461 = vmatpush2.bf16.msra.mxu0 %v1297
  %1462 = vmatprep.subr.bf16.mxu0 %v1296
  %1463 = vmatpush2.bf16.msra.mxu0 %v1295
  %1464 = vmatprep.subr.bf16.mxu0 %v1294
  %1465 = vmatpush2.bf16.msra.mxu0 %v1293
  %1466 = vmatprep.subr.bf16.mxu0 %v1292
  %1467 = vmatpush2.bf16.msra.mxu0 %v1291
  %1468 = vmatprep.subr.bf16.mxu0 %v1290
  %1469 = vmatpush2.bf16.msra.mxu0 %v1289
  %1470 = vmatprep.subr.bf16.mxu0 %v1288
  %1471 = vmatpush2.bf16.msra.mxu0 %v1287
  %1472 = vmatprep.mubr.bf16.mxu0 %v958
  %1473 = vmatmul.mubr.bf16.gmra.mxu0 %v957
  %v1474 = vpop.f32.mrf.mxu0
  %v1475 = vadd.f32 %v1402, %v1474
  %v1476 = vpop.f32.mrf.mxu0
  %v1477 = vadd.f32 %v1404, %v1476
  %v1478 = vpop.f32.mrf.mxu0
  %v1479 = vadd.f32 %v1406, %v1478
  %v1480 = vpop.f32.mrf.mxu0
  %v1481 = vadd.f32 %v1408, %v1480
  %1482 = vmatprep.mubr.bf16.mxu0 %v962
  %1483 = vmatmul.mubr.bf16.gmra.mxu0 %v961
  %v1484 = vpop.f32.mrf.mxu0
  %v1485 = vadd.f32 %v1412, %v1484
  %v1486 = vpop.f32.mrf.mxu0
  %v1487 = vadd.f32 %v1414, %v1486
  %v1488 = vpop.f32.mrf.mxu0
  %v1489 = vadd.f32 %v1416, %v1488
  %v1490 = vpop.f32.mrf.mxu0
  %v1491 = vadd.f32 %v1418, %v1490
  %1492 = vmatprep.mubr.bf16.mxu0 %v966
  %1493 = vmatmul.mubr.bf16.gmra.mxu0 %v965
  %v1494 = vpop.f32.mrf.mxu0
  %v1495 = vadd.f32 %v1422, %v1494
  %v1496 = vpop.f32.mrf.mxu0
  %v1497 = vadd.f32 %v1424, %v1496
  %v1498 = vpop.f32.mrf.mxu0
  %v1499 = vadd.f32 %v1426, %v1498
  %v1500 = vpop.f32.mrf.mxu0
  %v1501 = vadd.f32 %v1428, %v1500
  %1502 = vmatprep.mubr.bf16.mxu0 %v970
  %1503 = vmatmul.mubr.bf16.gmra.mxu0 %v969
  %v1504 = vpop.f32.mrf.mxu0
  %v1505 = vadd.f32 %v1432, %v1504
  %v1506 = vpop.f32.mrf.mxu0
  %v1507 = vadd.f32 %v1434, %v1506
  %v1508 = vpop.f32.mrf.mxu0
  %v1509 = vadd.f32 %v1436, %v1508
  %v1510 = vpop.f32.mrf.mxu0
  %v1511 = vadd.f32 %v1438, %v1510
  %1512 = vdwg.mxu0
  %v1513 = vadd.f32 %v1475, %v34
  %v1514 = vadd.f32 %v1477, %v35
  %v1515 = vadd.f32 %v1479, %v36
  %v1516 = vadd.f32 %v1481, %v37
  %v1517 = vadd.f32 %v1485, %v38
  %v1518 = vadd.f32 %v1487, %v39
  %v1519 = vadd.f32 %v1489, %v40
  %v1520 = vadd.f32 %v1491, %v41
  %v1521 = vadd.f32 %v1495, %v42
  %v1522 = vadd.f32 %v1497, %v43
  %v1523 = vadd.f32 %v1499, %v44
  %v1524 = vadd.f32 %v1501, %v45
  %v1525 = vadd.f32 %v1505, %v46
  %v1526 = vadd.f32 %v1507, %v47
  %v1527 = vadd.f32 %v1509, %v48
  %v1528 = vadd.f32 %v1511, %v49
  %v1529 = vpack.c.bf16 %v1515, %v1513
  %v1530 = vpack.c.bf16 %v1516, %v1514
  %v1531 = vpack.c.bf16 %v1519, %v1517
  %v1532 = vpack.c.bf16 %v1520, %v1518
  %v1533 = vpack.c.bf16 %v1523, %v1521
  %v1534 = vpack.c.bf16 %v1524, %v1522
  %v1535 = vpack.c.bf16 %v1527, %v1525
  %v1536 = vpack.c.bf16 %v1528, %v1526
  %v1545 = vunpack.c.l.b16 %v1529
  %v1546 = vunpack.c.l.b16 %v1530
  %v1547 = vunpack.c.h.b16 %v1529
  %v1548 = vunpack.c.h.b16 %v1530
  %v1549 = vunpack.c.l.b16 %v1531
  %v1550 = vunpack.c.l.b16 %v1532
  %v1551 = vunpack.c.h.b16 %v1531
  %v1552 = vunpack.c.h.b16 %v1532
  %v1553 = vunpack.c.l.b16 %v1533
  %v1554 = vunpack.c.l.b16 %v1534
  %v1555 = vunpack.c.h.b16 %v1533
  %v1556 = vunpack.c.h.b16 %v1534
  %v1557 = vunpack.c.l.b16 %v1535
  %v1558 = vunpack.c.l.b16 %v1536
  %v1559 = vunpack.c.h.b16 %v1535
  %v1560 = vunpack.c.h.b16 %v1536
  %v1561 = vpack.c.b16 %v1546, %v1545
  %v1562 = vpack.c.b16 %v1548, %v1547
  %v1563 = vpack.c.b16 %v1550, %v1549
  %v1564 = vpack.c.b16 %v1552, %v1551
  %v1565 = vpack.c.b16 %v1554, %v1553
  %v1566 = vpack.c.b16 %v1556, %v1555
  %v1567 = vpack.c.b16 %v1558, %v1557
  %v1568 = vpack.c.b16 %v1560, %v1559
  %1577 = vst [vmem:[%s7] sm:$0xff] %v1561
  %1578 = vst [vmem:[%s7 + $0x8] sm:$0xff] %v1562
  %1579 = vst [vmem:[%s7 + $0x10] sm:$0xff] %v1563
  %1580 = vst [vmem:[%s7 + $0x18] sm:$0xff] %v1564
  %1581 = vst [vmem:[%s7 + $0x20] sm:$0xff] %v1565
  %1582 = vst [vmem:[%s7 + $0x28] sm:$0xff] %v1566
  %1583 = vst [vmem:[%s7 + $0x30] sm:$0xff] %v1567
  %1584 = vst [vmem:[%s7 + $0x38] sm:$0xff] %v1568
  // Predicated region
  $region30: #{vit_forward.14} parent=0 // pred_check
    _
  $region31: #{vit_forward.14} parent=0 // pred_check_branch
    %1586 = sbr.rel (0) target = $region33
  $region32: #{vit_forward.14} parent=0 // pred_region
    _
  $region33: #{vit_forward.14} parent=0 // pred_fallthru
    _
  // Predicated region
  $region34: #{vit_forward.14} parent=0 // pred_check
    _
  $region35: #{vit_forward.14} parent=0 // pred_check_branch
    %1588 = sbr.rel (0) target = $region37
  $region36: #{vit_forward.14} parent=0 // pred_region
    _
  $region37: #{vit_forward.14} parent=0 // pred_fallthru
    _

// kernel: vit_forward.19
$region0: #{vit_forward.19}
  #allocation0 [shape = 'u32[]', space=smem, size = 0x4, offset = 0x4, fixed_abs, tag = 'smem constant byte address 0x4 - core index']
  #allocation1 [shape = 'u32[144,128]{1,0:T(1,128)}', space=vmem, size = 0x12000, scoped, tag = 'internal scratch']
  %s0 = inlined_call_operand.vmem [shape: bf16[2,256], index: 0, kind: input, shape index: {}]
  %s1 = inlined_call_operand.vmem [shape: bf16[256,16], index: 1, kind: input, shape index: {}]
  %s2 = inlined_call_operand.vmem [shape: f32[1,16], index: 2, kind: input, shape index: {}]
  %s3 = inlined_call_operand.vmem [shape: f32[1,256], index: 3, kind: input, shape index: {}]
  %s4 = inlined_call_operand.vmem [shape: f32[1,256], index: 4, kind: input, shape index: {}]
  %s5 = inlined_call_operand.hbm [shape: f32[2,16], index: 5, kind: output, shape index: {}]
  %s6 = sld [smem:[#allocation0]]
  $region30: #{vit_forward.19} parent=0
    _
  %s8 = ssub.s32 1, %s6
  %s9 = scalar_select 0, %s8, %s6
  $region1: #{vit_forward.19} parent=0
    #allocation2 [shape = 'u8[1024]{0}', space=vmem, size = 0x400, scoped, tag = 'output window, operand 0, single buffered']
    #allocation3 [shape = 's32[1]{0}', space=sflag, size = 0x4, scoped, tag = 'scoped memory for vit_forward.19']
    %10 = vsyncpa [#allocation3], 0
    // Predicated region
    $region2: #{vit_forward.19} parent=1 // pred_check
      _
    $region3: #{vit_forward.19} parent=1 // pred_check_branch
      %12 = sbr.rel (0) target = $region5
    $region4: #{vit_forward.19} parent=1 // pred_region
      _
    $region5: #{vit_forward.19} parent=1 // pred_fallthru
      _
    // Predicated region
    $region6: #{vit_forward.19} parent=1 // pred_check
      _
    $region7: #{vit_forward.19} parent=1 // pred_check_branch
      %14 = sbr.rel (0) target = $region9
    $region8: #{vit_forward.19} parent=1 // pred_region
      _
    $region9: #{vit_forward.19} parent=1 // pred_fallthru
      _
    // Predicated region
    $region10: #{vit_forward.19} parent=1 // pred_check
      _
    $region11: #{vit_forward.19} parent=1 // pred_check_branch
      %16 = sbr.rel (0) target = $region13
    $region12: #{vit_forward.19} parent=1 // pred_region
      _
    $region13: #{vit_forward.19} parent=1 // pred_fallthru
      _
    // Predicated region
    $region14: #{vit_forward.19} parent=1 // pred_check
      _
    $region15: #{vit_forward.19} parent=1 // pred_check_branch
      %18 = sbr.rel (0) target = $region17
    $region16: #{vit_forward.19} parent=1 // pred_region
      _
    $region17: #{vit_forward.19} parent=1 // pred_fallthru
      _
    // Predicated region
    $region18: #{vit_forward.19} parent=1 // pred_check
      _
    $region19: #{vit_forward.19} parent=1 // pred_check_branch
      %20 = sbr.rel (0) target = $region21
    $region20: #{vit_forward.19} parent=1 // pred_region
      _
    $region21: #{vit_forward.19} parent=1 // pred_fallthru
      _
    %v22 = vld [vmem:[%s0] sm:$0x3]
    %v23 = vunpack.c.l.bf16 %v22
    %v26 = vunpack.c.l.s4 1983009808
    %v27 = vunpack.c.0.s8 %v26
    %v28 = vlaneseq
    %v29 = vshrl.u32 %v28, 7
    %v30 = vsub.s32 %v27, %v29
    %v31 = vrot.slane %v23, %v30
    %v32 = vcombine.high %v31, %v31
    %vm35 = vcmask 1041408
    %v36 = vsel %vm35, %v31, 0.0
    %v37 = vsel %vm35, %v32, 0.0
    %v38 = vadd.f32 %v36, %v37
    %39 = vadd.xlane.f32.xlu0 %v38
    %v40 = vpop.xlane.xlu0 %39
    %v41 = vrcp.pop 256.0
    %v42 = vmul.f32 %v40, %v41
    %v45 = vunpack.c.l.s4 269488144
    %v46 = vunpack.c.0.s8 %v45
    %v47 = vlaneseq
    %v48 = vshrl.u32 %v47, 7
    %v49 = vsub.s32 %v46, %v48
    %v50 = vrot.slane %v42, %v49
    %v52 = vsub.f32 %v23, %v50
    %v53 = vmul.f32 %v52, %v52
    %v56 = vunpack.c.l.s4 1983009808
    %v57 = vunpack.c.0.s8 %v56
    %v58 = vlaneseq
    %v59 = vshrl.u32 %v58, 7
    %v60 = vsub.s32 %v57, %v59
    %v61 = vrot.slane %v53, %v60
    %v62 = vcombine.high %v61, %v61
    %v65 = vsel %vm35, %v61, 0.0
    %v66 = vsel %vm35, %v62, 0.0
    %v67 = vadd.f32 %v65, %v66
    %68 = vadd.xlane.f32.xlu0 %v67
    %v69 = vpop.xlane.xlu0 %68
    %v70 = vmul.f32 %v69, %v41
    %v71 = vadd.f32 %v70, 1e-06
    %v72 = vrsqrt.pop %v71
    %v75 = vunpack.c.l.s4 269488144
    %v76 = vunpack.c.0.s8 %v75
    %v77 = vlaneseq
    %v78 = vshrl.u32 %v77, 7
    %v79 = vsub.s32 %v76, %v78
    %v80 = vrot.slane %v72, %v79
    %v82 = vmul.f32 %v52, %v80
    %v83 = vld [vmem:[%s3] sm:$0x3]
    %v85 = vlaneseq
    %v86 = vshrl.u32 %v85, 7
    %v87 = vsub.s32 0, %v86
    %v88 = vrot.slane %v83, %v87
    %v89 = vlaneseq
    %v90 = vshrl.u32 %v89, 7
    %v91 = vsub.s32 1, %v90
    %v92 = vrot.slane %v83, %v91
    %v93 = vcombine.low %v88, %v92
    %v95 = vunpack.c.l.s4 1983009808
    %v96 = vunpack.c.0.s8 %v95
    %v97 = vlaneseq
    %v98 = vshrl.u32 %v97, 7
    %v99 = vsub.s32 %v96, %v98
    %v100 = vrot.slane %v93, %v99
    %v102 = vmul.f32 %v82, %v100
    %v103 = vld [vmem:[%s4] sm:$0x3]
    %v105 = vlaneseq
    %v106 = vshrl.u32 %v105, 7
    %v107 = vsub.s32 0, %v106
    %v108 = vrot.slane %v103, %v107
    %v109 = vlaneseq
    %v110 = vshrl.u32 %v109, 7
    %v111 = vsub.s32 1, %v110
    %v112 = vrot.slane %v103, %v111
    %v113 = vcombine.low %v108, %v112
    %v115 = vunpack.c.l.s4 1983009808
    %v116 = vunpack.c.0.s8 %v115
    %v117 = vlaneseq
    %v118 = vshrl.u32 %v117, 7
    %v119 = vsub.s32 %v116, %v118
    %v120 = vrot.slane %v113, %v119
    %v122 = vadd.f32 %v102, %v120
    %v125 = vunpack.c.l.s4 1983009808
    %v126 = vunpack.c.0.s8 %v125
    %v127 = vlaneseq
    %v128 = vshrl.u32 %v127, 7
    %v129 = vsub.s32 %v126, %v128
    %v130 = vrot.slane %v122, %v129
    %v131 = vcombine.high %v130, %v130
    %v134 = vpack.c.bf16 %v130, %v130
    %v135 = vpack.c.bf16 %v131, %v131
    %v136 = vld [vmem:[%s1] sm:$0xf]
    %v137 = vld [vmem:[%s1 + $0x4] sm:$0xf]
    %v138 = vld [vmem:[%s1 + $0x8] sm:$0xf]
    %v139 = vld [vmem:[%s1 + $0xc] sm:$0xf]
    %v140 = vld [vmem:[%s1 + $0x10] sm:$0xf]
    %v141 = vld [vmem:[%s1 + $0x14] sm:$0xf]
    %v142 = vld [vmem:[%s1 + $0x18] sm:$0xf]
    %v143 = vld [vmem:[%s1 + $0x1c] sm:$0xf]
    %v144 = vld [vmem:[%s1 + $0x20] sm:$0xf]
    %v145 = vld [vmem:[%s1 + $0x24] sm:$0xf]
    %v146 = vld [vmem:[%s1 + $0x28] sm:$0xf]
    %v147 = vld [vmem:[%s1 + $0x2c] sm:$0xf]
    %v148 = vld [vmem:[%s1 + $0x30] sm:$0xf]
    %v149 = vld [vmem:[%s1 + $0x34] sm:$0xf]
    %v150 = vld [vmem:[%s1 + $0x38] sm:$0xf]
    %v151 = vld [vmem:[%s1 + $0x3c] sm:$0xf]
    %v152 = vld [vmem:[%s1 + $0x40] sm:$0xf]
    %v153 = vld [vmem:[%s1 + $0x44] sm:$0xf]
    %v154 = vld [vmem:[%s1 + $0x48] sm:$0xf]
    %v155 = vld [vmem:[%s1 + $0x4c] sm:$0xf]
    %v156 = vld [vmem:[%s1 + $0x50] sm:$0xf]
    %v157 = vld [vmem:[%s1 + $0x54] sm:$0xf]
    %v158 = vld [vmem:[%s1 + $0x58] sm:$0xf]
    %v159 = vld [vmem:[%s1 + $0x5c] sm:$0xf]
    %v160 = vld [vmem:[%s1 + $0x60] sm:$0xf]
    %v161 = vld [vmem:[%s1 + $0x64] sm:$0xf]
    %v162 = vld [vmem:[%s1 + $0x68] sm:$0xf]
    %v163 = vld [vmem:[%s1 + $0x6c] sm:$0xf]
    %v164 = vld [vmem:[%s1 + $0x70] sm:$0xf]
    %v165 = vld [vmem:[%s1 + $0x74] sm:$0xf]
    %v166 = vld [vmem:[%s1 + $0x78] sm:$0xf]
    %v167 = vld [vmem:[%s1 + $0x7c] sm:$0xf]
    %v168 = vld [vmem:[%s2] sm:$0x1]
    %v170 = vlaneseq
    %v171 = vshrl.u32 %v170, 7
    %v172 = vsub.s32 0, %v171
    %v173 = vrot.slane %v168, %v172
    %v207 = vunpack.c.l.b16 %v136
    %v208 = vunpack.c.l.b16 %v137
    %v209 = vunpack.c.l.b16 %v138
    %v210 = vunpack.c.l.b16 %v139
    %v211 = vunpack.c.l.b16 %v140
    %v212 = vunpack.c.l.b16 %v141
    %v213 = vunpack.c.l.b16 %v142
    %v214 = vunpack.c.l.b16 %v143
    %v215 = vunpack.c.l.b16 %v144
    %v216 = vunpack.c.l.b16 %v145
    %v217 = vunpack.c.l.b16 %v146
    %v218 = vunpack.c.l.b16 %v147
    %v219 = vunpack.c.l.b16 %v148
    %v220 = vunpack.c.l.b16 %v149
    %v221 = vunpack.c.l.b16 %v150
    %v222 = vunpack.c.l.b16 %v151
    %v223 = vunpack.c.l.b16 %v152
    %v224 = vunpack.c.l.b16 %v153
    %v225 = vunpack.c.l.b16 %v154
    %v226 = vunpack.c.l.b16 %v155
    %v227 = vunpack.c.l.b16 %v156
    %v228 = vunpack.c.l.b16 %v157
    %v229 = vunpack.c.l.b16 %v158
    %v230 = vunpack.c.l.b16 %v159
    %v231 = vunpack.c.l.b16 %v160
    %v232 = vunpack.c.l.b16 %v161
    %v233 = vunpack.c.l.b16 %v162
    %v234 = vunpack.c.l.b16 %v163
    %v235 = vunpack.c.l.b16 %v164
    %v236 = vunpack.c.l.b16 %v165
    %v237 = vunpack.c.l.b16 %v166
    %v238 = vunpack.c.l.b16 %v167
    %v239 = vpack.c.b16 %v208, %v207
    %v240 = vpack.c.b16 %v210, %v209
    %v241 = vpack.c.b16 %v212, %v211
    %v242 = vpack.c.b16 %v214, %v213
    %v243 = vpack.c.b16 %v216, %v215
    %v244 = vpack.c.b16 %v218, %v217
    %v245 = vpack.c.b16 %v220, %v219
    %v246 = vpack.c.b16 %v222, %v221
    %v247 = vpack.c.b16 %v224, %v223
    %v248 = vpack.c.b16 %v226, %v225
    %v249 = vpack.c.b16 %v228, %v227
    %v250 = vpack.c.b16 %v230, %v229
    %v251 = vpack.c.b16 %v232, %v231
    %v252 = vpack.c.b16 %v234, %v233
    %v253 = vpack.c.b16 %v236, %v235
    %v254 = vpack.c.b16 %v238, %v237
    %271 = vmatprep.subr.bf16.mxu0 0
    %272 = vmatpush1.bf16.msra.mxu0 %v246
    %273 = vmatprep.subr.bf16.mxu0 0
    %274 = vmatpush1.bf16.msra.mxu0 %v245
    %275 = vmatprep.subr.bf16.mxu0 0
    %276 = vmatpush1.bf16.msra.mxu0 %v244
    %277 = vmatprep.subr.bf16.mxu0 0
    %278 = vmatpush1.bf16.msra.mxu0 %v243
    %279 = vmatprep.subr.bf16.mxu0 0
    %280 = vmatpush1.bf16.msra.mxu0 %v242
    %281 = vmatprep.subr.bf16.mxu0 0
    %282 = vmatpush1.bf16.msra.mxu0 %v241
    %283 = vmatprep.subr.bf16.mxu0 0
    %284 = vmatpush1.bf16.msra.mxu0 %v240
    %285 = vmatprep.subr.bf16.mxu0 0
    %286 = vmatpush1.bf16.msra.mxu0 %v239
    %287 = vmatprep.subr.bf16.mxu0 0
    %288 = vmatpush2.bf16.msra.mxu0 %v254
    %289 = vmatprep.subr.bf16.mxu0 0
    %290 = vmatpush2.bf16.msra.mxu0 %v253
    %291 = vmatprep.subr.bf16.mxu0 0
    %292 = vmatpush2.bf16.msra.mxu0 %v252
    %293 = vmatprep.subr.bf16.mxu0 0
    %294 = vmatpush2.bf16.msra.mxu0 %v251
    %295 = vmatprep.subr.bf16.mxu0 0
    %296 = vmatpush2.bf16.msra.mxu0 %v250
    %297 = vmatprep.subr.bf16.mxu0 0
    %298 = vmatpush2.bf16.msra.mxu0 %v249
    %299 = vmatprep.subr.bf16.mxu0 0
    %300 = vmatpush2.bf16.msra.mxu0 %v248
    %301 = vmatprep.subr.bf16.mxu0 0
    %302 = vmatpush2.bf16.msra.mxu0 %v247
    %303 = vmatprep.mubr.bf16.mxu0 %v135
    %304 = vmatmul.mubr.bf16.gmra.mxu0 %v134
    %v305 = vpop.f32.mrf.mxu0
    %v306 = vadd.f32 %v173, %v305
    %v307 = vpop.f32.mrf.mxu0
    %v308 = vpop.f32.mrf.mxu0
    %v309 = vpop.f32.mrf.mxu0
    %310 = vdwg.mxu0
    %vm311 = vcmask 123904
    %312 = vst.msk [vmem:[#allocation2] sm:$0x3] %vm311, %v306
    // Predicated region
    $region22: #{vit_forward.19} parent=1 // pred_check
      _
    $region23: #{vit_forward.19} parent=1 // pred_check_branch
      %314 = sbr.rel (0) target = $region25
    $region24: #{vit_forward.19} parent=1 // pred_region
      %s316 = ssub.s32 32, 32
      %317 = vsyncadd [#allocation3], %s316
      %s319 = sshll.u32 [#allocation2], 4
      %s320 = int_to_ptr.vmem [resolvable:$true] %s319
      %322 = dma.vmem_to_hbm [thread:$0]  %s320, 32, %s5, [#allocation3]
    $region25: #{vit_forward.19} parent=1 // pred_fallthru
      _
    // Predicated region
    $region26: #{vit_forward.19} parent=1 // pred_check
      _
    $region27: #{vit_forward.19} parent=1 // pred_check_branch
      %324 = sbr.rel (0) target = $region29
    $region28: #{vit_forward.19} parent=1 // pred_region
      %325 = dma.done [#allocation3], 32
    $region29: #{vit_forward.19} parent=1 // pred_fallthru
      _
    %326 = vsyncpa [#allocation3], 1

</llo_original>
